<compile_context>
chip_gen: v7x
topology: tpu7x:2x2x1
jax: 0.10.0
libtpu: 0.0.40
codegen_flags: <defaults>
</compile_context>

<pallas_src>
import functools

import jax
import jax.numpy as jnp
from jax.experimental import pallas as pl
from jax.experimental.pallas import tpu as pltpu


def _round_up(x, m):
    return ((x + m - 1) // m) * m


# ----------------------------------------------------------------------------
# Pallas kernels
# ----------------------------------------------------------------------------
def _conv_bias_act_kernel(p_ref, w_ref, b_ref, o_ref, acc_ref, *, slope):
    """Tiled patches @ weight (bf16 MXU, f32 accumulate) + bias (+ LeakyReLU)."""
    k = pl.program_id(1)

    @pl.when(k == 0)
    def _():
        acc_ref[...] = jnp.zeros_like(acc_ref)

    acc_ref[...] += jnp.dot(p_ref[...], w_ref[...],
                            preferred_element_type=jnp.float32)

    @pl.when(k == pl.num_programs(1) - 1)
    def _():
        out = acc_ref[...] + b_ref[...]
        if slope is not None:
            out = jnp.where(out > 0, out, slope * out)
        o_ref[...] = out.astype(o_ref.dtype)


def _conv_plain_kernel(p_ref, w_ref, o_ref, acc_ref):
    """Tiled patches @ weight, no bias / activation (bias cancels under IN)."""
    k = pl.program_id(1)

    @pl.when(k == 0)
    def _():
        acc_ref[...] = jnp.zeros_like(acc_ref)

    acc_ref[...] += jnp.dot(p_ref[...], w_ref[...],
                            preferred_element_type=jnp.float32)

    @pl.when(k == pl.num_programs(1) - 1)
    def _():
        o_ref[...] = acc_ref[...].astype(o_ref.dtype)


def _conv_in_lrelu_kernel(p_ref, w_ref, o_ref, acc_ref, *, n_valid, slope, eps):
    """Fused conv + InstanceNorm2d(affine=False) + LeakyReLU for one image.

    Grid is (batch, K-blocks); the whole (OH*OW padded, OC) f32 accumulator
    lives in VMEM, so per-channel spatial mean/var are computed in the K-loop
    epilogue.  Rows >= n_valid are zero padding and are masked out."""
    k = pl.program_id(1)

    @pl.when(k == 0)
    def _():
        acc_ref[...] = jnp.zeros_like(acc_ref)

    acc_ref[...] += jnp.dot(p_ref[0], w_ref[...],
                            preferred_element_type=jnp.float32)

    @pl.when(k == pl.num_programs(1) - 1)
    def _():
        acc = acc_ref[...]
        inv = 1.0 / n_valid
        if n_valid == acc.shape[0]:
            mean = jnp.sum(acc, axis=0, keepdims=True) * inv
            cent = acc - mean
            var = jnp.sum(cent * cent, axis=0, keepdims=True) * inv
        else:
            row = jax.lax.broadcasted_iota(jnp.int32, acc.shape, 0)
            valid = row < n_valid
            mean = jnp.sum(jnp.where(valid, acc, 0.0), axis=0,
                           keepdims=True) * inv
            cent = acc - mean
            var = jnp.sum(jnp.where(valid, cent * cent, 0.0), axis=0,
                          keepdims=True) * inv
        y = (acc - mean) * jax.lax.rsqrt(var + eps)
        y = jnp.where(y > 0, y, slope * y)
        o_ref[0] = y.astype(o_ref.dtype)


def _in_stats_kernel(x_ref, mean_ref, rstd_ref, s_ref, ss_ref, *, hw, eps):
    """Per-(image, channel) mean / rsqrt(var+eps), streamed over HW chunks."""
    h = pl.program_id(2)

    @pl.when(h == 0)
    def _():
        s_ref[...] = jnp.zeros_like(s_ref)
        ss_ref[...] = jnp.zeros_like(ss_ref)

    x = x_ref[0].astype(jnp.float32)
    s_ref[...] += jnp.sum(x, axis=0, keepdims=True)
    ss_ref[...] += jnp.sum(x * x, axis=0, keepdims=True)

    @pl.when(h == pl.num_programs(2) - 1)
    def _():
        inv = 1.0 / hw
        m = s_ref[...] * inv
        v = ss_ref[...] * inv - m * m
        mean_ref[0] = m
        rstd_ref[0] = jax.lax.rsqrt(v + eps)


def _in_apply_kernel(x_ref, mean_ref, rstd_ref, o_ref, *, slope):
    y = (x_ref[0].astype(jnp.float32) - mean_ref[0]) * rstd_ref[0]
    o_ref[0] = jnp.where(y > 0, y, slope * y).astype(o_ref.dtype)


def _final_reduce_kernel(s_ref, w_ref, b_ref, o_ref, *, inv_hw):
    """out[n] = (1/OHW) * sum_{tap,c} S[n,tap,c] * w[tap,c] + b."""
    s = s_ref[...]                                    # (N, 16, C) f32
    w = w_ref[...]                                    # (16, C)    f32
    t = jnp.sum(s * w[None, :, :], axis=2)            # (N, 16)
    acc = jnp.sum(t, axis=1, keepdims=True)           # (N, 1)
    o_ref[...] = acc * inv_hw + b_ref[...]


# ----------------------------------------------------------------------------
# Pallas wrappers
# ----------------------------------------------------------------------------
def conv_matmul(patches, w_flat, bias=None, leaky_slope=None,
                out_dtype=jnp.bfloat16, tm_max=512, tk_max=512):
    """patches (M, K) bf16 @ w_flat (K, OC) [+ bias] [+ LeakyReLU] -> (M, OC)."""
    M, K = patches.shape
    OC = w_flat.shape[1]
    Mp = _round_up(M, 32)
    tm = min(tm_max, Mp)
    if Mp // tm < 2 and Mp >= 64:       # v7x megacore: keep >= 2 M blocks
        tm = Mp // 2
    tk = min(tk_max, K)
    if K % tk != 0:                     # e.g. layer 1: K = 48, single K block
        tk = K

    p = patches if Mp == M else jnp.pad(patches, ((0, Mp - M), (0, 0)))
    w = w_flat.astype(jnp.bfloat16)
    grid = (Mp // tm, K // tk)
    cost = pl.CostEstimate(
        flops=2 * Mp * K * OC, transcendentals=0,
        bytes_accessed=2 * (Mp * K + grid[0] * K * OC + Mp * OC))
    cparams = pltpu.CompilerParams(
        dimension_semantics=("parallel", "arbitrary"))

    if bias is not None:
        out = pl.pallas_call(
            functools.partial(_conv_bias_act_kernel, slope=leaky_slope),
            out_shape=jax.ShapeDtypeStruct((Mp, OC), out_dtype),
            grid=grid,
            in_specs=[pl.BlockSpec((tm, tk), lambda i, k: (i, k)),
                      pl.BlockSpec((tk, OC), lambda i, k: (k, 0)),
                      pl.BlockSpec((1, OC), lambda i, k: (0, 0))],
            out_specs=pl.BlockSpec((tm, OC), lambda i, k: (i, 0)),
            scratch_shapes=[pltpu.VMEM((tm, OC), jnp.float32)],
            compiler_params=cparams, cost_estimate=cost,
        )(p, w, bias.reshape(1, OC).astype(jnp.float32))
    else:
        out = pl.pallas_call(
            _conv_plain_kernel,
            out_shape=jax.ShapeDtypeStruct((Mp, OC), out_dtype),
            grid=grid,
            in_specs=[pl.BlockSpec((tm, tk), lambda i, k: (i, k)),
                      pl.BlockSpec((tk, OC), lambda i, k: (k, 0))],
            out_specs=pl.BlockSpec((tm, OC), lambda i, k: (i, 0)),
            scratch_shapes=[pltpu.VMEM((tm, OC), jnp.float32)],
            compiler_params=cparams, cost_estimate=cost,
        )(p, w)
    return out if Mp == M else out[:M]


_FUSED_VMEM_LIMIT = 10 * 1024 * 1024   # safe under v5e's 16 MiB default scoped VMEM


def _fused_vmem_bytes(mb, oc, tk):
    return (2 * mb * tk * 2        # double-buffered bf16 patch block
            + 2 * tk * oc * 2      # double-buffered bf16 weight block
            + mb * oc * 4          # f32 accumulator
            + 2 * mb * oc * 2)     # double-buffered bf16 output block


def conv_in_lrelu_fused(patches, w_flat, n_valid, slope=0.2, eps=1e-5,
                        tk_max=512):
    """patches (N, Mb, K) bf16 (rows >= n_valid are zero padding),
    w_flat (K, OC).  Fused conv + InstanceNorm + LeakyReLU -> (N, Mb, OC) bf16."""
    N, Mb, K = patches.shape
    OC = w_flat.shape[1]
    tk = min(tk_max, K)
    assert K % tk == 0
    cost = pl.CostEstimate(
        flops=2 * N * Mb * K * OC, transcendentals=N * OC,
        bytes_accessed=2 * (N * Mb * K + N * K * OC + N * Mb * OC))
    return pl.pallas_call(
        functools.partial(_conv_in_lrelu_kernel, n_valid=n_valid, slope=slope,
                          eps=eps),
        out_shape=jax.ShapeDtypeStruct((N, Mb, OC), jnp.bfloat16),
        grid=(N, K // tk),
        in_specs=[pl.BlockSpec((1, Mb, tk), lambda n, k: (n, 0, k)),
                  pl.BlockSpec((tk, OC), lambda n, k: (k, 0))],
        out_specs=pl.BlockSpec((1, Mb, OC), lambda n, k: (n, 0, 0)),
        scratch_shapes=[pltpu.VMEM((Mb, OC), jnp.float32)],
        compiler_params=pltpu.CompilerParams(
            dimension_semantics=("parallel", "arbitrary")),
        cost_estimate=cost,
    )(patches, w_flat.astype(jnp.bfloat16))


def instance_norm_lrelu(x, slope=0.2, eps=1e-5, thw_max=2048, tc_max=256):
    """Standalone InstanceNorm2d(affine=False) + LeakyReLU, HW/C tiled.

    x: (N, HW, C) bf16 -> (N, HW, C) bf16.  Two passes (stats, then apply) so
    arbitrarily large HW streams through VMEM in thw-row chunks (large-image
    fallback when the epilogue-fused path would not fit VMEM)."""
    N, HW, C = x.shape
    tc = min(tc_max, C)
    assert C % tc == 0
    thw = min(thw_max, _round_up(HW, 16))
    HWp = _round_up(HW, thw)
    xp = x if HWp == HW else jnp.pad(x, ((0, 0), (0, HWp - HW), (0, 0)))
    grid = (N, C // tc, HWp // thw)

    mean, rstd = pl.pallas_call(
        functools.partial(_in_stats_kernel, hw=HW, eps=eps),
        out_shape=(jax.ShapeDtypeStruct((N, 1, C), jnp.float32),
                   jax.ShapeDtypeStruct((N, 1, C), jnp.float32)),
        grid=grid,
        in_specs=[pl.BlockSpec((1, thw, tc), lambda n, c, h: (n, h, c))],
        out_specs=(pl.BlockSpec((1, 1, tc), lambda n, c, h: (n, 0, c)),
                   pl.BlockSpec((1, 1, tc), lambda n, c, h: (n, 0, c))),
        scratch_shapes=[pltpu.VMEM((1, tc), jnp.float32),
                        pltpu.VMEM((1, tc), jnp.float32)],
        compiler_params=pltpu.CompilerParams(
            dimension_semantics=("parallel", "parallel", "arbitrary")),
    )(xp)

    y = pl.pallas_call(
        functools.partial(_in_apply_kernel, slope=slope),
        out_shape=jax.ShapeDtypeStruct((N, HWp, C), jnp.bfloat16),
        grid=grid,
        in_specs=[pl.BlockSpec((1, thw, tc), lambda n, c, h: (n, h, c)),
                  pl.BlockSpec((1, 1, tc), lambda n, c, h: (n, 0, c)),
                  pl.BlockSpec((1, 1, tc), lambda n, c, h: (n, 0, c))],
        out_specs=pl.BlockSpec((1, thw, tc), lambda n, c, h: (n, h, c)),
        compiler_params=pltpu.CompilerParams(
            dimension_semantics=("parallel", "parallel", "parallel")),
    )(xp, mean, rstd)
    return y if HWp == HW else y[:, :HW]


def _tap_window_sums(x, oh, ow):
    """Per-tap window sums of the (unpadded) input of a 4x4/stride-1/pad-1
    conv whose output is globally average-pooled.  Returns (N, 16, C) f32."""
    N, H, W, C = x.shape
    xf = x.astype(jnp.float32)
    sums = []
    for i in range(4):
        r0, r1 = max(i - 1, 0), min(i - 1 + oh, H)
        for j in range(4):
            c0, c1 = max(j - 1, 0), min(j - 1 + ow, W)
            sums.append(jnp.sum(xf[:, r0:r1, c0:c1, :], axis=(1, 2)))
    return jnp.stack(sums, axis=1)


def final_conv_gap(x, w, b):
    """Fused final conv(512->1, k4, s1, p1) + global average pool.

    GAP(conv(x))[n] = (1/(OH*OW)) * sum_{tap,c} w[tap,c] * S[n,tap,c] + b, so
    the K=8192 im2col tensor is never built.
    x: (N, H, W, C) bf16; w: (1, C, 4, 4); b: (1,) -> (N,) f32."""
    N, H, W, C = x.shape
    oh, ow = H - 1, W - 1
    taps = _tap_window_sums(x, oh, ow)                               # (N,16,C)
    w_taps = jnp.transpose(w[0], (1, 2, 0)).reshape(16, C).astype(jnp.float32)
    out = pl.pallas_call(
        functools.partial(_final_reduce_kernel, inv_hw=1.0 / (oh * ow)),
        out_shape=jax.ShapeDtypeStruct((N, 1), jnp.float32),
        in_specs=[pl.BlockSpec(memory_space=pltpu.MemorySpace.VMEM)] * 3,
        out_specs=pl.BlockSpec(memory_space=pltpu.MemorySpace.VMEM),
    )(taps, w_taps, b.reshape(1, 1).astype(jnp.float32))
    return out.reshape(N)


# ----------------------------------------------------------------------------
# Glue: channel-last im2col patch extraction (pure pad/slice, no compute)
# ----------------------------------------------------------------------------
def im2col_nhwc(x, kh, kw, stride, pad):
    """x: (N, H, W, C) -> bf16 patches (N, OH, OW, kh*kw*C), tap-major with
    ic fastest (matches _w_flat), plus (OH, OW)."""
    x = x.astype(jnp.bfloat16)
    N, H, W, C = x.shape
    xp = jnp.pad(x, ((0, 0), (pad, pad), (pad, pad), (0, 0)))
    OH = (H + 2 * pad - kh) // stride + 1
    OW = (W + 2 * pad - kw) // stride + 1
    taps = [xp[:, i:i + stride * OH:stride, j:j + stride * OW:stride, :]
            for i in range(kh) for j in range(kw)]
    p = jnp.stack(taps, axis=3).reshape(N, OH, OW, kh * kw * C)
    return p, OH, OW


def _w_flat(w):
    """PyTorch (OC, IC, KH, KW) -> (KH*KW*IC, OC), ic fastest within a tap."""
    return jnp.transpose(w, (2, 3, 1, 0)).reshape(-1, w.shape[0])


# ----------------------------------------------------------------------------
# Discriminator forward
# ----------------------------------------------------------------------------
def discriminator_forward(x_nchw, params):
    N = x_nchw.shape[0]
    x = jnp.transpose(x_nchw, (0, 2, 3, 1)).astype(jnp.bfloat16)  # NHWC once

    # Block 1: conv(3->64, s2) + bias + LeakyReLU (no norm), fused epilogue.
    w, b = params[0]
    p, oh, ow = im2col_nhwc(x, 4, 4, 2, 1)
    y = conv_matmul(p.reshape(N * oh * ow, -1), _w_flat(w), bias=b,
                    leaky_slope=0.2)
    x = y.reshape(N, oh, ow, w.shape[0])

    # Blocks 2-4: conv + InstanceNorm + LeakyReLU.  Conv bias dropped:
    # InstanceNorm(affine=False) mean subtraction cancels it exactly.
    for layer_idx, stride in ((1, 2), (2, 2), (3, 1)):
        w, _unused_b = params[layer_idx]
        oc = w.shape[0]
        p, oh, ow = im2col_nhwc(x, 4, 4, stride, 1)
        ohw = oh * ow
        K = p.shape[-1]
        mb = _round_up(ohw, 16)
        if _fused_vmem_bytes(mb, oc, min(512, K)) <= _FUSED_VMEM_LIMIT:
            p3 = p.reshape(N, ohw, K)
            if mb != ohw:
                p3 = jnp.pad(p3, ((0, 0), (0, mb - ohw), (0, 0)))
            y = conv_in_lrelu_fused(p3, _w_flat(w), n_valid=ohw)
            if mb != ohw:
                y = y[:, :ohw]
        else:
            # Large-image fallback: tiled conv, then HW/C-tiled InstanceNorm.
            y2 = conv_matmul(p.reshape(N * ohw, K), _w_flat(w))
            y = instance_norm_lrelu(y2.reshape(N, ohw, oc))
        x = y.reshape(N, oh, ow, oc)

    # Final conv(512->1, s1) fused with the global average pool -> (N,)
    w, b = params[4]
    return final_conv_gap(x, w, b)


def init_params(key):
    specs = [(3, 64), (64, 128), (128, 256), (256, 512), (512, 1)]
    params = []
    for i, (ic, oc) in enumerate(specs):
        kw, kb = jax.random.split(jax.random.fold_in(key, i))
        fan_in = ic * 4 * 4
        std = (2.0 / fan_in) ** 0.5
        w = jax.random.normal(kw, (oc, ic, 4, 4), jnp.float32) * std
        b = jax.random.normal(kb, (oc,), jnp.float32) * 0.01
        params.append((w, b))
    return params


def reference_forward(x, params):
    """Pure-JAX f32 reference mirroring the PyTorch module."""
    def conv(v, w, b, stride):
        y = jax.lax.conv_general_dilated(
            v, w, window_strides=(stride, stride), padding=((1, 1), (1, 1)),
            dimension_numbers=("NCHW", "OIHW", "NCHW"))
        return y + b.reshape(1, -1, 1, 1)

    def lrelu(v):
        return jnp.where(v > 0, v, 0.2 * v)

    def inorm(v):
        m = jnp.mean(v, axis=(2, 3), keepdims=True)
        var = jnp.mean((v - m) ** 2, axis=(2, 3), keepdims=True)
        return (v - m) * jax.lax.rsqrt(var + 1e-5)

    w, b = params[0]
    x = lrelu(conv(x, w, b, 2))
    for i, s in ((1, 2), (2, 2), (3, 1)):
        w, b = params[i]
        x = lrelu(inorm(conv(x, w, b, s)))
    w, b = params[4]
    x = conv(x, w, b, 1)
    return jnp.mean(x, axis=(1, 2, 3))


if __name__ == "__main__":
    key = jax.random.PRNGKey(0)
    kx, kp = jax.random.split(key)
    # Smallest spatial size surviving all 5 convs: 32 -> 16 -> 8 -> 4 -> 3 -> 2.
    x = jax.random.normal(kx, (2, 3, 32, 32), dtype=jnp.float32)
    params = init_params(kp)

    y = jax.jit(discriminator_forward)(x, params)
    jax.block_until_ready(y)
    assert y.shape == (2,), y.shape
    assert y.dtype == jnp.float32, y.dtype

    # Sanity check vs a pure-JAX f32 reference (bf16 MXU inputs -> ~1e-2 diffs).
    y_ref = jax.jit(reference_forward)(x, params)
    err = float(jnp.max(jnp.abs(y - y_ref)))
    assert err < 0.25, f"mismatch vs f32 reference: {err}"
    print("KERNEL_OK")
</pallas_src>

<mosaic_0001>
module attributes {stable_mosaic.version = 11 : i64} {
  func.func @_conv_bias_act_kernel(%arg0: i32, %arg1: i32, %arg2: memref<256x48xbf16, #tpu.memory_space<vmem>>, %arg3: memref<48x64xbf16, #tpu.memory_space<vmem>>, %arg4: memref<1x64xf32, #tpu.memory_space<vmem>>, %arg5: memref<256x64xbf16, #tpu.memory_space<vmem>>, %arg6: memref<256x64xf32, #tpu.memory_space<vmem>>) attributes {dimension_semantics = [#tpu.dimension_semantics<parallel>, #tpu.dimension_semantics<arbitrary>], iteration_bounds = array<i64: 2, 1>, scalar_prefetch = 0 : i64, scratch_operands = 1 : i64, tpu.core_type = #tpu.core_type<tc>, window_params = [{transform_indices = @transform_0, window_bounds = array<i64: 256, 48>}, {transform_indices = @transform_1, window_bounds = array<i64: 48, 64>}, {pipeline_mode = #tpu.pipeline_mode<synchronous>, transform_indices = @transform_2, window_bounds = array<i64: 1, 64>}, {transform_indices = @transform_3, window_bounds = array<i64: 256, 64>}]} {
    %c0_i32 = arith.constant 0 : i32
    %0 = arith.cmpi eq, %arg1, %c0_i32 : i32
    %1 = arith.extui %0 : i1 to i32
    %c0_i32_0 = arith.constant 0 : i32
    %2 = arith.cmpi ne, %1, %c0_i32_0 : i32
    scf.if %2 {
      %cst_10 = arith.constant 0.000000e+00 : f32
      %12 = vector.broadcast %cst_10 : f32 to vector<256x64xf32>
      %c0_11 = arith.constant 0 : index
      %c0_12 = arith.constant 0 : index
      %13 = vector.load %arg6[%c0_11, %c0_12] : memref<256x64xf32, #tpu.memory_space<vmem>>, vector<256x64xf32>
      tpu.vector_store %arg6[%c0_11, %c0_12], %12 {strides = array<i32>} : memref<256x64xf32, #tpu.memory_space<vmem>>, vector<256x64xf32>,
    } else {
    }
    %c0 = arith.constant 0 : index
    %c0_1 = arith.constant 0 : index
    %3 = vector.load %arg6[%c0, %c0_1] : memref<256x64xf32, #tpu.memory_space<vmem>>, vector<256x64xf32>
    %c0_2 = arith.constant 0 : index
    %c0_3 = arith.constant 0 : index
    %4 = vector.load %arg2[%c0_2, %c0_3] : memref<256x48xbf16, #tpu.memory_space<vmem>>, vector<256x48xbf16>
    %c0_4 = arith.constant 0 : index
    %c0_5 = arith.constant 0 : index
    %5 = vector.load %arg3[%c0_4, %c0_5] : memref<48x64xbf16, #tpu.memory_space<vmem>>, vector<48x64xbf16>
    %cst = arith.constant dense<0.000000e+00> : vector<256x64xf32>
    %6 = tpu.matmul %4, %5, %cst {dimension_numbers = #tpu.dot_dimension_numbers<[1], [0], [0], [1], [0, 0, 1, 1], [], []>} : vector<256x48xbf16>, vector<48x64xbf16>, vector<256x64xf32> -> vector<256x64xf32>
    %7 = arith.addf %3, %6 : vector<256x64xf32>
    %c0_6 = arith.constant 0 : index
    %c0_7 = arith.constant 0 : index
    %8 = vector.load %arg6[%c0_6, %c0_7] : memref<256x64xf32, #tpu.memory_space<vmem>>, vector<256x64xf32>
    tpu.vector_store %arg6[%c0_6, %c0_7], %7 {strides = array<i32>} : memref<256x64xf32, #tpu.memory_space<vmem>>, vector<256x64xf32>,
    %c0_i32_8 = arith.constant 0 : i32
    %9 = arith.cmpi eq, %arg1, %c0_i32_8 : i32
    %10 = arith.extui %9 : i1 to i32
    %c0_i32_9 = arith.constant 0 : i32
    %11 = arith.cmpi ne, %10, %c0_i32_9 : i32
    scf.if %11 {
      %c0_10 = arith.constant 0 : index
      %c0_11 = arith.constant 0 : index
      %12 = vector.load %arg6[%c0_10, %c0_11] : memref<256x64xf32, #tpu.memory_space<vmem>>, vector<256x64xf32>
      %c0_12 = arith.constant 0 : index
      %c0_13 = arith.constant 0 : index
      %13 = vector.load %arg4[%c0_12, %c0_13] : memref<1x64xf32, #tpu.memory_space<vmem>>, vector<1x64xf32>
      %14 = vector.broadcast %13 : vector<1x64xf32> to vector<256x64xf32>
      %15 = arith.addf %12, %14 : vector<256x64xf32>
      %cst_14 = arith.constant 0.000000e+00 : f32
      %16 = vector.broadcast %cst_14 : f32 to vector<256x64xf32>
      %17 = arith.cmpf ogt, %15, %16 : vector<256x64xf32>
      %cst_15 = arith.constant 2.000000e-01 : f32
      %18 = vector.broadcast %cst_15 : f32 to vector<256x64xf32>
      %19 = arith.mulf %18, %15 : vector<256x64xf32>
      %20 = arith.select %17, %15, %19 : vector<256x64xi1>, vector<256x64xf32>
      %21 = arith.truncf %20 : vector<256x64xf32> to vector<256x64xbf16>
      %c0_16 = arith.constant 0 : index
      %c0_17 = arith.constant 0 : index
      %22 = vector.load %arg5[%c0_16, %c0_17] : memref<256x64xbf16, #tpu.memory_space<vmem>>, vector<256x64xbf16>
      tpu.vector_store %arg5[%c0_16, %c0_17], %21 {strides = array<i32>} : memref<256x64xbf16, #tpu.memory_space<vmem>>, vector<256x64xbf16>,
    } else {
    }
    return
  }
  func.func @transform_0(%arg0: i32, %arg1: i32) -> (i32, i32) {
    %c0_i32 = arith.constant 0 : i32
    return %arg0, %arg1 : i32, i32
  }
  func.func @transform_1(%arg0: i32, %arg1: i32) -> (i32, i32) {
    %c0_i32 = arith.constant 0 : i32
    %c0_i32_0 = arith.constant 0 : i32
    return %arg1, %c0_i32 : i32, i32
  }
  func.func @transform_2(%arg0: i32, %arg1: i32) -> (i32, i32) {
    %c0_i32 = arith.constant 0 : i32
    %c0_i32_0 = arith.constant 0 : i32
    %c0_i32_1 = arith.constant 0 : i32
    return %c0_i32, %c0_i32_0 : i32, i32
  }
  func.func @transform_3(%arg0: i32, %arg1: i32) -> (i32, i32) {
    %c0_i32 = arith.constant 0 : i32
    %c0_i32_0 = arith.constant 0 : i32
    return %arg0, %c0_i32 : i32, i32
  }
}

module attributes {stable_mosaic.version = 11 : i64} {
  func.func @_conv_in_lrelu_kernel(%arg0: i32, %arg1: i32, %arg2: memref<1x64x512xbf16, #tpu.memory_space<vmem>>, %arg3: memref<512x128xbf16, #tpu.memory_space<vmem>>, %arg4: memref<1x64x128xbf16, #tpu.memory_space<vmem>>, %arg5: memref<64x128xf32, #tpu.memory_space<vmem>>) attributes {dimension_semantics = [#tpu.dimension_semantics<parallel>, #tpu.dimension_semantics<arbitrary>], iteration_bounds = array<i64: 2, 2>, scalar_prefetch = 0 : i64, scratch_operands = 1 : i64, tpu.core_type = #tpu.core_type<tc>, window_params = [{transform_indices = @transform_0, window_bounds = array<i64: 1, 64, 512>}, {transform_indices = @transform_1, window_bounds = array<i64: 512, 128>}, {transform_indices = @transform_2, window_bounds = array<i64: 1, 64, 128>}]} {
    %c0_i32 = arith.constant 0 : i32
    %0 = arith.cmpi eq, %arg1, %c0_i32 : i32
    %1 = arith.extui %0 : i1 to i32
    %c0_i32_0 = arith.constant 0 : i32
    %2 = arith.cmpi ne, %1, %c0_i32_0 : i32
    scf.if %2 {
      %cst_10 = arith.constant 0.000000e+00 : f32
      %13 = vector.broadcast %cst_10 : f32 to vector<64x128xf32>
      %c0_11 = arith.constant 0 : index
      %c0_12 = arith.constant 0 : index
      %14 = vector.load %arg5[%c0_11, %c0_12] : memref<64x128xf32, #tpu.memory_space<vmem>>, vector<64x128xf32>
      tpu.vector_store %arg5[%c0_11, %c0_12], %13 {strides = array<i32>} : memref<64x128xf32, #tpu.memory_space<vmem>>, vector<64x128xf32>,
    } else {
    }
    %c0 = arith.constant 0 : index
    %c0_1 = arith.constant 0 : index
    %3 = vector.load %arg5[%c0, %c0_1] : memref<64x128xf32, #tpu.memory_space<vmem>>, vector<64x128xf32>
    %c0_2 = arith.constant 0 : index
    %c0_3 = arith.constant 0 : index
    %c0_4 = arith.constant 0 : index
    %4 = vector.load %arg2[%c0_2, %c0_3, %c0_4] : memref<1x64x512xbf16, #tpu.memory_space<vmem>>, vector<1x64x512xbf16>
    %5 = vector.shape_cast %4 : vector<1x64x512xbf16> to vector<64x512xbf16>
    %c0_5 = arith.constant 0 : index
    %c0_6 = arith.constant 0 : index
    %6 = vector.load %arg3[%c0_5, %c0_6] : memref<512x128xbf16, #tpu.memory_space<vmem>>, vector<512x128xbf16>
    %cst = arith.constant dense<0.000000e+00> : vector<64x128xf32>
    %7 = tpu.matmul %5, %6, %cst {dimension_numbers = #tpu.dot_dimension_numbers<[1], [0], [0], [1], [0, 0, 1, 1], [], []>} : vector<64x512xbf16>, vector<512x128xbf16>, vector<64x128xf32> -> vector<64x128xf32>
    %8 = arith.addf %3, %7 : vector<64x128xf32>
    %c0_7 = arith.constant 0 : index
    %c0_8 = arith.constant 0 : index
    %9 = vector.load %arg5[%c0_7, %c0_8] : memref<64x128xf32, #tpu.memory_space<vmem>>, vector<64x128xf32>
    tpu.vector_store %arg5[%c0_7, %c0_8], %8 {strides = array<i32>} : memref<64x128xf32, #tpu.memory_space<vmem>>, vector<64x128xf32>,
    %c1_i32 = arith.constant 1 : i32
    %10 = arith.cmpi eq, %arg1, %c1_i32 : i32
    %11 = arith.extui %10 : i1 to i32
    %c0_i32_9 = arith.constant 0 : i32
    %12 = arith.cmpi ne, %11, %c0_i32_9 : i32
    scf.if %12 {
      %c0_10 = arith.constant 0 : index
      %c0_11 = arith.constant 0 : index
      %13 = vector.load %arg5[%c0_10, %c0_11] : memref<64x128xf32, #tpu.memory_space<vmem>>, vector<64x128xf32>
      %cst_12 = arith.constant dense<0.000000e+00> : vector<128xf32>
      %14 = vector.multi_reduction <add>, %13, %cst_12 [0] : vector<64x128xf32> to vector<128xf32>
      %15 = vector.shape_cast %14 : vector<128xf32> to vector<1x128xf32>
      %cst_13 = arith.constant 1.562500e-02 : f32
      %16 = vector.broadcast %cst_13 : f32 to vector<1x128xf32>
      %17 = arith.mulf %15, %16 : vector<1x128xf32>
      %18 = vector.broadcast %17 : vector<1x128xf32> to vector<64x128xf32>
      %19 = arith.subf %13, %18 : vector<64x128xf32>
      %20 = arith.mulf %19, %19 : vector<64x128xf32>
      %cst_14 = arith.constant dense<0.000000e+00> : vector<128xf32>
      %21 = vector.multi_reduction <add>, %20, %cst_14 [0] : vector<64x128xf32> to vector<128xf32>
      %22 = vector.shape_cast %21 : vector<128xf32> to vector<1x128xf32>
      %cst_15 = arith.constant 1.562500e-02 : f32
      %23 = vector.broadcast %cst_15 : f32 to vector<1x128xf32>
      %24 = arith.mulf %22, %23 : vector<1x128xf32>
      %25 = vector.broadcast %17 : vector<1x128xf32> to vector<64x128xf32>
      %26 = arith.subf %13, %25 : vector<64x128xf32>
      %cst_16 = arith.constant 9.99999974E-6 : f32
      %27 = vector.broadcast %cst_16 : f32 to vector<1x128xf32>
      %28 = arith.addf %24, %27 : vector<1x128xf32>
      %29 = math.rsqrt %28 : vector<1x128xf32>
      %30 = vector.broadcast %29 : vector<1x128xf32> to vector<64x128xf32>
      %31 = arith.mulf %26, %30 : vector<64x128xf32>
      %cst_17 = arith.constant 0.000000e+00 : f32
      %32 = vector.broadcast %cst_17 : f32 to vector<64x128xf32>
      %33 = arith.cmpf ogt, %31, %32 : vector<64x128xf32>
      %cst_18 = arith.constant 2.000000e-01 : f32
      %34 = vector.broadcast %cst_18 : f32 to vector<64x128xf32>
      %35 = arith.mulf %34, %31 : vector<64x128xf32>
      %36 = arith.select %33, %31, %35 : vector<64x128xi1>, vector<64x128xf32>
      %37 = arith.truncf %36 : vector<64x128xf32> to vector<64x128xbf16>
      %c0_19 = arith.constant 0 : index
      %c0_20 = arith.constant 0 : index
      %c0_21 = arith.constant 0 : index
      %38 = vector.load %arg4[%c0_19, %c0_20, %c0_21] : memref<1x64x128xbf16, #tpu.memory_space<vmem>>, vector<1x64x128xbf16>
      %39 = vector.shape_cast %38 : vector<1x64x128xbf16> to vector<64x128xbf16>
      %40 = vector.shape_cast %37 : vector<64x128xbf16> to vector<1x64x128xbf16>
      tpu.vector_store %arg4[%c0_19, %c0_20, %c0_21], %40 {strides = array<i32>} : memref<1x64x128xbf16, #tpu.memory_space<vmem>>, vector<1x64x128xbf16>,
    } else {
    }
    return
  }
  func.func @transform_0(%arg0: i32, %arg1: i32) -> (i32, i32, i32) {
    %c0_i32 = arith.constant 0 : i32
    %c0_i32_0 = arith.constant 0 : i32
    return %arg0, %c0_i32, %arg1 : i32, i32, i32
  }
  func.func @transform_1(%arg0: i32, %arg1: i32) -> (i32, i32) {
    %c0_i32 = arith.constant 0 : i32
    %c0_i32_0 = arith.constant 0 : i32
    return %arg1, %c0_i32 : i32, i32
  }
  func.func @transform_2(%arg0: i32, %arg1: i32) -> (i32, i32, i32) {
    %c0_i32 = arith.constant 0 : i32
    %c0_i32_0 = arith.constant 0 : i32
    %c0_i32_1 = arith.constant 0 : i32
    return %arg0, %c0_i32, %c0_i32_0 : i32, i32, i32
  }
}

module attributes {stable_mosaic.version = 11 : i64} {
  func.func @_conv_in_lrelu_kernel(%arg0: i32, %arg1: i32, %arg2: memref<1x16x512xbf16, #tpu.memory_space<vmem>>, %arg3: memref<512x256xbf16, #tpu.memory_space<vmem>>, %arg4: memref<1x16x256xbf16, #tpu.memory_space<vmem>>, %arg5: memref<16x256xf32, #tpu.memory_space<vmem>>) attributes {dimension_semantics = [#tpu.dimension_semantics<parallel>, #tpu.dimension_semantics<arbitrary>], iteration_bounds = array<i64: 2, 4>, scalar_prefetch = 0 : i64, scratch_operands = 1 : i64, tpu.core_type = #tpu.core_type<tc>, window_params = [{transform_indices = @transform_0, window_bounds = array<i64: 1, 16, 512>}, {transform_indices = @transform_1, window_bounds = array<i64: 512, 256>}, {transform_indices = @transform_2, window_bounds = array<i64: 1, 16, 256>}]} {
    %c0_i32 = arith.constant 0 : i32
    %0 = arith.cmpi eq, %arg1, %c0_i32 : i32
    %1 = arith.extui %0 : i1 to i32
    %c0_i32_0 = arith.constant 0 : i32
    %2 = arith.cmpi ne, %1, %c0_i32_0 : i32
    scf.if %2 {
      %cst_10 = arith.constant 0.000000e+00 : f32
      %13 = vector.broadcast %cst_10 : f32 to vector<16x256xf32>
      %c0_11 = arith.constant 0 : index
      %c0_12 = arith.constant 0 : index
      %14 = vector.load %arg5[%c0_11, %c0_12] : memref<16x256xf32, #tpu.memory_space<vmem>>, vector<16x256xf32>
      tpu.vector_store %arg5[%c0_11, %c0_12], %13 {strides = array<i32>} : memref<16x256xf32, #tpu.memory_space<vmem>>, vector<16x256xf32>,
    } else {
    }
    %c0 = arith.constant 0 : index
    %c0_1 = arith.constant 0 : index
    %3 = vector.load %arg5[%c0, %c0_1] : memref<16x256xf32, #tpu.memory_space<vmem>>, vector<16x256xf32>
    %c0_2 = arith.constant 0 : index
    %c0_3 = arith.constant 0 : index
    %c0_4 = arith.constant 0 : index
    %4 = vector.load %arg2[%c0_2, %c0_3, %c0_4] : memref<1x16x512xbf16, #tpu.memory_space<vmem>>, vector<1x16x512xbf16>
    %5 = vector.shape_cast %4 : vector<1x16x512xbf16> to vector<16x512xbf16>
    %c0_5 = arith.constant 0 : index
    %c0_6 = arith.constant 0 : index
    %6 = vector.load %arg3[%c0_5, %c0_6] : memref<512x256xbf16, #tpu.memory_space<vmem>>, vector<512x256xbf16>
    %cst = arith.constant dense<0.000000e+00> : vector<16x256xf32>
    %7 = tpu.matmul %5, %6, %cst {dimension_numbers = #tpu.dot_dimension_numbers<[1], [0], [0], [1], [0, 0, 1, 1], [], []>} : vector<16x512xbf16>, vector<512x256xbf16>, vector<16x256xf32> -> vector<16x256xf32>
    %8 = arith.addf %3, %7 : vector<16x256xf32>
    %c0_7 = arith.constant 0 : index
    %c0_8 = arith.constant 0 : index
    %9 = vector.load %arg5[%c0_7, %c0_8] : memref<16x256xf32, #tpu.memory_space<vmem>>, vector<16x256xf32>
    tpu.vector_store %arg5[%c0_7, %c0_8], %8 {strides = array<i32>} : memref<16x256xf32, #tpu.memory_space<vmem>>, vector<16x256xf32>,
    %c3_i32 = arith.constant 3 : i32
    %10 = arith.cmpi eq, %arg1, %c3_i32 : i32
    %11 = arith.extui %10 : i1 to i32
    %c0_i32_9 = arith.constant 0 : i32
    %12 = arith.cmpi ne, %11, %c0_i32_9 : i32
    scf.if %12 {
      %c0_10 = arith.constant 0 : index
      %c0_11 = arith.constant 0 : index
      %13 = vector.load %arg5[%c0_10, %c0_11] : memref<16x256xf32, #tpu.memory_space<vmem>>, vector<16x256xf32>
      %cst_12 = arith.constant dense<0.000000e+00> : vector<256xf32>
      %14 = vector.multi_reduction <add>, %13, %cst_12 [0] : vector<16x256xf32> to vector<256xf32>
      %15 = vector.shape_cast %14 : vector<256xf32> to vector<1x256xf32>
      %cst_13 = arith.constant 6.250000e-02 : f32
      %16 = vector.broadcast %cst_13 : f32 to vector<1x256xf32>
      %17 = arith.mulf %15, %16 : vector<1x256xf32>
      %18 = vector.broadcast %17 : vector<1x256xf32> to vector<16x256xf32>
      %19 = arith.subf %13, %18 : vector<16x256xf32>
      %20 = arith.mulf %19, %19 : vector<16x256xf32>
      %cst_14 = arith.constant dense<0.000000e+00> : vector<256xf32>
      %21 = vector.multi_reduction <add>, %20, %cst_14 [0] : vector<16x256xf32> to vector<256xf32>
      %22 = vector.shape_cast %21 : vector<256xf32> to vector<1x256xf32>
      %cst_15 = arith.constant 6.250000e-02 : f32
      %23 = vector.broadcast %cst_15 : f32 to vector<1x256xf32>
      %24 = arith.mulf %22, %23 : vector<1x256xf32>
      %25 = vector.broadcast %17 : vector<1x256xf32> to vector<16x256xf32>
      %26 = arith.subf %13, %25 : vector<16x256xf32>
      %cst_16 = arith.constant 9.99999974E-6 : f32
      %27 = vector.broadcast %cst_16 : f32 to vector<1x256xf32>
      %28 = arith.addf %24, %27 : vector<1x256xf32>
      %29 = math.rsqrt %28 : vector<1x256xf32>
      %30 = vector.broadcast %29 : vector<1x256xf32> to vector<16x256xf32>
      %31 = arith.mulf %26, %30 : vector<16x256xf32>
      %cst_17 = arith.constant 0.000000e+00 : f32
      %32 = vector.broadcast %cst_17 : f32 to vector<16x256xf32>
      %33 = arith.cmpf ogt, %31, %32 : vector<16x256xf32>
      %cst_18 = arith.constant 2.000000e-01 : f32
      %34 = vector.broadcast %cst_18 : f32 to vector<16x256xf32>
      %35 = arith.mulf %34, %31 : vector<16x256xf32>
      %36 = arith.select %33, %31, %35 : vector<16x256xi1>, vector<16x256xf32>
      %37 = arith.truncf %36 : vector<16x256xf32> to vector<16x256xbf16>
      %c0_19 = arith.constant 0 : index
      %c0_20 = arith.constant 0 : index
      %c0_21 = arith.constant 0 : index
      %38 = vector.load %arg4[%c0_19, %c0_20, %c0_21] : memref<1x16x256xbf16, #tpu.memory_space<vmem>>, vector<1x16x256xbf16>
      %39 = vector.shape_cast %38 : vector<1x16x256xbf16> to vector<16x256xbf16>
      %40 = vector.shape_cast %37 : vector<16x256xbf16> to vector<1x16x256xbf16>
      tpu.vector_store %arg4[%c0_19, %c0_20, %c0_21], %40 {strides = array<i32>} : memref<1x16x256xbf16, #tpu.memory_space<vmem>>, vector<1x16x256xbf16>,
    } else {
    }
    return
  }
  func.func @transform_0(%arg0: i32, %arg1: i32) -> (i32, i32, i32) {
    %c0_i32 = arith.constant 0 : i32
    %c0_i32_0 = arith.constant 0 : i32
    return %arg0, %c0_i32, %arg1 : i32, i32, i32
  }
  func.func @transform_1(%arg0: i32, %arg1: i32) -> (i32, i32) {
    %c0_i32 = arith.constant 0 : i32
    %c0_i32_0 = arith.constant 0 : i32
    return %arg1, %c0_i32 : i32, i32
  }
  func.func @transform_2(%arg0: i32, %arg1: i32) -> (i32, i32, i32) {
    %c0_i32 = arith.constant 0 : i32
    %c0_i32_0 = arith.constant 0 : i32
    %c0_i32_1 = arith.constant 0 : i32
    return %arg0, %c0_i32, %c0_i32_0 : i32, i32, i32
  }
}

module attributes {stable_mosaic.version = 11 : i64} {
  func.func @_conv_in_lrelu_kernel(%arg0: i32, %arg1: i32, %arg2: memref<1x16x512xbf16, #tpu.memory_space<vmem>>, %arg3: memref<512x512xbf16, #tpu.memory_space<vmem>>, %arg4: memref<1x16x512xbf16, #tpu.memory_space<vmem>>, %arg5: memref<16x512xf32, #tpu.memory_space<vmem>>) attributes {dimension_semantics = [#tpu.dimension_semantics<parallel>, #tpu.dimension_semantics<arbitrary>], iteration_bounds = array<i64: 2, 8>, scalar_prefetch = 0 : i64, scratch_operands = 1 : i64, tpu.core_type = #tpu.core_type<tc>, window_params = [{transform_indices = @transform_0, window_bounds = array<i64: 1, 16, 512>}, {transform_indices = @transform_1, window_bounds = array<i64: 512, 512>}, {transform_indices = @transform_2, window_bounds = array<i64: 1, 16, 512>}]} {
    %c0_i32 = arith.constant 0 : i32
    %0 = arith.cmpi eq, %arg1, %c0_i32 : i32
    %1 = arith.extui %0 : i1 to i32
    %c0_i32_0 = arith.constant 0 : i32
    %2 = arith.cmpi ne, %1, %c0_i32_0 : i32
    scf.if %2 {
      %cst_10 = arith.constant 0.000000e+00 : f32
      %13 = vector.broadcast %cst_10 : f32 to vector<16x512xf32>
      %c0_11 = arith.constant 0 : index
      %c0_12 = arith.constant 0 : index
      %14 = vector.load %arg5[%c0_11, %c0_12] : memref<16x512xf32, #tpu.memory_space<vmem>>, vector<16x512xf32>
      tpu.vector_store %arg5[%c0_11, %c0_12], %13 {strides = array<i32>} : memref<16x512xf32, #tpu.memory_space<vmem>>, vector<16x512xf32>,
    } else {
    }
    %c0 = arith.constant 0 : index
    %c0_1 = arith.constant 0 : index
    %3 = vector.load %arg5[%c0, %c0_1] : memref<16x512xf32, #tpu.memory_space<vmem>>, vector<16x512xf32>
    %c0_2 = arith.constant 0 : index
    %c0_3 = arith.constant 0 : index
    %c0_4 = arith.constant 0 : index
    %4 = vector.load %arg2[%c0_2, %c0_3, %c0_4] : memref<1x16x512xbf16, #tpu.memory_space<vmem>>, vector<1x16x512xbf16>
    %5 = vector.shape_cast %4 : vector<1x16x512xbf16> to vector<16x512xbf16>
    %c0_5 = arith.constant 0 : index
    %c0_6 = arith.constant 0 : index
    %6 = vector.load %arg3[%c0_5, %c0_6] : memref<512x512xbf16, #tpu.memory_space<vmem>>, vector<512x512xbf16>
    %cst = arith.constant dense<0.000000e+00> : vector<16x512xf32>
    %7 = tpu.matmul %5, %6, %cst {dimension_numbers = #tpu.dot_dimension_numbers<[1], [0], [0], [1], [0, 0, 1, 1], [], []>} : vector<16x512xbf16>, vector<512x512xbf16>, vector<16x512xf32> -> vector<16x512xf32>
    %8 = arith.addf %3, %7 : vector<16x512xf32>
    %c0_7 = arith.constant 0 : index
    %c0_8 = arith.constant 0 : index
    %9 = vector.load %arg5[%c0_7, %c0_8] : memref<16x512xf32, #tpu.memory_space<vmem>>, vector<16x512xf32>
    tpu.vector_store %arg5[%c0_7, %c0_8], %8 {strides = array<i32>} : memref<16x512xf32, #tpu.memory_space<vmem>>, vector<16x512xf32>,
    %c7_i32 = arith.constant 7 : i32
    %10 = arith.cmpi eq, %arg1, %c7_i32 : i32
    %11 = arith.extui %10 : i1 to i32
    %c0_i32_9 = arith.constant 0 : i32
    %12 = arith.cmpi ne, %11, %c0_i32_9 : i32
    scf.if %12 {
      %c0_10 = arith.constant 0 : index
      %c0_11 = arith.constant 0 : index
      %13 = vector.load %arg5[%c0_10, %c0_11] : memref<16x512xf32, #tpu.memory_space<vmem>>, vector<16x512xf32>
      %14 = tpu.iota {dimensions = array<i32: 0>} : vector<16x512xi32>
      %c9_i32 = arith.constant 9 : i32
      %15 = vector.broadcast %c9_i32 : i32 to vector<16x512xi32>
      %16 = arith.cmpi slt, %14, %15 : vector<16x512xi32>
      %cst_12 = arith.constant 0.000000e+00 : f32
      %17 = vector.broadcast %cst_12 : f32 to vector<16x512xf32>
      %18 = arith.select %16, %13, %17 : vector<16x512xi1>, vector<16x512xf32>
      %cst_13 = arith.constant dense<0.000000e+00> : vector<512xf32>
      %19 = vector.multi_reduction <add>, %18, %cst_13 [0] : vector<16x512xf32> to vector<512xf32>
      %20 = vector.shape_cast %19 : vector<512xf32> to vector<1x512xf32>
      %cst_14 = arith.constant 0.111111112 : f32
      %21 = vector.broadcast %cst_14 : f32 to vector<1x512xf32>
      %22 = arith.mulf %20, %21 : vector<1x512xf32>
      %23 = vector.broadcast %22 : vector<1x512xf32> to vector<16x512xf32>
      %24 = arith.subf %13, %23 : vector<16x512xf32>
      %25 = arith.mulf %24, %24 : vector<16x512xf32>
      %cst_15 = arith.constant 0.000000e+00 : f32
      %26 = vector.broadcast %cst_15 : f32 to vector<16x512xf32>
      %27 = arith.select %16, %25, %26 : vector<16x512xi1>, vector<16x512xf32>
      %cst_16 = arith.constant dense<0.000000e+00> : vector<512xf32>
      %28 = vector.multi_reduction <add>, %27, %cst_16 [0] : vector<16x512xf32> to vector<512xf32>
      %29 = vector.shape_cast %28 : vector<512xf32> to vector<1x512xf32>
      %cst_17 = arith.constant 0.111111112 : f32
      %30 = vector.broadcast %cst_17 : f32 to vector<1x512xf32>
      %31 = arith.mulf %29, %30 : vector<1x512xf32>
      %32 = vector.broadcast %22 : vector<1x512xf32> to vector<16x512xf32>
      %33 = arith.subf %13, %32 : vector<16x512xf32>
      %cst_18 = arith.constant 9.99999974E-6 : f32
      %34 = vector.broadcast %cst_18 : f32 to vector<1x512xf32>
      %35 = arith.addf %31, %34 : vector<1x512xf32>
      %36 = math.rsqrt %35 : vector<1x512xf32>
      %37 = vector.broadcast %36 : vector<1x512xf32> to vector<16x512xf32>
      %38 = arith.mulf %33, %37 : vector<16x512xf32>
      %cst_19 = arith.constant 0.000000e+00 : f32
      %39 = vector.broadcast %cst_19 : f32 to vector<16x512xf32>
      %40 = arith.cmpf ogt, %38, %39 : vector<16x512xf32>
      %cst_20 = arith.constant 2.000000e-01 : f32
      %41 = vector.broadcast %cst_20 : f32 to vector<16x512xf32>
      %42 = arith.mulf %41, %38 : vector<16x512xf32>
      %43 = arith.select %40, %38, %42 : vector<16x512xi1>, vector<16x512xf32>
      %44 = arith.truncf %43 : vector<16x512xf32> to vector<16x512xbf16>
      %c0_21 = arith.constant 0 : index
      %c0_22 = arith.constant 0 : index
      %c0_23 = arith.constant 0 : index
      %45 = vector.load %arg4[%c0_21, %c0_22, %c0_23] : memref<1x16x512xbf16, #tpu.memory_space<vmem>>, vector<1x16x512xbf16>
      %46 = vector.shape_cast %45 : vector<1x16x512xbf16> to vector<16x512xbf16>
      %47 = vector.shape_cast %44 : vector<16x512xbf16> to vector<1x16x512xbf16>
      tpu.vector_store %arg4[%c0_21, %c0_22, %c0_23], %47 {strides = array<i32>} : memref<1x16x512xbf16, #tpu.memory_space<vmem>>, vector<1x16x512xbf16>,
    } else {
    }
    return
  }
  func.func @transform_0(%arg0: i32, %arg1: i32) -> (i32, i32, i32) {
    %c0_i32 = arith.constant 0 : i32
    %c0_i32_0 = arith.constant 0 : i32
    return %arg0, %c0_i32, %arg1 : i32, i32, i32
  }
  func.func @transform_1(%arg0: i32, %arg1: i32) -> (i32, i32) {
    %c0_i32 = arith.constant 0 : i32
    %c0_i32_0 = arith.constant 0 : i32
    return %arg1, %c0_i32 : i32, i32
  }
  func.func @transform_2(%arg0: i32, %arg1: i32) -> (i32, i32, i32) {
    %c0_i32 = arith.constant 0 : i32
    %c0_i32_0 = arith.constant 0 : i32
    %c0_i32_1 = arith.constant 0 : i32
    return %arg0, %c0_i32, %c0_i32_0 : i32, i32, i32
  }
}

module attributes {stable_mosaic.version = 11 : i64} {
  func.func @_final_reduce_kernel(%arg0: memref<2x16x512xf32, #tpu.memory_space<vmem>>, %arg1: memref<16x512xf32, #tpu.memory_space<vmem>>, %arg2: memref<1x1xf32, #tpu.memory_space<vmem>>, %arg3: memref<2x1xf32, #tpu.memory_space<vmem>>) attributes {dimension_semantics = [], scalar_prefetch = 0 : i64, scratch_operands = 0 : i64, tpu.core_type = #tpu.core_type<tc>} {
    %c0 = arith.constant 0 : index
    %c0_0 = arith.constant 0 : index
    %c0_1 = arith.constant 0 : index
    %0 = vector.load %arg0[%c0, %c0_0, %c0_1] : memref<2x16x512xf32, #tpu.memory_space<vmem>>, vector<2x16x512xf32>
    %c0_2 = arith.constant 0 : index
    %c0_3 = arith.constant 0 : index
    %1 = vector.load %arg1[%c0_2, %c0_3] : memref<16x512xf32, #tpu.memory_space<vmem>>, vector<16x512xf32>
    %2 = vector.shape_cast %1 : vector<16x512xf32> to vector<1x16x512xf32>
    %3 = vector.broadcast %2 : vector<1x16x512xf32> to vector<2x16x512xf32>
    %4 = arith.mulf %0, %3 : vector<2x16x512xf32>
    %cst = arith.constant dense<0.000000e+00> : vector<2x16xf32>
    %5 = vector.multi_reduction <add>, %4, %cst [2] : vector<2x16x512xf32> to vector<2x16xf32>
    %cst_4 = arith.constant dense<0.000000e+00> : vector<2xf32>
    %6 = vector.multi_reduction <add>, %5, %cst_4 [1] : vector<2x16xf32> to vector<2xf32>
    %7 = vector.shape_cast %6 : vector<2xf32> to vector<2x1xf32>
    %cst_5 = arith.constant 2.500000e-01 : f32
    %8 = vector.broadcast %cst_5 : f32 to vector<2x1xf32>
    %9 = arith.mulf %7, %8 : vector<2x1xf32>
    %c0_6 = arith.constant 0 : index
    %c0_7 = arith.constant 0 : index
    %10 = vector.load %arg2[%c0_6, %c0_7] : memref<1x1xf32, #tpu.memory_space<vmem>>, vector<1x1xf32>
    %11 = vector.broadcast %10 : vector<1x1xf32> to vector<2x1xf32>
    %12 = arith.addf %9, %11 : vector<2x1xf32>
    %c0_8 = arith.constant 0 : index
    %c0_9 = arith.constant 0 : index
    %13 = vector.load %arg3[%c0_8, %c0_9] : memref<2x1xf32, #tpu.memory_space<vmem>>, vector<2x1xf32>
    tpu.vector_store %arg3[%c0_8, %c0_9], %12 {strides = array<i32>} : memref<2x1xf32, #tpu.memory_space<vmem>>, vector<2x1xf32>,
    return
  }
}

</mosaic_0001>

<llo_original>
// kernel: discriminator_forward.5
$region0: #{discriminator_forward.5}
  #allocation0 [shape = 'u32[]', space=smem, size = 0x4, offset = 0x4, fixed_abs, tag = 'smem constant byte address 0x4 - core index']
  #allocation1 [shape = 'u32[144,128]{1,0:T(1,128)}', space=vmem, size = 0x12000, scoped, tag = 'internal scratch']
  #allocation2 [shape = 'f32[256,64]{1,0:T(8,128)}', space=vmem, size = 0x20000, scoped, tag = 'scratch operand']
  %s0 = inlined_call_operand.vmem [shape: bf16[512,48], index: 0, kind: input, shape index: {}]
  %s1 = inlined_call_operand.vmem [shape: bf16[48,64], index: 1, kind: input, shape index: {}]
  %s2 = inlined_call_operand.hbm [shape: f32[1,64], index: 2, kind: input, shape index: {}]
  %s3 = inlined_call_operand.vmem [shape: bf16[512,64], index: 3, kind: output, shape index: {}]
  %s4 = sld [smem:[#allocation0]]
  $region57: #{discriminator_forward.5} parent=0
    _
  %s6 = ssub.s32 1, %s4
  %s7 = scalar_select 0, %s6, %s4
  $region1: #{discriminator_forward.5} parent=0
    #allocation3 [shape = 'u8[512]{0}', space=vmem, size = 0x400, scoped, tag = 'input window, operand 2, single buffered']
    #allocation4 [shape = 's32[2]{0}', space=sflag, size = 0x8, scoped, tag = 'scoped memory for discriminator_forward.5']
    %8 = vsyncpa [#allocation4], 0
    loop: start=0, step=1, limit=4
    $region2: #{discriminator_forward.5} parent=1 // loop_pre_header
      _
    $region3: #{discriminator_forward.5} parent=1 // loop_header
      %s10 = sphi 0, %s14
      %p11 = scmp.ge.s32.totalorder %s10, 4
      %s17 = sphi 0, %s29
      %s18 = sphi 0, %s25
      %s19 = sphi 0, %s17
      %s20 = sphi 0, %s18
      %s21 = sphi 0, %s19
      %s22 = sphi 0, %s20
      %s34 = sphi 0, %s36
      %s37 = sphi 0, %s34
      %s38 = sphi 0, %s37
      %s54 = sphi 0, %s38
      %s60 = sphi 0, %s62
      %s63 = sphi 0, %s60
      %s64 = sphi 0, %s63
      %s80 = sphi 0, %s64
      %s84 = sphi 0, %s84
      %s86 = sphi 0, %s84
      %s87 = sphi 0, %s86
      %s101 = sphi 0, %s87
      %s107 = sphi 0, %s109
      %s110 = sphi 0, %s107
      %s111 = sphi 0, %s110
      %s127 = sphi 0, %s111
    $region4: #{discriminator_forward.5} parent=1 // loop_header_branch
      %13 = sbr.rel (%p11) target = $region8
    $region5: #{discriminator_forward.5} parent=1 // loop_body
      %s15 = ssub.s32 %s10, 1
      %s16 = ssub.s32 %s10, 2
      %s23 = sadd.s32 1, %s18
      %p24 = scmp.ge.s32.totalorder %s23, 1
      %s25 = scalar_select %p24, 0, %s23
      %s26 = sadd.s32 1, %s17
      %s27 = scalar_select %p24, %s26, %s17
      %p28 = scmp.ge.s32.totalorder %s27, 2
      %s29 = scalar_select %p28, 0, %s27
      %s30 = ssub.s32 %s17, %s29
      %s31 = ssub.s32 %s18, %s25
      %s32 = sor.u32 %s30, %s31
      %p33 = scmp.eq.s32.totalorder %s32, 0
      %s35 = sadd.s32 %s34, 1
      %s36 = scalar_select %p33, %s34, %s35
      %p39 = pneg %p33
      %p40 = scmp.eq.s32.totalorder %s10, 1
      %p41 = por %p39, %p40
      %p42 = scmp.ne.s32.totalorder %s34, %s37
      %p43 = scmp.eq.s32.totalorder %s10, 0
      %p44 = por %p42, %p43
      %p45 = scmp.ne.s32.totalorder %s34, %s37
      %p46 = scmp.eq.s32.totalorder %s15, 1
      %p47 = por %p45, %p46
      %p48 = scmp.ne.s32.totalorder %s37, %s38
      %p49 = scmp.eq.s32.totalorder %s15, 0
      %p50 = por %p48, %p49
      %p51 = scmp.ne.s32.totalorder %s37, %s38
      %p52 = scmp.eq.s32.totalorder %s16, 1
      %p53 = por %p51, %p52
      %p55 = scmp.ne.s32.totalorder %s38, %s54
      %p56 = scmp.eq.s32.totalorder %s16, 0
      %p57 = por %p55, %p56
      %s58 = ssub.s32 %s18, %s25
      %p59 = scmp.eq.s32.totalorder %s58, 0
      %s61 = sadd.s32 %s60, 1
      %s62 = scalar_select %p59, %s60, %s61
      %p65 = pneg %p59
      %p66 = scmp.eq.s32.totalorder %s10, 1
      %p67 = por %p65, %p66
      %p68 = scmp.ne.s32.totalorder %s60, %s63
      %p69 = scmp.eq.s32.totalorder %s10, 0
      %p70 = por %p68, %p69
      %p71 = scmp.ne.s32.totalorder %s60, %s63
      %p72 = scmp.eq.s32.totalorder %s15, 1
      %p73 = por %p71, %p72
      %p74 = scmp.ne.s32.totalorder %s63, %s64
      %p75 = scmp.eq.s32.totalorder %s15, 0
      %p76 = por %p74, %p75
      %p77 = scmp.ne.s32.totalorder %s63, %s64
      %p78 = scmp.eq.s32.totalorder %s16, 1
      %p79 = por %p77, %p78
      %p81 = scmp.ne.s32.totalorder %s64, %s80
      %p82 = scmp.eq.s32.totalorder %s16, 0
      %p83 = por %p81, %p82
      %s85 = sadd.s32 %s84, 1
      %p88 = scmp.eq.s32.totalorder %s10, 1
      %p89 = scmp.ne.s32.totalorder %s84, %s86
      %p90 = scmp.eq.s32.totalorder %s10, 0
      %p91 = por %p89, %p90
      %p92 = scmp.ne.s32.totalorder %s84, %s86
      %p93 = scmp.eq.s32.totalorder %s15, 1
      %p94 = por %p92, %p93
      %p95 = scmp.ne.s32.totalorder %s86, %s87
      %p96 = scmp.eq.s32.totalorder %s15, 0
      %p97 = por %p95, %p96
      %p98 = scmp.ne.s32.totalorder %s86, %s87
      %p99 = scmp.eq.s32.totalorder %s16, 1
      %p100 = por %p98, %p99
      %p102 = scmp.ne.s32.totalorder %s87, %s101
      %p103 = scmp.eq.s32.totalorder %s16, 0
      %p104 = por %p102, %p103
      %s105 = ssub.s32 %s17, %s29
      %p106 = scmp.eq.s32.totalorder %s105, 0
      %s108 = sadd.s32 %s107, 1
      %s109 = scalar_select %p106, %s107, %s108
      %p112 = pneg %p106
      %p113 = scmp.eq.s32.totalorder %s10, 1
      %p114 = por %p112, %p113
      %p115 = scmp.ne.s32.totalorder %s107, %s110
      %p116 = scmp.eq.s32.totalorder %s10, 0
      %p117 = por %p115, %p116
      %p118 = scmp.ne.s32.totalorder %s107, %s110
      %p119 = scmp.eq.s32.totalorder %s15, 1
      %p120 = por %p118, %p119
      %p121 = scmp.ne.s32.totalorder %s110, %s111
      %p122 = scmp.eq.s32.totalorder %s15, 0
      %p123 = por %p121, %p122
      %p124 = scmp.ne.s32.totalorder %s110, %s111
      %p125 = scmp.eq.s32.totalorder %s16, 1
      %p126 = por %p124, %p125
      %p128 = scmp.ne.s32.totalorder %s111, %s127
      %p129 = scmp.eq.s32.totalorder %s16, 0
      %p130 = por %p128, %p129
      %p131 = scmp.le.s32.totalorder 1, %s10
      %p132 = scmp.lt.s32.totalorder %s10, 3
      %p133 = pnand %p131, %p132
      %p134 = pneg %p133
      // Predicated region
      $region9: #{discriminator_forward.5} parent=5 // pred_check
        _
      $region10: #{discriminator_forward.5} parent=5 // pred_check_branch
        %136 = sbr.rel (%p133) target = $region12
      $region11: #{discriminator_forward.5} parent=5 // pred_region
        %s137 = ssub.s32 %s10, 1
        // Predicated region
        $region13: #{discriminator_forward.5} parent=11 // pred_check
          %p138 = pneg %p76
        $region14: #{discriminator_forward.5} parent=11 // pred_check_branch
          %140 = sbr.rel (%p138) target = $region16
        $region15: #{discriminator_forward.5} parent=11 // pred_region
          %s141 = smul.u32 6, %s20
          %p142 = scmp.lt.s32.totalorder %s141, 5
          %s143 = scalar_select %p142, %s141, 5
          %s144 = smul.addr %s143, 4
          %s145 = scalar_lea.vmem %s1, %s144
          %s146 = smul.u32 6, %s20
        $region16: #{discriminator_forward.5} parent=11 // pred_fallthru
          _
        // Predicated region
        $region17: #{discriminator_forward.5} parent=11 // pred_check
          %p147 = pneg %p97
        $region18: #{discriminator_forward.5} parent=11 // pred_check_branch
          %149 = sbr.rel (%p147) target = $region20
        $region19: #{discriminator_forward.5} parent=11 // pred_region
          %s151 = ssub.s32 16, 16
          %152 = vsyncadd [#allocation4], %s151
          %s154 = sshll.u32 [#allocation3], 4
          %s155 = int_to_ptr.vmem [resolvable:$true] %s154
          %157 = dma.hbm_to_vmem [thread:$0]  %s2, 16, %s155, [#allocation4]
        $region20: #{discriminator_forward.5} parent=11 // pred_fallthru
          _
      $region12: #{discriminator_forward.5} parent=5 // pred_fallthru
        _
      %p158 = scmp.lt.s32.totalorder %s10, 2
      // Predicated region
      $region21: #{discriminator_forward.5} parent=5 // pred_check
        %p159 = pneg %p158
      $region22: #{discriminator_forward.5} parent=5 // pred_check_branch
        %161 = sbr.rel (%p159) target = $region24
      $region23: #{discriminator_forward.5} parent=5 // pred_region
        // Predicated region
        $region25: #{discriminator_forward.5} parent=23 // pred_check
          %p162 = pneg %p44
        $region26: #{discriminator_forward.5} parent=23 // pred_check_branch
          %164 = sbr.rel (%p162) target = $region28
        $region27: #{discriminator_forward.5} parent=23 // pred_region
          %s165 = smul.u32 32, %s17
          %p166 = scmp.lt.s32.totalorder %s165, 63
          %s167 = scalar_select %p166, %s165, 63
          %p168 = scmp.lt.s32.totalorder %s18, 0
          %s169 = scalar_select %p168, %s18, 0
          %s170 = sadd.s32 %s169, %s167
          %s171 = smul.addr %s170, 4
          %s172 = scalar_lea.vmem %s0, %s171
          %s173 = smul.u32 32, %s17
        $region28: #{discriminator_forward.5} parent=23 // pred_fallthru
          _
      $region24: #{discriminator_forward.5} parent=5 // pred_fallthru
        _
      %p174 = scmp.le.s32.totalorder 1, %s10
      %p175 = scmp.lt.s32.totalorder %s10, 3
      %p176 = pnand %p174, %p175
      %p177 = pneg %p176
      // Predicated region
      $region29: #{discriminator_forward.5} parent=5 // pred_check
        _
      $region30: #{discriminator_forward.5} parent=5 // pred_check_branch
        %179 = sbr.rel (%p176) target = $region32
      $region31: #{discriminator_forward.5} parent=5 // pred_region
        %s180 = ssub.s32 %s10, 1
        // Predicated region
        $region33: #{discriminator_forward.5} parent=31 // pred_check
          %p181 = pneg %p97
        $region34: #{discriminator_forward.5} parent=31 // pred_check_branch
          %183 = sbr.rel (%p181) target = $region36
        $region35: #{discriminator_forward.5} parent=31 // pred_region
          %184 = dma.done [#allocation4], 16
        $region36: #{discriminator_forward.5} parent=31 // pred_fallthru
          _
        %s185 = smul.u32 32, %s19
        %p186 = scmp.lt.s32.totalorder %s185, 63
        %s187 = scalar_select %p186, %s185, 63
        %p188 = scmp.lt.s32.totalorder %s20, 0
        %s189 = scalar_select %p188, %s20, 0
        %s190 = sadd.s32 %s189, %s187
        %s191 = smul.addr %s190, 4
        %s192 = scalar_lea.vmem %s0, %s191
        %p193 = pneg %p50
        %p194 = pneg %p47
        %s195 = smul.u32 6, %s20
        %p196 = scmp.lt.s32.totalorder %s195, 5
        %s197 = scalar_select %p196, %s195, 5
        %s198 = smul.addr %s197, 4
        %s199 = scalar_lea.vmem %s1, %s198
        %p200 = pneg %p76
        %p201 = pneg %p73
        %p202 = pneg %p97
        %p203 = pneg %p94
        %p204 = pneg %p123
        %p205 = pneg %p120
        %s206 = smul.u32 32, %s19
        %p207 = scmp.lt.s32.totalorder %s206, 63
        %s208 = scalar_select %p207, %s206, 63
        %s209 = smul.addr %s208, 4
        %s210 = scalar_lea.vmem %s3, %s209
        %s211 = smul.u32 32, %s19
        %p212 = scmp.lt.s32.totalorder %s211, 63
        %s213 = scalar_select %p212, %s211, 63
        %p214 = scmp.lt.s32.totalorder %s20, 0
        %s215 = scalar_select %p214, %s20, 0
        %s216 = sadd.s32 %s215, %s213
        %s217 = smul.addr %s216, 4
        %s218 = scalar_lea.vmem %s0, %s217
        %s219 = smul.u32 32, %s19
        %s220 = smul.u32 6, %s20
        %p221 = scmp.lt.s32.totalorder %s220, 5
        %s222 = scalar_select %p221, %s220, 5
        %s223 = smul.addr %s222, 4
        %s224 = scalar_lea.vmem %s1, %s223
        %s225 = smul.u32 6, %s20
        %s226 = smul.u32 32, %s19
        %p227 = scmp.lt.s32.totalorder %s226, 63
        %s228 = scalar_select %p227, %s226, 63
        %s229 = smul.addr %s228, 4
        %s230 = scalar_lea.vmem %s3, %s229
        %s231 = smul.u32 32, %s19
        %p233 = scmp.eq.s32.totalorder %s20, 0
        // Predicated region
        $region37: #{discriminator_forward.5} parent=31 // pred_check
          %p234 = pneg %p233
        $region38: #{discriminator_forward.5} parent=31 // pred_check_branch
          %236 = sbr.rel (%p234) target = $region40
        $region39: #{discriminator_forward.5} parent=31 // pred_region
          %vm237 = vcmask 523264
          %238 = vst.msk [vmem:[#allocation2] sm:$0xff] %vm237, 0.0
          %239 = vst.msk [vmem:[#allocation2 + $0x8] sm:$0xff] %vm237, 0.0
          %240 = vst.msk [vmem:[#allocation2 + $0x10] sm:$0xff] %vm237, 0.0
          %241 = vst.msk [vmem:[#allocation2 + $0x18] sm:$0xff] %vm237, 0.0
          %242 = vst.msk [vmem:[#allocation2 + $0x20] sm:$0xff] %vm237, 0.0
          %243 = vst.msk [vmem:[#allocation2 + $0x28] sm:$0xff] %vm237, 0.0
          %244 = vst.msk [vmem:[#allocation2 + $0x30] sm:$0xff] %vm237, 0.0
          %245 = vst.msk [vmem:[#allocation2 + $0x38] sm:$0xff] %vm237, 0.0
          %246 = vst.msk [vmem:[#allocation2 + $0x40] sm:$0xff] %vm237, 0.0
          %247 = vst.msk [vmem:[#allocation2 + $0x48] sm:$0xff] %vm237, 0.0
          %248 = vst.msk [vmem:[#allocation2 + $0x50] sm:$0xff] %vm237, 0.0
          %249 = vst.msk [vmem:[#allocation2 + $0x58] sm:$0xff] %vm237, 0.0
          %250 = vst.msk [vmem:[#allocation2 + $0x60] sm:$0xff] %vm237, 0.0
          %251 = vst.msk [vmem:[#allocation2 + $0x68] sm:$0xff] %vm237, 0.0
          %252 = vst.msk [vmem:[#allocation2 + $0x70] sm:$0xff] %vm237, 0.0
          %253 = vst.msk [vmem:[#allocation2 + $0x78] sm:$0xff] %vm237, 0.0
          %254 = vst.msk [vmem:[#allocation2 + $0x80] sm:$0xff] %vm237, 0.0
          %255 = vst.msk [vmem:[#allocation2 + $0x88] sm:$0xff] %vm237, 0.0
          %256 = vst.msk [vmem:[#allocation2 + $0x90] sm:$0xff] %vm237, 0.0
          %257 = vst.msk [vmem:[#allocation2 + $0x98] sm:$0xff] %vm237, 0.0
          %258 = vst.msk [vmem:[#allocation2 + $0xa0] sm:$0xff] %vm237, 0.0
          %259 = vst.msk [vmem:[#allocation2 + $0xa8] sm:$0xff] %vm237, 0.0
          %260 = vst.msk [vmem:[#allocation2 + $0xb0] sm:$0xff] %vm237, 0.0
          %261 = vst.msk [vmem:[#allocation2 + $0xb8] sm:$0xff] %vm237, 0.0
          %262 = vst.msk [vmem:[#allocation2 + $0xc0] sm:$0xff] %vm237, 0.0
          %263 = vst.msk [vmem:[#allocation2 + $0xc8] sm:$0xff] %vm237, 0.0
          %264 = vst.msk [vmem:[#allocation2 + $0xd0] sm:$0xff] %vm237, 0.0
          %265 = vst.msk [vmem:[#allocation2 + $0xd8] sm:$0xff] %vm237, 0.0
          %266 = vst.msk [vmem:[#allocation2 + $0xe0] sm:$0xff] %vm237, 0.0
          %267 = vst.msk [vmem:[#allocation2 + $0xe8] sm:$0xff] %vm237, 0.0
          %268 = vst.msk [vmem:[#allocation2 + $0xf0] sm:$0xff] %vm237, 0.0
          %269 = vst.msk [vmem:[#allocation2 + $0xf8] sm:$0xff] %vm237, 0.0
        $region40: #{discriminator_forward.5} parent=31 // pred_fallthru
          _
        %v270 = vld [vmem:[#allocation2] sm:$0xff]
        %v271 = vld [vmem:[#allocation2 + $0x8] sm:$0xff]
        %v272 = vld [vmem:[#allocation2 + $0x10] sm:$0xff]
        %v273 = vld [vmem:[#allocation2 + $0x18] sm:$0xff]
        %v274 = vld [vmem:[#allocation2 + $0x20] sm:$0xff]
        %v275 = vld [vmem:[#allocation2 + $0x28] sm:$0xff]
        %v276 = vld [vmem:[#allocation2 + $0x30] sm:$0xff]
        %v277 = vld [vmem:[#allocation2 + $0x38] sm:$0xff]
        %v278 = vld [vmem:[#allocation2 + $0x40] sm:$0xff]
        %v279 = vld [vmem:[#allocation2 + $0x48] sm:$0xff]
        %v280 = vld [vmem:[#allocation2 + $0x50] sm:$0xff]
        %v281 = vld [vmem:[#allocation2 + $0x58] sm:$0xff]
        %v282 = vld [vmem:[#allocation2 + $0x60] sm:$0xff]
        %v283 = vld [vmem:[#allocation2 + $0x68] sm:$0xff]
        %v284 = vld [vmem:[#allocation2 + $0x70] sm:$0xff]
        %v285 = vld [vmem:[#allocation2 + $0x78] sm:$0xff]
        %v286 = vld [vmem:[#allocation2 + $0x80] sm:$0xff]
        %v287 = vld [vmem:[#allocation2 + $0x88] sm:$0xff]
        %v288 = vld [vmem:[#allocation2 + $0x90] sm:$0xff]
        %v289 = vld [vmem:[#allocation2 + $0x98] sm:$0xff]
        %v290 = vld [vmem:[#allocation2 + $0xa0] sm:$0xff]
        %v291 = vld [vmem:[#allocation2 + $0xa8] sm:$0xff]
        %v292 = vld [vmem:[#allocation2 + $0xb0] sm:$0xff]
        %v293 = vld [vmem:[#allocation2 + $0xb8] sm:$0xff]
        %v294 = vld [vmem:[#allocation2 + $0xc0] sm:$0xff]
        %v295 = vld [vmem:[#allocation2 + $0xc8] sm:$0xff]
        %v296 = vld [vmem:[#allocation2 + $0xd0] sm:$0xff]
        %v297 = vld [vmem:[#allocation2 + $0xd8] sm:$0xff]
        %v298 = vld [vmem:[#allocation2 + $0xe0] sm:$0xff]
        %v299 = vld [vmem:[#allocation2 + $0xe8] sm:$0xff]
        %v300 = vld [vmem:[#allocation2 + $0xf0] sm:$0xff]
        %v301 = vld [vmem:[#allocation2 + $0xf8] sm:$0xff]
        %v302 = vld [vmem:[%s218] sm:$0xf]
        %v303 = vld [vmem:[%s218 + $0x4] sm:$0xf]
        %v304 = vld [vmem:[%s218 + $0x8] sm:$0xf]
        %v305 = vld [vmem:[%s218 + $0xc] sm:$0xf]
        %v306 = vld [vmem:[%s218 + $0x10] sm:$0xf]
        %v307 = vld [vmem:[%s218 + $0x14] sm:$0xf]
        %v308 = vld [vmem:[%s218 + $0x18] sm:$0xf]
        %v309 = vld [vmem:[%s218 + $0x1c] sm:$0xf]
        %v310 = vld [vmem:[%s218 + $0x20] sm:$0xf]
        %v311 = vld [vmem:[%s218 + $0x24] sm:$0xf]
        %v312 = vld [vmem:[%s218 + $0x28] sm:$0xf]
        %v313 = vld [vmem:[%s218 + $0x2c] sm:$0xf]
        %v314 = vld [vmem:[%s218 + $0x30] sm:$0xf]
        %v315 = vld [vmem:[%s218 + $0x34] sm:$0xf]
        %v316 = vld [vmem:[%s218 + $0x38] sm:$0xf]
        %v317 = vld [vmem:[%s218 + $0x3c] sm:$0xf]
        %v318 = vld [vmem:[%s218 + $0x40] sm:$0xf]
        %v319 = vld [vmem:[%s218 + $0x44] sm:$0xf]
        %v320 = vld [vmem:[%s218 + $0x48] sm:$0xf]
        %v321 = vld [vmem:[%s218 + $0x4c] sm:$0xf]
        %v322 = vld [vmem:[%s218 + $0x50] sm:$0xf]
        %v323 = vld [vmem:[%s218 + $0x54] sm:$0xf]
        %v324 = vld [vmem:[%s218 + $0x58] sm:$0xf]
        %v325 = vld [vmem:[%s218 + $0x5c] sm:$0xf]
        %v326 = vld [vmem:[%s218 + $0x60] sm:$0xf]
        %v327 = vld [vmem:[%s218 + $0x64] sm:$0xf]
        %v328 = vld [vmem:[%s218 + $0x68] sm:$0xf]
        %v329 = vld [vmem:[%s218 + $0x6c] sm:$0xf]
        %v330 = vld [vmem:[%s218 + $0x70] sm:$0xf]
        %v331 = vld [vmem:[%s218 + $0x74] sm:$0xf]
        %v332 = vld [vmem:[%s218 + $0x78] sm:$0xf]
        %v333 = vld [vmem:[%s218 + $0x7c] sm:$0xf]
        %v334 = vld [vmem:[%s224] sm:$0xf]
        %v335 = vld [vmem:[%s224 + $0x4] sm:$0xf]
        %v336 = vld [vmem:[%s224 + $0x8] sm:$0xf]
        %v337 = vld [vmem:[%s224 + $0xc] sm:$0xf]
        %v338 = vld [vmem:[%s224 + $0x10] sm:$0xf]
        %v339 = vld [vmem:[%s224 + $0x14] sm:$0xf]
        %v372 = vunpack.c.l.b16 %v302
        %v373 = vunpack.c.l.b16 %v303
        %v374 = vunpack.c.l.b16 %v304
        %v375 = vunpack.c.l.b16 %v305
        %v376 = vunpack.c.l.b16 %v306
        %v377 = vunpack.c.l.b16 %v307
        %v378 = vunpack.c.l.b16 %v308
        %v379 = vunpack.c.l.b16 %v309
        %v380 = vunpack.c.l.b16 %v310
        %v381 = vunpack.c.l.b16 %v311
        %v382 = vunpack.c.l.b16 %v312
        %v383 = vunpack.c.l.b16 %v313
        %v384 = vunpack.c.l.b16 %v314
        %v385 = vunpack.c.l.b16 %v315
        %v386 = vunpack.c.l.b16 %v316
        %v387 = vunpack.c.l.b16 %v317
        %v388 = vunpack.c.l.b16 %v318
        %v389 = vunpack.c.l.b16 %v319
        %v390 = vunpack.c.l.b16 %v320
        %v391 = vunpack.c.l.b16 %v321
        %v392 = vunpack.c.l.b16 %v322
        %v393 = vunpack.c.l.b16 %v323
        %v394 = vunpack.c.l.b16 %v324
        %v395 = vunpack.c.l.b16 %v325
        %v396 = vunpack.c.l.b16 %v326
        %v397 = vunpack.c.l.b16 %v327
        %v398 = vunpack.c.l.b16 %v328
        %v399 = vunpack.c.l.b16 %v329
        %v400 = vunpack.c.l.b16 %v330
        %v401 = vunpack.c.l.b16 %v331
        %v402 = vunpack.c.l.b16 %v332
        %v403 = vunpack.c.l.b16 %v333
        %v404 = vpack.c.b16 %v373, %v372
        %v405 = vpack.c.b16 %v375, %v374
        %v406 = vpack.c.b16 %v377, %v376
        %v407 = vpack.c.b16 %v379, %v378
        %v408 = vpack.c.b16 %v381, %v380
        %v409 = vpack.c.b16 %v383, %v382
        %v410 = vpack.c.b16 %v385, %v384
        %v411 = vpack.c.b16 %v387, %v386
        %v412 = vpack.c.b16 %v389, %v388
        %v413 = vpack.c.b16 %v391, %v390
        %v414 = vpack.c.b16 %v393, %v392
        %v415 = vpack.c.b16 %v395, %v394
        %v416 = vpack.c.b16 %v397, %v396
        %v417 = vpack.c.b16 %v399, %v398
        %v418 = vpack.c.b16 %v401, %v400
        %v419 = vpack.c.b16 %v403, %v402
        %v426 = vunpack.c.l.b16 %v334
        %v427 = vunpack.c.l.b16 %v335
        %v428 = vunpack.c.l.b16 %v336
        %v429 = vunpack.c.l.b16 %v337
        %v430 = vunpack.c.l.b16 %v338
        %v431 = vunpack.c.l.b16 %v339
        %v432 = vpack.c.b16 %v427, %v426
        %v433 = vpack.c.b16 %v429, %v428
        %v434 = vpack.c.b16 %v431, %v430
        %vm438 = vcmask 392192
        %v440 = vsel %vm438, %v404, 0
        %v443 = vsel %vm438, %v405, 0
        %v446 = vsel %vm438, %v406, 0
        %v449 = vsel %vm438, %v407, 0
        %v452 = vsel %vm438, %v408, 0
        %v455 = vsel %vm438, %v409, 0
        %v458 = vsel %vm438, %v410, 0
        %v461 = vsel %vm438, %v411, 0
        %v464 = vsel %vm438, %v412, 0
        %v467 = vsel %vm438, %v413, 0
        %v470 = vsel %vm438, %v414, 0
        %v473 = vsel %vm438, %v415, 0
        %v476 = vsel %vm438, %v416, 0
        %v479 = vsel %vm438, %v417, 0
        %v482 = vsel %vm438, %v418, 0
        %v485 = vsel %vm438, %v419, 0
        %487 = vmatprep.subr.bf16.mxu0 0
        %488 = vmatpush1.bf16.msra.mxu0 %v432
        %489 = vmatprep.subr.bf16.mxu0 0
        %490 = vmatpush1.bf16.msra.mxu0 %v433
        %491 = vmatprep.subr.bf16.mxu0 0
        %492 = vmatpush1.bf16.msra.mxu0 %v434
        %493 = vmatprep.subr.bf16.mxu0 0
        %494 = vmatpush1.bf16.msra.mxu0 0
        %495 = vmatprep.subr.bf16.mxu0 0
        %496 = vmatpush1.bf16.msra.mxu0 0
        %497 = vmatprep.subr.bf16.mxu0 0
        %498 = vmatpush1.bf16.msra.mxu0 0
        %499 = vmatprep.subr.bf16.mxu0 0
        %500 = vmatpush1.bf16.msra.mxu0 0
        %501 = vmatprep.subr.bf16.mxu0 0
        %502 = vmatpush1.bf16.msra.mxu0 0
        %503 = vmatprep.subr.bf16.mxu0 0
        %504 = vmatpush1.bf16.msra.mxu0 0
        %505 = vmatprep.subr.bf16.mxu0 0
        %506 = vmatpush1.bf16.msra.mxu0 0
        %507 = vmatprep.subr.bf16.mxu0 0
        %508 = vmatpush1.bf16.msra.mxu0 0
        %509 = vmatprep.subr.bf16.mxu0 0
        %510 = vmatpush1.bf16.msra.mxu0 0
        %511 = vmatprep.subr.bf16.mxu0 0
        %512 = vmatpush1.bf16.msra.mxu0 0
        %513 = vmatprep.subr.bf16.mxu0 0
        %514 = vmatpush1.bf16.msra.mxu0 0
        %515 = vmatprep.subr.bf16.mxu0 0
        %516 = vmatpush1.bf16.msra.mxu0 0
        %517 = vmatprep.subr.bf16.mxu0 0
        %518 = vmatpush1.bf16.msra.mxu0 0
        %519 = vmatprep.mubr.bf16.mxu0 0
        %520 = vmatmul.mubr.bf16.gmra.mrb[0].mxu0 %v440
        %v521 = vpop.f32.mrb[0].mxu0
        %v522 = vadd.f32 0.0, %v521
        %v523 = vpop.f32.mrb[0].mxu0
        %v524 = vpop.f32.mrb[0].mxu0
        %v525 = vadd.f32 0.0, %v524
        %v526 = vpop.f32.mrb[0].mxu0
        %527 = vmatprep.mubr.bf16.mxu0 0
        %528 = vmatmul.mubr.bf16.gmra.mrb[0].mxu0 %v443
        %v529 = vpop.f32.mrb[0].mxu0
        %v530 = vadd.f32 0.0, %v529
        %v531 = vpop.f32.mrb[0].mxu0
        %v532 = vpop.f32.mrb[0].mxu0
        %v533 = vadd.f32 0.0, %v532
        %v534 = vpop.f32.mrb[0].mxu0
        %535 = vmatprep.mubr.bf16.mxu0 0
        %536 = vmatmul.mubr.bf16.gmra.mrb[0].mxu0 %v446
        %v537 = vpop.f32.mrb[0].mxu0
        %v538 = vadd.f32 0.0, %v537
        %v539 = vpop.f32.mrb[0].mxu0
        %v540 = vpop.f32.mrb[0].mxu0
        %v541 = vadd.f32 0.0, %v540
        %v542 = vpop.f32.mrb[0].mxu0
        %543 = vmatprep.mubr.bf16.mxu0 0
        %544 = vmatmul.mubr.bf16.gmra.mrb[0].mxu0 %v449
        %v545 = vpop.f32.mrb[0].mxu0
        %v546 = vadd.f32 0.0, %v545
        %v547 = vpop.f32.mrb[0].mxu0
        %v548 = vpop.f32.mrb[0].mxu0
        %v549 = vadd.f32 0.0, %v548
        %v550 = vpop.f32.mrb[0].mxu0
        %551 = vmatprep.mubr.bf16.mxu0 0
        %552 = vmatmul.mubr.bf16.gmra.mrb[0].mxu0 %v452
        %v553 = vpop.f32.mrb[0].mxu0
        %v554 = vadd.f32 0.0, %v553
        %v555 = vpop.f32.mrb[0].mxu0
        %v556 = vpop.f32.mrb[0].mxu0
        %v557 = vadd.f32 0.0, %v556
        %v558 = vpop.f32.mrb[0].mxu0
        %559 = vmatprep.mubr.bf16.mxu0 0
        %560 = vmatmul.mubr.bf16.gmra.mrb[0].mxu0 %v455
        %v561 = vpop.f32.mrb[0].mxu0
        %v562 = vadd.f32 0.0, %v561
        %v563 = vpop.f32.mrb[0].mxu0
        %v564 = vpop.f32.mrb[0].mxu0
        %v565 = vadd.f32 0.0, %v564
        %v566 = vpop.f32.mrb[0].mxu0
        %567 = vmatprep.mubr.bf16.mxu0 0
        %568 = vmatmul.mubr.bf16.gmra.mrb[0].mxu0 %v458
        %v569 = vpop.f32.mrb[0].mxu0
        %v570 = vadd.f32 0.0, %v569
        %v571 = vpop.f32.mrb[0].mxu0
        %v572 = vpop.f32.mrb[0].mxu0
        %v573 = vadd.f32 0.0, %v572
        %v574 = vpop.f32.mrb[0].mxu0
        %575 = vmatprep.mubr.bf16.mxu0 0
        %576 = vmatmul.mubr.bf16.gmra.mrb[0].mxu0 %v461
        %v577 = vpop.f32.mrb[0].mxu0
        %v578 = vadd.f32 0.0, %v577
        %v579 = vpop.f32.mrb[0].mxu0
        %v580 = vpop.f32.mrb[0].mxu0
        %v581 = vadd.f32 0.0, %v580
        %v582 = vpop.f32.mrb[0].mxu0
        %583 = vmatprep.mubr.bf16.mxu0 0
        %584 = vmatmul.mubr.bf16.gmra.mrb[0].mxu0 %v464
        %v585 = vpop.f32.mrb[0].mxu0
        %v586 = vadd.f32 0.0, %v585
        %v587 = vpop.f32.mrb[0].mxu0
        %v588 = vpop.f32.mrb[0].mxu0
        %v589 = vadd.f32 0.0, %v588
        %v590 = vpop.f32.mrb[0].mxu0
        %591 = vmatprep.mubr.bf16.mxu0 0
        %592 = vmatmul.mubr.bf16.gmra.mrb[0].mxu0 %v467
        %v593 = vpop.f32.mrb[0].mxu0
        %v594 = vadd.f32 0.0, %v593
        %v595 = vpop.f32.mrb[0].mxu0
        %v596 = vpop.f32.mrb[0].mxu0
        %v597 = vadd.f32 0.0, %v596
        %v598 = vpop.f32.mrb[0].mxu0
        %599 = vmatprep.mubr.bf16.mxu0 0
        %600 = vmatmul.mubr.bf16.gmra.mrb[0].mxu0 %v470
        %v601 = vpop.f32.mrb[0].mxu0
        %v602 = vadd.f32 0.0, %v601
        %v603 = vpop.f32.mrb[0].mxu0
        %v604 = vpop.f32.mrb[0].mxu0
        %v605 = vadd.f32 0.0, %v604
        %v606 = vpop.f32.mrb[0].mxu0
        %607 = vmatprep.mubr.bf16.mxu0 0
        %608 = vmatmul.mubr.bf16.gmra.mrb[0].mxu0 %v473
        %v609 = vpop.f32.mrb[0].mxu0
        %v610 = vadd.f32 0.0, %v609
        %v611 = vpop.f32.mrb[0].mxu0
        %v612 = vpop.f32.mrb[0].mxu0
        %v613 = vadd.f32 0.0, %v612
        %v614 = vpop.f32.mrb[0].mxu0
        %615 = vmatprep.mubr.bf16.mxu0 0
        %616 = vmatmul.mubr.bf16.gmra.mrb[0].mxu0 %v476
        %v617 = vpop.f32.mrb[0].mxu0
        %v618 = vadd.f32 0.0, %v617
        %v619 = vpop.f32.mrb[0].mxu0
        %v620 = vpop.f32.mrb[0].mxu0
        %v621 = vadd.f32 0.0, %v620
        %v622 = vpop.f32.mrb[0].mxu0
        %623 = vmatprep.mubr.bf16.mxu0 0
        %624 = vmatmul.mubr.bf16.gmra.mrb[0].mxu0 %v479
        %v625 = vpop.f32.mrb[0].mxu0
        %v626 = vadd.f32 0.0, %v625
        %v627 = vpop.f32.mrb[0].mxu0
        %v628 = vpop.f32.mrb[0].mxu0
        %v629 = vadd.f32 0.0, %v628
        %v630 = vpop.f32.mrb[0].mxu0
        %631 = vmatprep.mubr.bf16.mxu0 0
        %632 = vmatmul.mubr.bf16.gmra.mrb[0].mxu0 %v482
        %v633 = vpop.f32.mrb[0].mxu0
        %v634 = vadd.f32 0.0, %v633
        %v635 = vpop.f32.mrb[0].mxu0
        %v636 = vpop.f32.mrb[0].mxu0
        %v637 = vadd.f32 0.0, %v636
        %v638 = vpop.f32.mrb[0].mxu0
        %639 = vmatprep.mubr.bf16.mxu0 0
        %640 = vmatmul.mubr.bf16.gmra.mrb[0].mxu0 %v485
        %v641 = vpop.f32.mrb[0].mxu0
        %v642 = vadd.f32 0.0, %v641
        %v643 = vpop.f32.mrb[0].mxu0
        %v644 = vpop.f32.mrb[0].mxu0
        %v645 = vadd.f32 0.0, %v644
        %v646 = vpop.f32.mrb[0].mxu0
        %647 = vdwg.mxu0
        %v648 = vadd.f32 %v270, %v522
        %v649 = vadd.f32 %v271, %v525
        %v650 = vadd.f32 %v272, %v530
        %v651 = vadd.f32 %v273, %v533
        %v652 = vadd.f32 %v274, %v538
        %v653 = vadd.f32 %v275, %v541
        %v654 = vadd.f32 %v276, %v546
        %v655 = vadd.f32 %v277, %v549
        %v656 = vadd.f32 %v278, %v554
        %v657 = vadd.f32 %v279, %v557
        %v658 = vadd.f32 %v280, %v562
        %v659 = vadd.f32 %v281, %v565
        %v660 = vadd.f32 %v282, %v570
        %v661 = vadd.f32 %v283, %v573
        %v662 = vadd.f32 %v284, %v578
        %v663 = vadd.f32 %v285, %v581
        %v664 = vadd.f32 %v286, %v586
        %v665 = vadd.f32 %v287, %v589
        %v666 = vadd.f32 %v288, %v594
        %v667 = vadd.f32 %v289, %v597
        %v668 = vadd.f32 %v290, %v602
        %v669 = vadd.f32 %v291, %v605
        %v670 = vadd.f32 %v292, %v610
        %v671 = vadd.f32 %v293, %v613
        %v672 = vadd.f32 %v294, %v618
        %v673 = vadd.f32 %v295, %v621
        %v674 = vadd.f32 %v296, %v626
        %v675 = vadd.f32 %v297, %v629
        %v676 = vadd.f32 %v298, %v634
        %v677 = vadd.f32 %v299, %v637
        %v678 = vadd.f32 %v300, %v642
        %v679 = vadd.f32 %v301, %v645
        %vm680 = vcmask 523264
        %681 = vst.msk [vmem:[#allocation2] sm:$0xff] %vm680, %v648
        %682 = vst.msk [vmem:[#allocation2 + $0x8] sm:$0xff] %vm680, %v649
        %683 = vst.msk [vmem:[#allocation2 + $0x10] sm:$0xff] %vm680, %v650
        %684 = vst.msk [vmem:[#allocation2 + $0x18] sm:$0xff] %vm680, %v651
        %685 = vst.msk [vmem:[#allocation2 + $0x20] sm:$0xff] %vm680, %v652
        %686 = vst.msk [vmem:[#allocation2 + $0x28] sm:$0xff] %vm680, %v653
        %687 = vst.msk [vmem:[#allocation2 + $0x30] sm:$0xff] %vm680, %v654
        %688 = vst.msk [vmem:[#allocation2 + $0x38] sm:$0xff] %vm680, %v655
        %689 = vst.msk [vmem:[#allocation2 + $0x40] sm:$0xff] %vm680, %v656
        %690 = vst.msk [vmem:[#allocation2 + $0x48] sm:$0xff] %vm680, %v657
        %691 = vst.msk [vmem:[#allocation2 + $0x50] sm:$0xff] %vm680, %v658
        %692 = vst.msk [vmem:[#allocation2 + $0x58] sm:$0xff] %vm680, %v659
        %693 = vst.msk [vmem:[#allocation2 + $0x60] sm:$0xff] %vm680, %v660
        %694 = vst.msk [vmem:[#allocation2 + $0x68] sm:$0xff] %vm680, %v661
        %695 = vst.msk [vmem:[#allocation2 + $0x70] sm:$0xff] %vm680, %v662
        %696 = vst.msk [vmem:[#allocation2 + $0x78] sm:$0xff] %vm680, %v663
        %697 = vst.msk [vmem:[#allocation2 + $0x80] sm:$0xff] %vm680, %v664
        %698 = vst.msk [vmem:[#allocation2 + $0x88] sm:$0xff] %vm680, %v665
        %699 = vst.msk [vmem:[#allocation2 + $0x90] sm:$0xff] %vm680, %v666
        %700 = vst.msk [vmem:[#allocation2 + $0x98] sm:$0xff] %vm680, %v667
        %701 = vst.msk [vmem:[#allocation2 + $0xa0] sm:$0xff] %vm680, %v668
        %702 = vst.msk [vmem:[#allocation2 + $0xa8] sm:$0xff] %vm680, %v669
        %703 = vst.msk [vmem:[#allocation2 + $0xb0] sm:$0xff] %vm680, %v670
        %704 = vst.msk [vmem:[#allocation2 + $0xb8] sm:$0xff] %vm680, %v671
        %705 = vst.msk [vmem:[#allocation2 + $0xc0] sm:$0xff] %vm680, %v672
        %706 = vst.msk [vmem:[#allocation2 + $0xc8] sm:$0xff] %vm680, %v673
        %707 = vst.msk [vmem:[#allocation2 + $0xd0] sm:$0xff] %vm680, %v674
        %708 = vst.msk [vmem:[#allocation2 + $0xd8] sm:$0xff] %vm680, %v675
        %709 = vst.msk [vmem:[#allocation2 + $0xe0] sm:$0xff] %vm680, %v676
        %710 = vst.msk [vmem:[#allocation2 + $0xe8] sm:$0xff] %vm680, %v677
        %711 = vst.msk [vmem:[#allocation2 + $0xf0] sm:$0xff] %vm680, %v678
        %712 = vst.msk [vmem:[#allocation2 + $0xf8] sm:$0xff] %vm680, %v679
        // Predicated region
        $region41: #{discriminator_forward.5} parent=31 // pred_check
          %p713 = pneg %p233
        $region42: #{discriminator_forward.5} parent=31 // pred_check_branch
          %715 = sbr.rel (%p713) target = $region44
        $region43: #{discriminator_forward.5} parent=31 // pred_region
          %v716 = vld [vmem:[#allocation2] sm:$0xff]
          %v717 = vld [vmem:[#allocation2 + $0x8] sm:$0xff]
          %v718 = vld [vmem:[#allocation2 + $0x10] sm:$0xff]
          %v719 = vld [vmem:[#allocation2 + $0x18] sm:$0xff]
          %v720 = vld [vmem:[#allocation2 + $0x20] sm:$0xff]
          %v721 = vld [vmem:[#allocation2 + $0x28] sm:$0xff]
          %v722 = vld [vmem:[#allocation2 + $0x30] sm:$0xff]
          %v723 = vld [vmem:[#allocation2 + $0x38] sm:$0xff]
          %v724 = vld [vmem:[#allocation2 + $0x40] sm:$0xff]
          %v725 = vld [vmem:[#allocation2 + $0x48] sm:$0xff]
          %v726 = vld [vmem:[#allocation2 + $0x50] sm:$0xff]
          %v727 = vld [vmem:[#allocation2 + $0x58] sm:$0xff]
          %v728 = vld [vmem:[#allocation2 + $0x60] sm:$0xff]
          %v729 = vld [vmem:[#allocation2 + $0x68] sm:$0xff]
          %v730 = vld [vmem:[#allocation2 + $0x70] sm:$0xff]
          %v731 = vld [vmem:[#allocation2 + $0x78] sm:$0xff]
          %v732 = vld [vmem:[#allocation2 + $0x80] sm:$0xff]
          %v733 = vld [vmem:[#allocation2 + $0x88] sm:$0xff]
          %v734 = vld [vmem:[#allocation2 + $0x90] sm:$0xff]
          %v735 = vld [vmem:[#allocation2 + $0x98] sm:$0xff]
          %v736 = vld [vmem:[#allocation2 + $0xa0] sm:$0xff]
          %v737 = vld [vmem:[#allocation2 + $0xa8] sm:$0xff]
          %v738 = vld [vmem:[#allocation2 + $0xb0] sm:$0xff]
          %v739 = vld [vmem:[#allocation2 + $0xb8] sm:$0xff]
          %v740 = vld [vmem:[#allocation2 + $0xc0] sm:$0xff]
          %v741 = vld [vmem:[#allocation2 + $0xc8] sm:$0xff]
          %v742 = vld [vmem:[#allocation2 + $0xd0] sm:$0xff]
          %v743 = vld [vmem:[#allocation2 + $0xd8] sm:$0xff]
          %v744 = vld [vmem:[#allocation2 + $0xe0] sm:$0xff]
          %v745 = vld [vmem:[#allocation2 + $0xe8] sm:$0xff]
          %v746 = vld [vmem:[#allocation2 + $0xf0] sm:$0xff]
          %v747 = vld [vmem:[#allocation2 + $0xf8] sm:$0xff]
          %v748 = vld [vmem:[#allocation3] sm:$0x1]
          %v750 = vlaneseq
          %v751 = vshrl.u32 %v750, 7
          %v752 = vsub.s32 0, %v751
          %v753 = vrot.slane %v748, %v752
          %v755 = vadd.f32 %v716, %v753
          %v756 = vadd.f32 %v717, %v753
          %v757 = vadd.f32 %v718, %v753
          %v758 = vadd.f32 %v719, %v753
          %v759 = vadd.f32 %v720, %v753
          %v760 = vadd.f32 %v721, %v753
          %v761 = vadd.f32 %v722, %v753
          %v762 = vadd.f32 %v723, %v753
          %v763 = vadd.f32 %v724, %v753
          %v764 = vadd.f32 %v725, %v753
          %v765 = vadd.f32 %v726, %v753
          %v766 = vadd.f32 %v727, %v753
          %v767 = vadd.f32 %v728, %v753
          %v768 = vadd.f32 %v729, %v753
          %v769 = vadd.f32 %v730, %v753
          %v770 = vadd.f32 %v731, %v753
          %v771 = vadd.f32 %v732, %v753
          %v772 = vadd.f32 %v733, %v753
          %v773 = vadd.f32 %v734, %v753
          %v774 = vadd.f32 %v735, %v753
          %v775 = vadd.f32 %v736, %v753
          %v776 = vadd.f32 %v737, %v753
          %v777 = vadd.f32 %v738, %v753
          %v778 = vadd.f32 %v739, %v753
          %v779 = vadd.f32 %v740, %v753
          %v780 = vadd.f32 %v741, %v753
          %v781 = vadd.f32 %v742, %v753
          %v782 = vadd.f32 %v743, %v753
          %v783 = vadd.f32 %v744, %v753
          %v784 = vadd.f32 %v745, %v753
          %v785 = vadd.f32 %v746, %v753
          %v786 = vadd.f32 %v747, %v753
          %vm787 = vcmp.gt.f32.partialorder %v755, 0.0
          %vm788 = vcmp.gt.f32.partialorder %v756, 0.0
          %vm789 = vcmp.gt.f32.partialorder %v757, 0.0
          %vm790 = vcmp.gt.f32.partialorder %v758, 0.0
          %vm791 = vcmp.gt.f32.partialorder %v759, 0.0
          %vm792 = vcmp.gt.f32.partialorder %v760, 0.0
          %vm793 = vcmp.gt.f32.partialorder %v761, 0.0
          %vm794 = vcmp.gt.f32.partialorder %v762, 0.0
          %vm795 = vcmp.gt.f32.partialorder %v763, 0.0
          %vm796 = vcmp.gt.f32.partialorder %v764, 0.0
          %vm797 = vcmp.gt.f32.partialorder %v765, 0.0
          %vm798 = vcmp.gt.f32.partialorder %v766, 0.0
          %vm799 = vcmp.gt.f32.partialorder %v767, 0.0
          %vm800 = vcmp.gt.f32.partialorder %v768, 0.0
          %vm801 = vcmp.gt.f32.partialorder %v769, 0.0
          %vm802 = vcmp.gt.f32.partialorder %v770, 0.0
          %vm803 = vcmp.gt.f32.partialorder %v771, 0.0
          %vm804 = vcmp.gt.f32.partialorder %v772, 0.0
          %vm805 = vcmp.gt.f32.partialorder %v773, 0.0
          %vm806 = vcmp.gt.f32.partialorder %v774, 0.0
          %vm807 = vcmp.gt.f32.partialorder %v775, 0.0
          %vm808 = vcmp.gt.f32.partialorder %v776, 0.0
          %vm809 = vcmp.gt.f32.partialorder %v777, 0.0
          %vm810 = vcmp.gt.f32.partialorder %v778, 0.0
          %vm811 = vcmp.gt.f32.partialorder %v779, 0.0
          %vm812 = vcmp.gt.f32.partialorder %v780, 0.0
          %vm813 = vcmp.gt.f32.partialorder %v781, 0.0
          %vm814 = vcmp.gt.f32.partialorder %v782, 0.0
          %vm815 = vcmp.gt.f32.partialorder %v783, 0.0
          %vm816 = vcmp.gt.f32.partialorder %v784, 0.0
          %vm817 = vcmp.gt.f32.partialorder %v785, 0.0
          %vm818 = vcmp.gt.f32.partialorder %v786, 0.0
          %v819 = vmul.f32 %v755, 0.2
          %v820 = vmul.f32 %v756, 0.2
          %v821 = vmul.f32 %v757, 0.2
          %v822 = vmul.f32 %v758, 0.2
          %v823 = vmul.f32 %v759, 0.2
          %v824 = vmul.f32 %v760, 0.2
          %v825 = vmul.f32 %v761, 0.2
          %v826 = vmul.f32 %v762, 0.2
          %v827 = vmul.f32 %v763, 0.2
          %v828 = vmul.f32 %v764, 0.2
          %v829 = vmul.f32 %v765, 0.2
          %v830 = vmul.f32 %v766, 0.2
          %v831 = vmul.f32 %v767, 0.2
          %v832 = vmul.f32 %v768, 0.2
          %v833 = vmul.f32 %v769, 0.2
          %v834 = vmul.f32 %v770, 0.2
          %v835 = vmul.f32 %v771, 0.2
          %v836 = vmul.f32 %v772, 0.2
          %v837 = vmul.f32 %v773, 0.2
          %v838 = vmul.f32 %v774, 0.2
          %v839 = vmul.f32 %v775, 0.2
          %v840 = vmul.f32 %v776, 0.2
          %v841 = vmul.f32 %v777, 0.2
          %v842 = vmul.f32 %v778, 0.2
          %v843 = vmul.f32 %v779, 0.2
          %v844 = vmul.f32 %v780, 0.2
          %v845 = vmul.f32 %v781, 0.2
          %v846 = vmul.f32 %v782, 0.2
          %v847 = vmul.f32 %v783, 0.2
          %v848 = vmul.f32 %v784, 0.2
          %v849 = vmul.f32 %v785, 0.2
          %v850 = vmul.f32 %v786, 0.2
          %v851 = vsel %vm787, %v755, %v819
          %v852 = vsel %vm788, %v756, %v820
          %v853 = vsel %vm789, %v757, %v821
          %v854 = vsel %vm790, %v758, %v822
          %v855 = vsel %vm791, %v759, %v823
          %v856 = vsel %vm792, %v760, %v824
          %v857 = vsel %vm793, %v761, %v825
          %v858 = vsel %vm794, %v762, %v826
          %v859 = vsel %vm795, %v763, %v827
          %v860 = vsel %vm796, %v764, %v828
          %v861 = vsel %vm797, %v765, %v829
          %v862 = vsel %vm798, %v766, %v830
          %v863 = vsel %vm799, %v767, %v831
          %v864 = vsel %vm800, %v768, %v832
          %v865 = vsel %vm801, %v769, %v833
          %v866 = vsel %vm802, %v770, %v834
          %v867 = vsel %vm803, %v771, %v835
          %v868 = vsel %vm804, %v772, %v836
          %v869 = vsel %vm805, %v773, %v837
          %v870 = vsel %vm806, %v774, %v838
          %v871 = vsel %vm807, %v775, %v839
          %v872 = vsel %vm808, %v776, %v840
          %v873 = vsel %vm809, %v777, %v841
          %v874 = vsel %vm810, %v778, %v842
          %v875 = vsel %vm811, %v779, %v843
          %v876 = vsel %vm812, %v780, %v844
          %v877 = vsel %vm813, %v781, %v845
          %v878 = vsel %vm814, %v782, %v846
          %v879 = vsel %vm815, %v783, %v847
          %v880 = vsel %vm816, %v784, %v848
          %v881 = vsel %vm817, %v785, %v849
          %v882 = vsel %vm818, %v786, %v850
          %v883 = vpack.c.bf16 %v852, %v851
          %v884 = vpack.c.bf16 %v854, %v853
          %v885 = vpack.c.bf16 %v856, %v855
          %v886 = vpack.c.bf16 %v858, %v857
          %v887 = vpack.c.bf16 %v860, %v859
          %v888 = vpack.c.bf16 %v862, %v861
          %v889 = vpack.c.bf16 %v864, %v863
          %v890 = vpack.c.bf16 %v866, %v865
          %v891 = vpack.c.bf16 %v868, %v867
          %v892 = vpack.c.bf16 %v870, %v869
          %v893 = vpack.c.bf16 %v872, %v871
          %v894 = vpack.c.bf16 %v874, %v873
          %v895 = vpack.c.bf16 %v876, %v875
          %v896 = vpack.c.bf16 %v878, %v877
          %v897 = vpack.c.bf16 %v880, %v879
          %v898 = vpack.c.bf16 %v882, %v881
          %v915 = vunpack.c.l.b16 %v883
          %v916 = vunpack.c.h.b16 %v883
          %v917 = vunpack.c.l.b16 %v884
          %v918 = vunpack.c.h.b16 %v884
          %v919 = vunpack.c.l.b16 %v885
          %v920 = vunpack.c.h.b16 %v885
          %v921 = vunpack.c.l.b16 %v886
          %v922 = vunpack.c.h.b16 %v886
          %v923 = vunpack.c.l.b16 %v887
          %v924 = vunpack.c.h.b16 %v887
          %v925 = vunpack.c.l.b16 %v888
          %v926 = vunpack.c.h.b16 %v888
          %v927 = vunpack.c.l.b16 %v889
          %v928 = vunpack.c.h.b16 %v889
          %v929 = vunpack.c.l.b16 %v890
          %v930 = vunpack.c.h.b16 %v890
          %v931 = vunpack.c.l.b16 %v891
          %v932 = vunpack.c.h.b16 %v891
          %v933 = vunpack.c.l.b16 %v892
          %v934 = vunpack.c.h.b16 %v892
          %v935 = vunpack.c.l.b16 %v893
          %v936 = vunpack.c.h.b16 %v893
          %v937 = vunpack.c.l.b16 %v894
          %v938 = vunpack.c.h.b16 %v894
          %v939 = vunpack.c.l.b16 %v895
          %v940 = vunpack.c.h.b16 %v895
          %v941 = vunpack.c.l.b16 %v896
          %v942 = vunpack.c.h.b16 %v896
          %v943 = vunpack.c.l.b16 %v897
          %v944 = vunpack.c.h.b16 %v897
          %v945 = vunpack.c.l.b16 %v898
          %v946 = vunpack.c.h.b16 %v898
          %v947 = vpack.c.b16 %v915, %v915
          %v948 = vpack.c.b16 %v916, %v916
          %v949 = vpack.c.b16 %v917, %v917
          %v950 = vpack.c.b16 %v918, %v918
          %v951 = vpack.c.b16 %v919, %v919
          %v952 = vpack.c.b16 %v920, %v920
          %v953 = vpack.c.b16 %v921, %v921
          %v954 = vpack.c.b16 %v922, %v922
          %v955 = vpack.c.b16 %v923, %v923
          %v956 = vpack.c.b16 %v924, %v924
          %v957 = vpack.c.b16 %v925, %v925
          %v958 = vpack.c.b16 %v926, %v926
          %v959 = vpack.c.b16 %v927, %v927
          %v960 = vpack.c.b16 %v928, %v928
          %v961 = vpack.c.b16 %v929, %v929
          %v962 = vpack.c.b16 %v930, %v930
          %v963 = vpack.c.b16 %v931, %v931
          %v964 = vpack.c.b16 %v932, %v932
          %v965 = vpack.c.b16 %v933, %v933
          %v966 = vpack.c.b16 %v934, %v934
          %v967 = vpack.c.b16 %v935, %v935
          %v968 = vpack.c.b16 %v936, %v936
          %v969 = vpack.c.b16 %v937, %v937
          %v970 = vpack.c.b16 %v938, %v938
          %v971 = vpack.c.b16 %v939, %v939
          %v972 = vpack.c.b16 %v940, %v940
          %v973 = vpack.c.b16 %v941, %v941
          %v974 = vpack.c.b16 %v942, %v942
          %v975 = vpack.c.b16 %v943, %v943
          %v976 = vpack.c.b16 %v944, %v944
          %v977 = vpack.c.b16 %v945, %v945
          %v978 = vpack.c.b16 %v946, %v946
          %vm1011 = vcmask 519168
          %1012 = vst.msk [vmem:[%s230] sm:$0xf] %vm1011, %v947
          %1013 = vst.msk [vmem:[%s230 + $0x4] sm:$0xf] %vm1011, %v948
          %1014 = vst.msk [vmem:[%s230 + $0x8] sm:$0xf] %vm1011, %v949
          %1015 = vst.msk [vmem:[%s230 + $0xc] sm:$0xf] %vm1011, %v950
          %1016 = vst.msk [vmem:[%s230 + $0x10] sm:$0xf] %vm1011, %v951
          %1017 = vst.msk [vmem:[%s230 + $0x14] sm:$0xf] %vm1011, %v952
          %1018 = vst.msk [vmem:[%s230 + $0x18] sm:$0xf] %vm1011, %v953
          %1019 = vst.msk [vmem:[%s230 + $0x1c] sm:$0xf] %vm1011, %v954
          %1020 = vst.msk [vmem:[%s230 + $0x20] sm:$0xf] %vm1011, %v955
          %1021 = vst.msk [vmem:[%s230 + $0x24] sm:$0xf] %vm1011, %v956
          %1022 = vst.msk [vmem:[%s230 + $0x28] sm:$0xf] %vm1011, %v957
          %1023 = vst.msk [vmem:[%s230 + $0x2c] sm:$0xf] %vm1011, %v958
          %1024 = vst.msk [vmem:[%s230 + $0x30] sm:$0xf] %vm1011, %v959
          %1025 = vst.msk [vmem:[%s230 + $0x34] sm:$0xf] %vm1011, %v960
          %1026 = vst.msk [vmem:[%s230 + $0x38] sm:$0xf] %vm1011, %v961
          %1027 = vst.msk [vmem:[%s230 + $0x3c] sm:$0xf] %vm1011, %v962
          %1028 = vst.msk [vmem:[%s230 + $0x40] sm:$0xf] %vm1011, %v963
          %1029 = vst.msk [vmem:[%s230 + $0x44] sm:$0xf] %vm1011, %v964
          %1030 = vst.msk [vmem:[%s230 + $0x48] sm:$0xf] %vm1011, %v965
          %1031 = vst.msk [vmem:[%s230 + $0x4c] sm:$0xf] %vm1011, %v966
          %1032 = vst.msk [vmem:[%s230 + $0x50] sm:$0xf] %vm1011, %v967
          %1033 = vst.msk [vmem:[%s230 + $0x54] sm:$0xf] %vm1011, %v968
          %1034 = vst.msk [vmem:[%s230 + $0x58] sm:$0xf] %vm1011, %v969
          %1035 = vst.msk [vmem:[%s230 + $0x5c] sm:$0xf] %vm1011, %v970
          %1036 = vst.msk [vmem:[%s230 + $0x60] sm:$0xf] %vm1011, %v971
          %1037 = vst.msk [vmem:[%s230 + $0x64] sm:$0xf] %vm1011, %v972
          %1038 = vst.msk [vmem:[%s230 + $0x68] sm:$0xf] %vm1011, %v973
          %1039 = vst.msk [vmem:[%s230 + $0x6c] sm:$0xf] %vm1011, %v974
          %1040 = vst.msk [vmem:[%s230 + $0x70] sm:$0xf] %vm1011, %v975
          %1041 = vst.msk [vmem:[%s230 + $0x74] sm:$0xf] %vm1011, %v976
          %1042 = vst.msk [vmem:[%s230 + $0x78] sm:$0xf] %vm1011, %v977
          %1043 = vst.msk [vmem:[%s230 + $0x7c] sm:$0xf] %vm1011, %v978
        $region44: #{discriminator_forward.5} parent=31 // pred_fallthru
          _
        %s1044 = smul.u32 32, %s19
        %p1045 = scmp.lt.s32.totalorder %s1044, 63
        %s1046 = scalar_select %p1045, %s1044, 63
        %s1047 = smul.addr %s1046, 4
        %s1048 = scalar_lea.vmem %s3, %s1047
        // Predicated region
        $region45: #{discriminator_forward.5} parent=31 // pred_check
          %p1049 = pneg %p120
        $region46: #{discriminator_forward.5} parent=31 // pred_check_branch
          %1051 = sbr.rel (%p1049) target = $region48
        $region47: #{discriminator_forward.5} parent=31 // pred_region
          %s1052 = smul.u32 32, %s19
        $region48: #{discriminator_forward.5} parent=31 // pred_fallthru
          _
      $region32: #{discriminator_forward.5} parent=5 // pred_fallthru
        _
      %p1053 = scmp.le.s32.totalorder 2, %s10
      // Predicated region
      $region49: #{discriminator_forward.5} parent=5 // pred_check
        %p1054 = pneg %p1053
      $region50: #{discriminator_forward.5} parent=5 // pred_check_branch
        %1056 = sbr.rel (%p1054) target = $region52
      $region51: #{discriminator_forward.5} parent=5 // pred_region
        %s1057 = ssub.s32 %s10, 2
        // Predicated region
        $region53: #{discriminator_forward.5} parent=51 // pred_check
          %p1058 = pneg %p126
        $region54: #{discriminator_forward.5} parent=51 // pred_check_branch
          %1060 = sbr.rel (%p1058) target = $region56
        $region55: #{discriminator_forward.5} parent=51 // pred_region
          %s1061 = smul.u32 32, %s21
          %p1062 = scmp.lt.s32.totalorder %s1061, 63
          %s1063 = scalar_select %p1062, %s1061, 63
          %s1064 = smul.addr %s1063, 4
          %s1065 = scalar_lea.vmem %s3, %s1064
        $region56: #{discriminator_forward.5} parent=51 // pred_fallthru
          _
      $region52: #{discriminator_forward.5} parent=5 // pred_fallthru
        _
    $region6: #{discriminator_forward.5} parent=1 // loop_footer
      %s14 = sadd.s32 1, %s10
    $region7: #{discriminator_forward.5} parent=1 // loop_footer_branch
      %9 = sbr.rel target = $region3
    $region8: #{discriminator_forward.5} parent=1 // loop_exit
      _
    %1066 = vsyncpa [#allocation4], 1
    %s1067 = scalar_lea.sflag [#allocation4], 1
    %1068 = vsyncpa %s1067, 1

// kernel: discriminator_forward.6
$region0: #{discriminator_forward.6}
  #allocation0 [shape = 'u32[]', space=smem, size = 0x4, offset = 0x4, fixed_abs, tag = 'smem constant byte address 0x4 - core index']
  #allocation1 [shape = 'u32[144,128]{1,0:T(1,128)}', space=vmem, size = 0x12000, scoped, tag = 'internal scratch']
  #allocation2 [shape = 'f32[64,128]{1,0:T(8,128)}', space=vmem, size = 0x8000, scoped, tag = 'scratch operand']
  %s0 = inlined_call_operand.vmem [shape: bf16[2,64,1024], index: 0, kind: input, shape index: {}]
  %s1 = inlined_call_operand.vmem [shape: bf16[1024,128], index: 1, kind: input, shape index: {}]
  %s2 = inlined_call_operand.vmem [shape: bf16[2,64,128], index: 2, kind: output, shape index: {}]
  %s3 = sld [smem:[#allocation0]]
  $region72: #{discriminator_forward.6} parent=0
    _
  %s5 = ssub.s32 1, %s3
  %s6 = scalar_select 0, %s5, %s3
  $region1: #{discriminator_forward.6} parent=0
    #allocation3 [shape = 'u8[131072]{0}', space=vmem, size = 0x20000, scoped, tag = 'input window, operand 0']
    loop: start=0, step=1, limit=6
    $region2: #{discriminator_forward.6} parent=1 // loop_pre_header
      _
    $region3: #{discriminator_forward.6} parent=1 // loop_header
      %s8 = sphi 0, %s12
      %p9 = scmp.ge.s32.totalorder %s8, 6
      %s15 = sphi 0, %s27
      %s16 = sphi 0, %s23
      %s17 = sphi 0, %s15
      %s18 = sphi 0, %s16
      %s19 = sphi 0, %s17
      %s20 = sphi 0, %s18
      %s32 = sphi 0, %s34
      %s35 = sphi 0, %s32
      %s36 = sphi 0, %s35
      %s52 = sphi 0, %s36
      %s58 = sphi 0, %s60
      %s61 = sphi 0, %s58
      %s62 = sphi 0, %s61
      %s78 = sphi 0, %s62
      %s84 = sphi 0, %s86
      %s87 = sphi 0, %s84
      %s88 = sphi 0, %s87
      %s104 = sphi 0, %s88
    $region4: #{discriminator_forward.6} parent=1 // loop_header_branch
      %11 = sbr.rel (%p9) target = $region8
    $region5: #{discriminator_forward.6} parent=1 // loop_body
      %s13 = ssub.s32 %s8, 1
      %s14 = ssub.s32 %s8, 2
      %s21 = sadd.s32 1, %s16
      %p22 = scmp.ge.s32.totalorder %s21, 2
      %s23 = scalar_select %p22, 0, %s21
      %s24 = sadd.s32 1, %s15
      %s25 = scalar_select %p22, %s24, %s15
      %p26 = scmp.ge.s32.totalorder %s25, 2
      %s27 = scalar_select %p26, 0, %s25
      %s28 = ssub.s32 %s15, %s27
      %s29 = ssub.s32 %s16, %s23
      %s30 = sor.u32 %s28, %s29
      %p31 = scmp.eq.s32.totalorder %s30, 0
      %s33 = sadd.s32 %s32, 1
      %s34 = scalar_select %p31, %s32, %s33
      %p37 = pneg %p31
      %p38 = scmp.eq.s32.totalorder %s8, 3
      %p39 = por %p37, %p38
      %p40 = scmp.ne.s32.totalorder %s32, %s35
      %p41 = scmp.eq.s32.totalorder %s8, 0
      %p42 = por %p40, %p41
      %p43 = scmp.ne.s32.totalorder %s32, %s35
      %p44 = scmp.eq.s32.totalorder %s13, 3
      %p45 = por %p43, %p44
      %p46 = scmp.ne.s32.totalorder %s35, %s36
      %p47 = scmp.eq.s32.totalorder %s13, 0
      %p48 = por %p46, %p47
      %p49 = scmp.ne.s32.totalorder %s35, %s36
      %p50 = scmp.eq.s32.totalorder %s14, 3
      %p51 = por %p49, %p50
      %p53 = scmp.ne.s32.totalorder %s36, %s52
      %p54 = scmp.eq.s32.totalorder %s14, 0
      %p55 = por %p53, %p54
      %s56 = ssub.s32 %s16, %s23
      %p57 = scmp.eq.s32.totalorder %s56, 0
      %s59 = sadd.s32 %s58, 1
      %s60 = scalar_select %p57, %s58, %s59
      %p63 = pneg %p57
      %p64 = scmp.eq.s32.totalorder %s8, 3
      %p65 = por %p63, %p64
      %p66 = scmp.ne.s32.totalorder %s58, %s61
      %p67 = scmp.eq.s32.totalorder %s8, 0
      %p68 = por %p66, %p67
      %p69 = scmp.ne.s32.totalorder %s58, %s61
      %p70 = scmp.eq.s32.totalorder %s13, 3
      %p71 = por %p69, %p70
      %p72 = scmp.ne.s32.totalorder %s61, %s62
      %p73 = scmp.eq.s32.totalorder %s13, 0
      %p74 = por %p72, %p73
      %p75 = scmp.ne.s32.totalorder %s61, %s62
      %p76 = scmp.eq.s32.totalorder %s14, 3
      %p77 = por %p75, %p76
      %p79 = scmp.ne.s32.totalorder %s62, %s78
      %p80 = scmp.eq.s32.totalorder %s14, 0
      %p81 = por %p79, %p80
      %s82 = ssub.s32 %s15, %s27
      %p83 = scmp.eq.s32.totalorder %s82, 0
      %s85 = sadd.s32 %s84, 1
      %s86 = scalar_select %p83, %s84, %s85
      %p89 = pneg %p83
      %p90 = scmp.eq.s32.totalorder %s8, 3
      %p91 = por %p89, %p90
      %p92 = scmp.ne.s32.totalorder %s84, %s87
      %p93 = scmp.eq.s32.totalorder %s8, 0
      %p94 = por %p92, %p93
      %p95 = scmp.ne.s32.totalorder %s84, %s87
      %p96 = scmp.eq.s32.totalorder %s13, 3
      %p97 = por %p95, %p96
      %p98 = scmp.ne.s32.totalorder %s87, %s88
      %p99 = scmp.eq.s32.totalorder %s13, 0
      %p100 = por %p98, %p99
      %p101 = scmp.ne.s32.totalorder %s87, %s88
      %p102 = scmp.eq.s32.totalorder %s14, 3
      %p103 = por %p101, %p102
      %p105 = scmp.ne.s32.totalorder %s88, %s104
      %p106 = scmp.eq.s32.totalorder %s14, 0
      %p107 = por %p105, %p106
      %p108 = scmp.le.s32.totalorder 1, %s8
      %p109 = scmp.lt.s32.totalorder %s8, 5
      %p110 = pnand %p108, %p109
      %p111 = pneg %p110
      // Predicated region
      $region9: #{discriminator_forward.6} parent=5 // pred_check
        _
      $region10: #{discriminator_forward.6} parent=5 // pred_check_branch
        %113 = sbr.rel (%p110) target = $region12
      $region11: #{discriminator_forward.6} parent=5 // pred_region
        %s114 = ssub.s32 %s8, 1
      $region12: #{discriminator_forward.6} parent=5 // pred_fallthru
        _
      %p115 = scmp.lt.s32.totalorder %s8, 4
      // Predicated region
      $region13: #{discriminator_forward.6} parent=5 // pred_check
        %p116 = pneg %p115
      $region14: #{discriminator_forward.6} parent=5 // pred_check_branch
        %118 = sbr.rel (%p116) target = $region16
      $region15: #{discriminator_forward.6} parent=5 // pred_region
        // Predicated region
        $region17: #{discriminator_forward.6} parent=15 // pred_check
          %p119 = pneg %p42
        $region18: #{discriminator_forward.6} parent=15 // pred_check_branch
          %121 = sbr.rel (%p119) target = $region20
        $region19: #{discriminator_forward.6} parent=15 // pred_region
          %s122 = sand.u32 %s32, 1
          %s123 = sand.u32 %s32, 1
          %s124 = smul.addr %s123, 128
          %s125 = scalar_lea.vmem [#allocation3], %s124
          %s126 = smul.u32 4, %s16
          %s127 = smul.addr %s15, 64
          %s128 = sadd.s32 %s126, %s127
          %s129 = smul.addr %s128, 4
          %s130 = scalar_lea.vmem %s0, %s129
          // Predicated region
          $region21: #{discriminator_forward.6} parent=19 // pred_check
            _
          $region22: #{discriminator_forward.6} parent=19 // pred_check_branch
            %132 = sbr.rel (0) target = $region24
          $region23: #{discriminator_forward.6} parent=19 // pred_region
            // Predicated region
            $region25: #{discriminator_forward.6} parent=23 // pred_check
              _
            $region26: #{discriminator_forward.6} parent=23 // pred_check_branch
              %134 = sbr.rel (0) target = $region28
            $region27: #{discriminator_forward.6} parent=23 // pred_region
              loop: start=0, step=1, limit=1
              $region29: #{discriminator_forward.6} parent=27 // loop_pre_header
                _
              $region30: #{discriminator_forward.6} parent=27 // loop_header
                %s136 = sphi 0, %s140
                %p137 = scmp.ge.s32.totalorder %s136, 1
                %s141 = sphi %s130, %s130
                %s142 = sphi %s125, %s125
              $region31: #{discriminator_forward.6} parent=27 // loop_header_branch
                %139 = sbr.rel (%p137) target = $region35
              $region32: #{discriminator_forward.6} parent=27 // loop_body
                %v143 = vld [vmem:[%s141] sm:$0xff]
                %144 = vst [vmem:[%s142] sm:$0xff] %v143
                %v145 = vld [vmem:[%s141 + $0x8] sm:$0xff]
                %146 = vst [vmem:[%s142 + $0x8] sm:$0xff] %v145
                %v147 = vld [vmem:[%s141 + $0x20] sm:$0xff]
                %148 = vst [vmem:[%s142 + $0x10] sm:$0xff] %v147
                %v149 = vld [vmem:[%s141 + $0x28] sm:$0xff]
                %150 = vst [vmem:[%s142 + $0x18] sm:$0xff] %v149
                %v151 = vld [vmem:[%s141 + $0x40] sm:$0xff]
                %152 = vst [vmem:[%s142 + $0x20] sm:$0xff] %v151
                %v153 = vld [vmem:[%s141 + $0x48] sm:$0xff]
                %154 = vst [vmem:[%s142 + $0x28] sm:$0xff] %v153
                %v155 = vld [vmem:[%s141 + $0x60] sm:$0xff]
                %156 = vst [vmem:[%s142 + $0x30] sm:$0xff] %v155
                %v157 = vld [vmem:[%s141 + $0x68] sm:$0xff]
                %158 = vst [vmem:[%s142 + $0x38] sm:$0xff] %v157
                %v159 = vld [vmem:[%s141 + $0x80] sm:$0xff]
                %160 = vst [vmem:[%s142 + $0x40] sm:$0xff] %v159
                %v161 = vld [vmem:[%s141 + $0x88] sm:$0xff]
                %162 = vst [vmem:[%s142 + $0x48] sm:$0xff] %v161
                %v163 = vld [vmem:[%s141 + $0xa0] sm:$0xff]
                %164 = vst [vmem:[%s142 + $0x50] sm:$0xff] %v163
                %v165 = vld [vmem:[%s141 + $0xa8] sm:$0xff]
                %166 = vst [vmem:[%s142 + $0x58] sm:$0xff] %v165
                %v167 = vld [vmem:[%s141 + $0xc0] sm:$0xff]
                %168 = vst [vmem:[%s142 + $0x60] sm:$0xff] %v167
                %v169 = vld [vmem:[%s141 + $0xc8] sm:$0xff]
                %170 = vst [vmem:[%s142 + $0x68] sm:$0xff] %v169
                %v171 = vld [vmem:[%s141 + $0xe0] sm:$0xff]
                %172 = vst [vmem:[%s142 + $0x70] sm:$0xff] %v171
                %v173 = vld [vmem:[%s141 + $0xe8] sm:$0xff]
                %174 = vst [vmem:[%s142 + $0x78] sm:$0xff] %v173
              $region33: #{discriminator_forward.6} parent=27 // loop_footer
                %s140 = sadd.s32 1, %s136
              $region34: #{discriminator_forward.6} parent=27 // loop_footer_branch
                %135 = sbr.rel target = $region30
              $region35: #{discriminator_forward.6} parent=27 // loop_exit
                _
            $region28: #{discriminator_forward.6} parent=23 // pred_fallthru
              _
            // Predicated region
            $region36: #{discriminator_forward.6} parent=23 // pred_check
              _
            $region37: #{discriminator_forward.6} parent=23 // pred_check_branch
              %176 = sbr.rel target = $region39
            $region38: #{discriminator_forward.6} parent=23 // pred_region
              _
            $region39: #{discriminator_forward.6} parent=23 // pred_fallthru
              _
          $region24: #{discriminator_forward.6} parent=19 // pred_fallthru
            _
          %177 = vnop
        $region20: #{discriminator_forward.6} parent=15 // pred_fallthru
          _
        // Predicated region
        $region40: #{discriminator_forward.6} parent=15 // pred_check
          %p178 = pneg %p68
        $region41: #{discriminator_forward.6} parent=15 // pred_check_branch
          %180 = sbr.rel (%p178) target = $region43
        $region42: #{discriminator_forward.6} parent=15 // pred_region
          %s181 = smul.u32 64, %s16
          %p182 = scmp.lt.s32.totalorder %s181, 127
          %s183 = scalar_select %p182, %s181, 127
          %s184 = smul.addr %s183, 4
          %s185 = scalar_lea.vmem %s1, %s184
          %s186 = smul.u32 64, %s16
        $region43: #{discriminator_forward.6} parent=15 // pred_fallthru
          _
      $region16: #{discriminator_forward.6} parent=5 // pred_fallthru
        _
      %p187 = scmp.le.s32.totalorder 1, %s8
      %p188 = scmp.lt.s32.totalorder %s8, 5
      %p189 = pnand %p187, %p188
      %p190 = pneg %p189
      // Predicated region
      $region44: #{discriminator_forward.6} parent=5 // pred_check
        _
      $region45: #{discriminator_forward.6} parent=5 // pred_check_branch
        %192 = sbr.rel (%p189) target = $region47
      $region46: #{discriminator_forward.6} parent=5 // pred_region
        %s193 = ssub.s32 %s8, 1
        %s194 = sand.u32 %s35, 1
        %s195 = sand.u32 %s35, 1
        %s196 = smul.addr %s195, 128
        %s197 = scalar_lea.vmem [#allocation3], %s196
        // Predicated region
        $region48: #{discriminator_forward.6} parent=46 // pred_check
          %p198 = pneg %p48
        $region49: #{discriminator_forward.6} parent=46 // pred_check_branch
          %200 = sbr.rel (%p198) target = $region51
        $region50: #{discriminator_forward.6} parent=46 // pred_region
          _
        $region51: #{discriminator_forward.6} parent=46 // pred_fallthru
          _
        %s201 = sand.u32 %s35, 1
        %s202 = sand.u32 %s35, 1
        %s203 = smul.addr %s202, 128
        %s204 = scalar_lea.vmem [#allocation3], %s203
        %p205 = pneg %p48
        %p206 = pneg %p45
        %s207 = smul.u32 64, %s18
        %p208 = scmp.lt.s32.totalorder %s207, 127
        %s209 = scalar_select %p208, %s207, 127
        %s210 = smul.addr %s209, 4
        %s211 = scalar_lea.vmem %s1, %s210
        %p212 = pneg %p74
        %p213 = pneg %p71
        %p214 = pneg %p100
        %p215 = pneg %p97
        %p216 = scmp.lt.s32.totalorder %s17, 1
        %s217 = scalar_select %p216, %s17, 1
        %s218 = smul.addr %s217, 8
        %s219 = smul.addr %s218, 4
        %s220 = scalar_lea.vmem %s2, %s219
        %s221 = smul.u32 4, %s18
        %s222 = smul.u32 64, %s18
        %p223 = scmp.lt.s32.totalorder %s222, 127
        %s224 = scalar_select %p223, %s222, 127
        %s225 = smul.addr %s224, 4
        %s226 = scalar_lea.vmem %s1, %s225
        %s227 = smul.u32 64, %s18
        %p228 = scmp.lt.s32.totalorder %s17, 1
        %s229 = scalar_select %p228, %s17, 1
        %s230 = smul.addr %s229, 8
        %s231 = smul.addr %s230, 4
        %s232 = scalar_lea.vmem %s2, %s231
        %p234 = scmp.eq.s32.totalorder %s18, 0
        // Predicated region
        $region52: #{discriminator_forward.6} parent=46 // pred_check
          %p235 = pneg %p234
        $region53: #{discriminator_forward.6} parent=46 // pred_check_branch
          %237 = sbr.rel (%p235) target = $region55
        $region54: #{discriminator_forward.6} parent=46 // pred_region
          %238 = vst [vmem:[#allocation2] sm:$0xff] 0.0
          %239 = vst [vmem:[#allocation2 + $0x8] sm:$0xff] 0.0
          %240 = vst [vmem:[#allocation2 + $0x10] sm:$0xff] 0.0
          %241 = vst [vmem:[#allocation2 + $0x18] sm:$0xff] 0.0
          %242 = vst [vmem:[#allocation2 + $0x20] sm:$0xff] 0.0
          %243 = vst [vmem:[#allocation2 + $0x28] sm:$0xff] 0.0
          %244 = vst [vmem:[#allocation2 + $0x30] sm:$0xff] 0.0
          %245 = vst [vmem:[#allocation2 + $0x38] sm:$0xff] 0.0
        $region55: #{discriminator_forward.6} parent=46 // pred_fallthru
          _
        %v246 = vld [vmem:[#allocation2] sm:$0xff]
        %v247 = vld [vmem:[#allocation2 + $0x8] sm:$0xff]
        %v248 = vld [vmem:[#allocation2 + $0x10] sm:$0xff]
        %v249 = vld [vmem:[#allocation2 + $0x18] sm:$0xff]
        %v250 = vld [vmem:[#allocation2 + $0x20] sm:$0xff]
        %v251 = vld [vmem:[#allocation2 + $0x28] sm:$0xff]
        %v252 = vld [vmem:[#allocation2 + $0x30] sm:$0xff]
        %v253 = vld [vmem:[#allocation2 + $0x38] sm:$0xff]
        %v254 = vld [vmem:[%s197] sm:$0xff]
        %v255 = vld [vmem:[%s197 + $0x8] sm:$0xff]
        %v256 = vld [vmem:[%s197 + $0x10] sm:$0xff]
        %v257 = vld [vmem:[%s197 + $0x18] sm:$0xff]
        %v258 = vld [vmem:[%s197 + $0x20] sm:$0xff]
        %v259 = vld [vmem:[%s197 + $0x28] sm:$0xff]
        %v260 = vld [vmem:[%s197 + $0x30] sm:$0xff]
        %v261 = vld [vmem:[%s197 + $0x38] sm:$0xff]
        %v262 = vld [vmem:[%s197 + $0x40] sm:$0xff]
        %v263 = vld [vmem:[%s197 + $0x48] sm:$0xff]
        %v264 = vld [vmem:[%s197 + $0x50] sm:$0xff]
        %v265 = vld [vmem:[%s197 + $0x58] sm:$0xff]
        %v266 = vld [vmem:[%s197 + $0x60] sm:$0xff]
        %v267 = vld [vmem:[%s197 + $0x68] sm:$0xff]
        %v268 = vld [vmem:[%s197 + $0x70] sm:$0xff]
        %v269 = vld [vmem:[%s197 + $0x78] sm:$0xff]
        %v270 = vld [vmem:[%s226] sm:$0xf]
        %v271 = vld [vmem:[%s226 + $0x4] sm:$0xf]
        %v272 = vld [vmem:[%s226 + $0x8] sm:$0xf]
        %v273 = vld [vmem:[%s226 + $0xc] sm:$0xf]
        %v274 = vld [vmem:[%s226 + $0x10] sm:$0xf]
        %v275 = vld [vmem:[%s226 + $0x14] sm:$0xf]
        %v276 = vld [vmem:[%s226 + $0x18] sm:$0xf]
        %v277 = vld [vmem:[%s226 + $0x1c] sm:$0xf]
        %v278 = vld [vmem:[%s226 + $0x20] sm:$0xf]
        %v279 = vld [vmem:[%s226 + $0x24] sm:$0xf]
        %v280 = vld [vmem:[%s226 + $0x28] sm:$0xf]
        %v281 = vld [vmem:[%s226 + $0x2c] sm:$0xf]
        %v282 = vld [vmem:[%s226 + $0x30] sm:$0xf]
        %v283 = vld [vmem:[%s226 + $0x34] sm:$0xf]
        %v284 = vld [vmem:[%s226 + $0x38] sm:$0xf]
        %v285 = vld [vmem:[%s226 + $0x3c] sm:$0xf]
        %v286 = vld [vmem:[%s226 + $0x40] sm:$0xf]
        %v287 = vld [vmem:[%s226 + $0x44] sm:$0xf]
        %v288 = vld [vmem:[%s226 + $0x48] sm:$0xf]
        %v289 = vld [vmem:[%s226 + $0x4c] sm:$0xf]
        %v290 = vld [vmem:[%s226 + $0x50] sm:$0xf]
        %v291 = vld [vmem:[%s226 + $0x54] sm:$0xf]
        %v292 = vld [vmem:[%s226 + $0x58] sm:$0xf]
        %v293 = vld [vmem:[%s226 + $0x5c] sm:$0xf]
        %v294 = vld [vmem:[%s226 + $0x60] sm:$0xf]
        %v295 = vld [vmem:[%s226 + $0x64] sm:$0xf]
        %v296 = vld [vmem:[%s226 + $0x68] sm:$0xf]
        %v297 = vld [vmem:[%s226 + $0x6c] sm:$0xf]
        %v298 = vld [vmem:[%s226 + $0x70] sm:$0xf]
        %v299 = vld [vmem:[%s226 + $0x74] sm:$0xf]
        %v300 = vld [vmem:[%s226 + $0x78] sm:$0xf]
        %v301 = vld [vmem:[%s226 + $0x7c] sm:$0xf]
        %v302 = vld [vmem:[%s226 + $0x80] sm:$0xf]
        %v303 = vld [vmem:[%s226 + $0x84] sm:$0xf]
        %v304 = vld [vmem:[%s226 + $0x88] sm:$0xf]
        %v305 = vld [vmem:[%s226 + $0x8c] sm:$0xf]
        %v306 = vld [vmem:[%s226 + $0x90] sm:$0xf]
        %v307 = vld [vmem:[%s226 + $0x94] sm:$0xf]
        %v308 = vld [vmem:[%s226 + $0x98] sm:$0xf]
        %v309 = vld [vmem:[%s226 + $0x9c] sm:$0xf]
        %v310 = vld [vmem:[%s226 + $0xa0] sm:$0xf]
        %v311 = vld [vmem:[%s226 + $0xa4] sm:$0xf]
        %v312 = vld [vmem:[%s226 + $0xa8] sm:$0xf]
        %v313 = vld [vmem:[%s226 + $0xac] sm:$0xf]
        %v314 = vld [vmem:[%s226 + $0xb0] sm:$0xf]
        %v315 = vld [vmem:[%s226 + $0xb4] sm:$0xf]
        %v316 = vld [vmem:[%s226 + $0xb8] sm:$0xf]
        %v317 = vld [vmem:[%s226 + $0xbc] sm:$0xf]
        %v318 = vld [vmem:[%s226 + $0xc0] sm:$0xf]
        %v319 = vld [vmem:[%s226 + $0xc4] sm:$0xf]
        %v320 = vld [vmem:[%s226 + $0xc8] sm:$0xf]
        %v321 = vld [vmem:[%s226 + $0xcc] sm:$0xf]
        %v322 = vld [vmem:[%s226 + $0xd0] sm:$0xf]
        %v323 = vld [vmem:[%s226 + $0xd4] sm:$0xf]
        %v324 = vld [vmem:[%s226 + $0xd8] sm:$0xf]
        %v325 = vld [vmem:[%s226 + $0xdc] sm:$0xf]
        %v326 = vld [vmem:[%s226 + $0xe0] sm:$0xf]
        %v327 = vld [vmem:[%s226 + $0xe4] sm:$0xf]
        %v328 = vld [vmem:[%s226 + $0xe8] sm:$0xf]
        %v329 = vld [vmem:[%s226 + $0xec] sm:$0xf]
        %v330 = vld [vmem:[%s226 + $0xf0] sm:$0xf]
        %v331 = vld [vmem:[%s226 + $0xf4] sm:$0xf]
        %v332 = vld [vmem:[%s226 + $0xf8] sm:$0xf]
        %v333 = vld [vmem:[%s226 + $0xfc] sm:$0xf]
        %v350 = vunpack.c.l.b16 %v254
        %v351 = vunpack.c.h.b16 %v254
        %v352 = vunpack.c.l.b16 %v255
        %v353 = vunpack.c.h.b16 %v255
        %v354 = vunpack.c.l.b16 %v256
        %v355 = vunpack.c.h.b16 %v256
        %v356 = vunpack.c.l.b16 %v257
        %v357 = vunpack.c.h.b16 %v257
        %v358 = vunpack.c.l.b16 %v258
        %v359 = vunpack.c.h.b16 %v258
        %v360 = vunpack.c.l.b16 %v259
        %v361 = vunpack.c.h.b16 %v259
        %v362 = vunpack.c.l.b16 %v260
        %v363 = vunpack.c.h.b16 %v260
        %v364 = vunpack.c.l.b16 %v261
        %v365 = vunpack.c.h.b16 %v261
        %v366 = vunpack.c.l.b16 %v262
        %v367 = vunpack.c.h.b16 %v262
        %v368 = vunpack.c.l.b16 %v263
        %v369 = vunpack.c.h.b16 %v263
        %v370 = vunpack.c.l.b16 %v264
        %v371 = vunpack.c.h.b16 %v264
        %v372 = vunpack.c.l.b16 %v265
        %v373 = vunpack.c.h.b16 %v265
        %v374 = vunpack.c.l.b16 %v266
        %v375 = vunpack.c.h.b16 %v266
        %v376 = vunpack.c.l.b16 %v267
        %v377 = vunpack.c.h.b16 %v267
        %v378 = vunpack.c.l.b16 %v268
        %v379 = vunpack.c.h.b16 %v268
        %v380 = vunpack.c.l.b16 %v269
        %v381 = vunpack.c.h.b16 %v269
        %v382 = vpack.c.b16 %v354, %v350
        %v383 = vpack.c.b16 %v355, %v351
        %v384 = vpack.c.b16 %v356, %v352
        %v385 = vpack.c.b16 %v357, %v353
        %v386 = vpack.c.b16 %v362, %v358
        %v387 = vpack.c.b16 %v363, %v359
        %v388 = vpack.c.b16 %v364, %v360
        %v389 = vpack.c.b16 %v365, %v361
        %v390 = vpack.c.b16 %v370, %v366
        %v391 = vpack.c.b16 %v371, %v367
        %v392 = vpack.c.b16 %v372, %v368
        %v393 = vpack.c.b16 %v373, %v369
        %v394 = vpack.c.b16 %v378, %v374
        %v395 = vpack.c.b16 %v379, %v375
        %v396 = vpack.c.b16 %v380, %v376
        %v397 = vpack.c.b16 %v381, %v377
        %v478 = vunpack.c.l.b16 %v270
        %v479 = vunpack.c.l.b16 %v271
        %v480 = vunpack.c.l.b16 %v272
        %v481 = vunpack.c.l.b16 %v273
        %v482 = vunpack.c.l.b16 %v274
        %v483 = vunpack.c.l.b16 %v275
        %v484 = vunpack.c.l.b16 %v276
        %v485 = vunpack.c.l.b16 %v277
        %v486 = vunpack.c.l.b16 %v278
        %v487 = vunpack.c.l.b16 %v279
        %v488 = vunpack.c.l.b16 %v280
        %v489 = vunpack.c.l.b16 %v281
        %v490 = vunpack.c.l.b16 %v282
        %v491 = vunpack.c.l.b16 %v283
        %v492 = vunpack.c.l.b16 %v284
        %v493 = vunpack.c.l.b16 %v285
        %v494 = vunpack.c.l.b16 %v286
        %v495 = vunpack.c.l.b16 %v287
        %v496 = vunpack.c.l.b16 %v288
        %v497 = vunpack.c.l.b16 %v289
        %v498 = vunpack.c.l.b16 %v290
        %v499 = vunpack.c.l.b16 %v291
        %v500 = vunpack.c.l.b16 %v292
        %v501 = vunpack.c.l.b16 %v293
        %v502 = vunpack.c.l.b16 %v294
        %v503 = vunpack.c.l.b16 %v295
        %v504 = vunpack.c.l.b16 %v296
        %v505 = vunpack.c.l.b16 %v297
        %v506 = vunpack.c.l.b16 %v298
        %v507 = vunpack.c.l.b16 %v299
        %v508 = vunpack.c.l.b16 %v300
        %v509 = vunpack.c.l.b16 %v301
        %v510 = vunpack.c.l.b16 %v302
        %v511 = vunpack.c.l.b16 %v303
        %v512 = vunpack.c.l.b16 %v304
        %v513 = vunpack.c.l.b16 %v305
        %v514 = vunpack.c.l.b16 %v306
        %v515 = vunpack.c.l.b16 %v307
        %v516 = vunpack.c.l.b16 %v308
        %v517 = vunpack.c.l.b16 %v309
        %v518 = vunpack.c.l.b16 %v310
        %v519 = vunpack.c.l.b16 %v311
        %v520 = vunpack.c.l.b16 %v312
        %v521 = vunpack.c.l.b16 %v313
        %v522 = vunpack.c.l.b16 %v314
        %v523 = vunpack.c.l.b16 %v315
        %v524 = vunpack.c.l.b16 %v316
        %v525 = vunpack.c.l.b16 %v317
        %v526 = vunpack.c.l.b16 %v318
        %v527 = vunpack.c.l.b16 %v319
        %v528 = vunpack.c.l.b16 %v320
        %v529 = vunpack.c.l.b16 %v321
        %v530 = vunpack.c.l.b16 %v322
        %v531 = vunpack.c.l.b16 %v323
        %v532 = vunpack.c.l.b16 %v324
        %v533 = vunpack.c.l.b16 %v325
        %v534 = vunpack.c.l.b16 %v326
        %v535 = vunpack.c.l.b16 %v327
        %v536 = vunpack.c.l.b16 %v328
        %v537 = vunpack.c.l.b16 %v329
        %v538 = vunpack.c.l.b16 %v330
        %v539 = vunpack.c.l.b16 %v331
        %v540 = vunpack.c.l.b16 %v332
        %v541 = vunpack.c.l.b16 %v333
        %v542 = vpack.c.b16 %v479, %v478
        %v543 = vpack.c.b16 %v481, %v480
        %v544 = vpack.c.b16 %v483, %v482
        %v545 = vpack.c.b16 %v485, %v484
        %v546 = vpack.c.b16 %v487, %v486
        %v547 = vpack.c.b16 %v489, %v488
        %v548 = vpack.c.b16 %v491, %v490
        %v549 = vpack.c.b16 %v493, %v492
        %v550 = vpack.c.b16 %v495, %v494
        %v551 = vpack.c.b16 %v497, %v496
        %v552 = vpack.c.b16 %v499, %v498
        %v553 = vpack.c.b16 %v501, %v500
        %v554 = vpack.c.b16 %v503, %v502
        %v555 = vpack.c.b16 %v505, %v504
        %v556 = vpack.c.b16 %v507, %v506
        %v557 = vpack.c.b16 %v509, %v508
        %v558 = vpack.c.b16 %v511, %v510
        %v559 = vpack.c.b16 %v513, %v512
        %v560 = vpack.c.b16 %v515, %v514
        %v561 = vpack.c.b16 %v517, %v516
        %v562 = vpack.c.b16 %v519, %v518
        %v563 = vpack.c.b16 %v521, %v520
        %v564 = vpack.c.b16 %v523, %v522
        %v565 = vpack.c.b16 %v525, %v524
        %v566 = vpack.c.b16 %v527, %v526
        %v567 = vpack.c.b16 %v529, %v528
        %v568 = vpack.c.b16 %v531, %v530
        %v569 = vpack.c.b16 %v533, %v532
        %v570 = vpack.c.b16 %v535, %v534
        %v571 = vpack.c.b16 %v537, %v536
        %v572 = vpack.c.b16 %v539, %v538
        %v573 = vpack.c.b16 %v541, %v540
        %606 = vmatprep.subr.bf16.mxu0 0
        %607 = vmatpush1.bf16.msra.mxu0 %v542
        %608 = vmatprep.subr.bf16.mxu0 0
        %609 = vmatpush1.bf16.msra.mxu0 %v543
        %610 = vmatprep.subr.bf16.mxu0 0
        %611 = vmatpush1.bf16.msra.mxu0 %v544
        %612 = vmatprep.subr.bf16.mxu0 0
        %613 = vmatpush1.bf16.msra.mxu0 %v545
        %614 = vmatprep.subr.bf16.mxu0 0
        %615 = vmatpush1.bf16.msra.mxu0 %v546
        %616 = vmatprep.subr.bf16.mxu0 0
        %617 = vmatpush1.bf16.msra.mxu0 %v547
        %618 = vmatprep.subr.bf16.mxu0 0
        %619 = vmatpush1.bf16.msra.mxu0 %v548
        %620 = vmatprep.subr.bf16.mxu0 0
        %621 = vmatpush1.bf16.msra.mxu0 %v549
        %622 = vmatprep.subr.bf16.mxu0 0
        %623 = vmatpush1.bf16.msra.mxu0 %v550
        %624 = vmatprep.subr.bf16.mxu0 0
        %625 = vmatpush1.bf16.msra.mxu0 %v551
        %626 = vmatprep.subr.bf16.mxu0 0
        %627 = vmatpush1.bf16.msra.mxu0 %v552
        %628 = vmatprep.subr.bf16.mxu0 0
        %629 = vmatpush1.bf16.msra.mxu0 %v553
        %630 = vmatprep.subr.bf16.mxu0 0
        %631 = vmatpush1.bf16.msra.mxu0 %v554
        %632 = vmatprep.subr.bf16.mxu0 0
        %633 = vmatpush1.bf16.msra.mxu0 %v555
        %634 = vmatprep.subr.bf16.mxu0 0
        %635 = vmatpush1.bf16.msra.mxu0 %v556
        %636 = vmatprep.subr.bf16.mxu0 0
        %637 = vmatpush1.bf16.msra.mxu0 %v557
        %638 = vmatprep.mubr.bf16.mxu0 %v383
        %639 = vmatmul.mubr.bf16.gmra.mrb[0].mxu0 %v382
        %v640 = vpop.f32.mrb[0].mxu0
        %v641 = vadd.f32 0.0, %v640
        %v642 = vpop.f32.mrb[0].mxu0
        %v643 = vpop.f32.mrb[0].mxu0
        %v644 = vadd.f32 0.0, %v643
        %v645 = vpop.f32.mrb[0].mxu0
        %646 = vmatprep.mubr.bf16.mxu0 %v387
        %647 = vmatmul.mubr.bf16.gmra.mrb[0].mxu0 %v386
        %v648 = vpop.f32.mrb[0].mxu0
        %v649 = vadd.f32 0.0, %v648
        %v650 = vpop.f32.mrb[0].mxu0
        %v651 = vpop.f32.mrb[0].mxu0
        %v652 = vadd.f32 0.0, %v651
        %v653 = vpop.f32.mrb[0].mxu0
        %654 = vmatprep.mubr.bf16.mxu0 %v391
        %655 = vmatmul.mubr.bf16.gmra.mrb[0].mxu0 %v390
        %v656 = vpop.f32.mrb[0].mxu0
        %v657 = vadd.f32 0.0, %v656
        %v658 = vpop.f32.mrb[0].mxu0
        %v659 = vpop.f32.mrb[0].mxu0
        %v660 = vadd.f32 0.0, %v659
        %v661 = vpop.f32.mrb[0].mxu0
        %662 = vmatprep.mubr.bf16.mxu0 %v395
        %663 = vmatmul.mubr.bf16.gmra.mrb[0].mxu0 %v394
        %v664 = vpop.f32.mrb[0].mxu0
        %v665 = vadd.f32 0.0, %v664
        %v666 = vpop.f32.mrb[0].mxu0
        %v667 = vpop.f32.mrb[0].mxu0
        %v668 = vadd.f32 0.0, %v667
        %v669 = vpop.f32.mrb[0].mxu0
        %670 = vdwg.mxu0
        %671 = vmatprep.subr.bf16.mxu0 0
        %672 = vmatpush1.bf16.msra.mxu0 %v558
        %673 = vmatprep.subr.bf16.mxu0 0
        %674 = vmatpush1.bf16.msra.mxu0 %v559
        %675 = vmatprep.subr.bf16.mxu0 0
        %676 = vmatpush1.bf16.msra.mxu0 %v560
        %677 = vmatprep.subr.bf16.mxu0 0
        %678 = vmatpush1.bf16.msra.mxu0 %v561
        %679 = vmatprep.subr.bf16.mxu0 0
        %680 = vmatpush1.bf16.msra.mxu0 %v562
        %681 = vmatprep.subr.bf16.mxu0 0
        %682 = vmatpush1.bf16.msra.mxu0 %v563
        %683 = vmatprep.subr.bf16.mxu0 0
        %684 = vmatpush1.bf16.msra.mxu0 %v564
        %685 = vmatprep.subr.bf16.mxu0 0
        %686 = vmatpush1.bf16.msra.mxu0 %v565
        %687 = vmatprep.subr.bf16.mxu0 0
        %688 = vmatpush1.bf16.msra.mxu0 %v566
        %689 = vmatprep.subr.bf16.mxu0 0
        %690 = vmatpush1.bf16.msra.mxu0 %v567
        %691 = vmatprep.subr.bf16.mxu0 0
        %692 = vmatpush1.bf16.msra.mxu0 %v568
        %693 = vmatprep.subr.bf16.mxu0 0
        %694 = vmatpush1.bf16.msra.mxu0 %v569
        %695 = vmatprep.subr.bf16.mxu0 0
        %696 = vmatpush1.bf16.msra.mxu0 %v570
        %697 = vmatprep.subr.bf16.mxu0 0
        %698 = vmatpush1.bf16.msra.mxu0 %v571
        %699 = vmatprep.subr.bf16.mxu0 0
        %700 = vmatpush1.bf16.msra.mxu0 %v572
        %701 = vmatprep.subr.bf16.mxu0 0
        %702 = vmatpush1.bf16.msra.mxu0 %v573
        %703 = vmatprep.mubr.bf16.mxu0 %v385
        %704 = vmatmul.mubr.bf16.gmra.mrb[0].mxu0 %v384
        %v705 = vpop.f32.mrb[0].mxu0
        %v706 = vadd.f32 %v641, %v705
        %v707 = vpop.f32.mrb[0].mxu0
        %v708 = vpop.f32.mrb[0].mxu0
        %v709 = vadd.f32 %v644, %v708
        %v710 = vpop.f32.mrb[0].mxu0
        %711 = vmatprep.mubr.bf16.mxu0 %v389
        %712 = vmatmul.mubr.bf16.gmra.mrb[0].mxu0 %v388
        %v713 = vpop.f32.mrb[0].mxu0
        %v714 = vadd.f32 %v649, %v713
        %v715 = vpop.f32.mrb[0].mxu0
        %v716 = vpop.f32.mrb[0].mxu0
        %v717 = vadd.f32 %v652, %v716
        %v718 = vpop.f32.mrb[0].mxu0
        %719 = vmatprep.mubr.bf16.mxu0 %v393
        %720 = vmatmul.mubr.bf16.gmra.mrb[0].mxu0 %v392
        %v721 = vpop.f32.mrb[0].mxu0
        %v722 = vadd.f32 %v657, %v721
        %v723 = vpop.f32.mrb[0].mxu0
        %v724 = vpop.f32.mrb[0].mxu0
        %v725 = vadd.f32 %v660, %v724
        %v726 = vpop.f32.mrb[0].mxu0
        %727 = vmatprep.mubr.bf16.mxu0 %v397
        %728 = vmatmul.mubr.bf16.gmra.mrb[0].mxu0 %v396
        %v729 = vpop.f32.mrb[0].mxu0
        %v730 = vadd.f32 %v665, %v729
        %v731 = vpop.f32.mrb[0].mxu0
        %v732 = vpop.f32.mrb[0].mxu0
        %v733 = vadd.f32 %v668, %v732
        %v734 = vpop.f32.mrb[0].mxu0
        %735 = vdwg.mxu0
        %v736 = vadd.f32 %v246, %v706
        %v737 = vadd.f32 %v247, %v709
        %v738 = vadd.f32 %v248, %v714
        %v739 = vadd.f32 %v249, %v717
        %v740 = vadd.f32 %v250, %v722
        %v741 = vadd.f32 %v251, %v725
        %v742 = vadd.f32 %v252, %v730
        %v743 = vadd.f32 %v253, %v733
        %744 = vst [vmem:[#allocation2] sm:$0xff] %v736
        %745 = vst [vmem:[#allocation2 + $0x8] sm:$0xff] %v737
        %746 = vst [vmem:[#allocation2 + $0x10] sm:$0xff] %v738
        %747 = vst [vmem:[#allocation2 + $0x18] sm:$0xff] %v739
        %748 = vst [vmem:[#allocation2 + $0x20] sm:$0xff] %v740
        %749 = vst [vmem:[#allocation2 + $0x28] sm:$0xff] %v741
        %750 = vst [vmem:[#allocation2 + $0x30] sm:$0xff] %v742
        %751 = vst [vmem:[#allocation2 + $0x38] sm:$0xff] %v743
        %p752 = scmp.eq.s32.totalorder %s18, 1
        // Predicated region
        $region56: #{discriminator_forward.6} parent=46 // pred_check
          %p753 = pneg %p752
        $region57: #{discriminator_forward.6} parent=46 // pred_check_branch
          %755 = sbr.rel (%p753) target = $region59
        $region58: #{discriminator_forward.6} parent=46 // pred_region
          %v756 = vld [vmem:[#allocation2] sm:$0xff]
          %v757 = vld [vmem:[#allocation2 + $0x8] sm:$0xff]
          %v758 = vld [vmem:[#allocation2 + $0x10] sm:$0xff]
          %v759 = vld [vmem:[#allocation2 + $0x18] sm:$0xff]
          %v760 = vld [vmem:[#allocation2 + $0x20] sm:$0xff]
          %v761 = vld [vmem:[#allocation2 + $0x28] sm:$0xff]
          %v762 = vld [vmem:[#allocation2 + $0x30] sm:$0xff]
          %v763 = vld [vmem:[#allocation2 + $0x38] sm:$0xff]
          %v764 = vadd.f32 %v756, %v757
          %v765 = vadd.f32 %v764, %v758
          %v766 = vadd.f32 %v765, %v759
          %v767 = vadd.f32 %v766, %v760
          %v768 = vadd.f32 %v767, %v761
          %v769 = vadd.f32 %v768, %v762
          %v770 = vadd.f32 %v769, %v763
          %v771 = vrot.slane %v770, 4
          %v772 = vadd.f32 %v770, %v771
          %v773 = vrot.slane %v772, 2
          %v774 = vadd.f32 %v772, %v773
          %v775 = vrot.slane %v774, 1
          %v776 = vadd.f32 %v774, %v775
          %v777 = vmul.f32 %v776, 0.015625
          %v778 = vsub.f32 %v756, %v777
          %v779 = vsub.f32 %v757, %v777
          %v780 = vsub.f32 %v758, %v777
          %v781 = vsub.f32 %v759, %v777
          %v782 = vsub.f32 %v760, %v777
          %v783 = vsub.f32 %v761, %v777
          %v784 = vsub.f32 %v762, %v777
          %v785 = vsub.f32 %v763, %v777
          %v786 = vmul.f32 %v778, %v778
          %v787 = vmul.f32 %v779, %v779
          %v788 = vmul.f32 %v780, %v780
          %v789 = vmul.f32 %v781, %v781
          %v790 = vmul.f32 %v782, %v782
          %v791 = vmul.f32 %v783, %v783
          %v792 = vmul.f32 %v784, %v784
          %v793 = vmul.f32 %v785, %v785
          %v794 = vadd.f32 %v786, %v787
          %v795 = vadd.f32 %v794, %v788
          %v796 = vadd.f32 %v795, %v789
          %v797 = vadd.f32 %v796, %v790
          %v798 = vadd.f32 %v797, %v791
          %v799 = vadd.f32 %v798, %v792
          %v800 = vadd.f32 %v799, %v793
          %v801 = vrot.slane %v800, 4
          %v802 = vadd.f32 %v800, %v801
          %v803 = vrot.slane %v802, 2
          %v804 = vadd.f32 %v802, %v803
          %v805 = vrot.slane %v804, 1
          %v806 = vadd.f32 %v804, %v805
          %v807 = vmul.f32 %v806, 0.015625
          %v808 = vadd.f32 %v807, 1e-05
          %v809 = vrsqrt.pop %v808
          %v810 = vmul.f32 %v778, %v809
          %v811 = vmul.f32 %v779, %v809
          %v812 = vmul.f32 %v780, %v809
          %v813 = vmul.f32 %v781, %v809
          %v814 = vmul.f32 %v782, %v809
          %v815 = vmul.f32 %v783, %v809
          %v816 = vmul.f32 %v784, %v809
          %v817 = vmul.f32 %v785, %v809
          %vm818 = vcmp.gt.f32.partialorder %v810, 0.0
          %vm819 = vcmp.gt.f32.partialorder %v811, 0.0
          %vm820 = vcmp.gt.f32.partialorder %v812, 0.0
          %vm821 = vcmp.gt.f32.partialorder %v813, 0.0
          %vm822 = vcmp.gt.f32.partialorder %v814, 0.0
          %vm823 = vcmp.gt.f32.partialorder %v815, 0.0
          %vm824 = vcmp.gt.f32.partialorder %v816, 0.0
          %vm825 = vcmp.gt.f32.partialorder %v817, 0.0
          %v826 = vmul.f32 %v810, 0.2
          %v827 = vmul.f32 %v811, 0.2
          %v828 = vmul.f32 %v812, 0.2
          %v829 = vmul.f32 %v813, 0.2
          %v830 = vmul.f32 %v814, 0.2
          %v831 = vmul.f32 %v815, 0.2
          %v832 = vmul.f32 %v816, 0.2
          %v833 = vmul.f32 %v817, 0.2
          %v834 = vsel %vm818, %v810, %v826
          %v835 = vsel %vm819, %v811, %v827
          %v836 = vsel %vm820, %v812, %v828
          %v837 = vsel %vm821, %v813, %v829
          %v838 = vsel %vm822, %v814, %v830
          %v839 = vsel %vm823, %v815, %v831
          %v840 = vsel %vm824, %v816, %v832
          %v841 = vsel %vm825, %v817, %v833
          %v842 = vpack.c.bf16 %v835, %v834
          %v843 = vpack.c.bf16 %v837, %v836
          %v844 = vpack.c.bf16 %v839, %v838
          %v845 = vpack.c.bf16 %v841, %v840
          %v850 = vunpack.c.l.b16 %v842
          %v851 = vunpack.c.h.b16 %v842
          %v852 = vunpack.c.l.b16 %v843
          %v853 = vunpack.c.h.b16 %v843
          %v854 = vunpack.c.l.b16 %v844
          %v855 = vunpack.c.h.b16 %v844
          %v856 = vunpack.c.l.b16 %v845
          %v857 = vunpack.c.h.b16 %v845
          %v858 = vpack.c.b16 %v850, %v850
          %v859 = vpack.c.b16 %v851, %v851
          %v860 = vpack.c.b16 %v852, %v852
          %v861 = vpack.c.b16 %v853, %v853
          %v862 = vpack.c.b16 %v854, %v854
          %v863 = vpack.c.b16 %v855, %v855
          %v864 = vpack.c.b16 %v856, %v856
          %v865 = vpack.c.b16 %v857, %v857
          %874 = vst [vmem:[%s232] sm:$0xf] %v858
          %875 = vst [vmem:[%s232 + $0x4] sm:$0xf] %v859
          %876 = vst [vmem:[%s232 + $0x8] sm:$0xf] %v860
          %877 = vst [vmem:[%s232 + $0xc] sm:$0xf] %v861
          %878 = vst [vmem:[%s232 + $0x10] sm:$0xf] %v862
          %879 = vst [vmem:[%s232 + $0x14] sm:$0xf] %v863
          %880 = vst [vmem:[%s232 + $0x18] sm:$0xf] %v864
          %881 = vst [vmem:[%s232 + $0x1c] sm:$0xf] %v865
        $region59: #{discriminator_forward.6} parent=46 // pred_fallthru
          _
        %p882 = scmp.lt.s32.totalorder %s17, 1
        %s883 = scalar_select %p882, %s17, 1
        %s884 = smul.addr %s883, 8
        %s885 = smul.addr %s884, 4
        %s886 = scalar_lea.vmem %s2, %s885
        // Predicated region
        $region60: #{discriminator_forward.6} parent=46 // pred_check
          %p887 = pneg %p97
        $region61: #{discriminator_forward.6} parent=46 // pred_check_branch
          %889 = sbr.rel (%p887) target = $region63
        $region62: #{discriminator_forward.6} parent=46 // pred_region
          _
        $region63: #{discriminator_forward.6} parent=46 // pred_fallthru
          _
      $region47: #{discriminator_forward.6} parent=5 // pred_fallthru
        _
      %p890 = scmp.le.s32.totalorder 2, %s8
      // Predicated region
      $region64: #{discriminator_forward.6} parent=5 // pred_check
        %p891 = pneg %p890
      $region65: #{discriminator_forward.6} parent=5 // pred_check_branch
        %893 = sbr.rel (%p891) target = $region67
      $region66: #{discriminator_forward.6} parent=5 // pred_region
        %s894 = ssub.s32 %s8, 2
        // Predicated region
        $region68: #{discriminator_forward.6} parent=66 // pred_check
          %p895 = pneg %p103
        $region69: #{discriminator_forward.6} parent=66 // pred_check_branch
          %897 = sbr.rel (%p895) target = $region71
        $region70: #{discriminator_forward.6} parent=66 // pred_region
          %p898 = scmp.lt.s32.totalorder %s19, 1
          %s899 = scalar_select %p898, %s19, 1
          %s900 = smul.addr %s899, 8
          %s901 = smul.addr %s900, 4
          %s902 = scalar_lea.vmem %s2, %s901
        $region71: #{discriminator_forward.6} parent=66 // pred_fallthru
          _
      $region67: #{discriminator_forward.6} parent=5 // pred_fallthru
        _
    $region6: #{discriminator_forward.6} parent=1 // loop_footer
      %s12 = sadd.s32 1, %s8
    $region7: #{discriminator_forward.6} parent=1 // loop_footer_branch
      %7 = sbr.rel target = $region3
    $region8: #{discriminator_forward.6} parent=1 // loop_exit
      _

// kernel: discriminator_forward.7
$region0: #{discriminator_forward.7}
  #allocation0 [shape = 'u32[]', space=smem, size = 0x4, offset = 0x4, fixed_abs, tag = 'smem constant byte address 0x4 - core index']
  #allocation1 [shape = 'u32[144,128]{1,0:T(1,128)}', space=vmem, size = 0x12000, scoped, tag = 'internal scratch']
  #allocation2 [shape = 'f32[16,256]{1,0:T(8,128)}', space=vmem, size = 0x4000, scoped, tag = 'scratch operand']
  %s0 = inlined_call_operand.vmem [shape: bf16[2,16,2048], index: 0, kind: input, shape index: {}]
  %s1 = inlined_call_operand.vmem [shape: bf16[2048,256], index: 1, kind: input, shape index: {}]
  %s2 = inlined_call_operand.vmem [shape: bf16[2,16,256], index: 2, kind: output, shape index: {}]
  %s3 = sld [smem:[#allocation0]]
  $region72: #{discriminator_forward.7} parent=0
    _
  %s5 = ssub.s32 1, %s3
  %s6 = scalar_select 0, %s5, %s3
  $region1: #{discriminator_forward.7} parent=0
    #allocation3 [shape = 'u8[32768]{0}', space=vmem, size = 0x8000, scoped, tag = 'input window, operand 0']
    loop: start=0, step=1, limit=10
    $region2: #{discriminator_forward.7} parent=1 // loop_pre_header
      _
    $region3: #{discriminator_forward.7} parent=1 // loop_header
      %s8 = sphi 0, %s12
      %p9 = scmp.ge.s32.totalorder %s8, 10
      %s15 = sphi 0, %s27
      %s16 = sphi 0, %s23
      %s17 = sphi 0, %s15
      %s18 = sphi 0, %s16
      %s19 = sphi 0, %s17
      %s20 = sphi 0, %s18
      %s32 = sphi 0, %s34
      %s35 = sphi 0, %s32
      %s36 = sphi 0, %s35
      %s52 = sphi 0, %s36
      %s58 = sphi 0, %s60
      %s61 = sphi 0, %s58
      %s62 = sphi 0, %s61
      %s78 = sphi 0, %s62
      %s84 = sphi 0, %s86
      %s87 = sphi 0, %s84
      %s88 = sphi 0, %s87
      %s104 = sphi 0, %s88
    $region4: #{discriminator_forward.7} parent=1 // loop_header_branch
      %11 = sbr.rel (%p9) target = $region8
    $region5: #{discriminator_forward.7} parent=1 // loop_body
      %s13 = ssub.s32 %s8, 1
      %s14 = ssub.s32 %s8, 2
      %s21 = sadd.s32 1, %s16
      %p22 = scmp.ge.s32.totalorder %s21, 4
      %s23 = scalar_select %p22, 0, %s21
      %s24 = sadd.s32 1, %s15
      %s25 = scalar_select %p22, %s24, %s15
      %p26 = scmp.ge.s32.totalorder %s25, 2
      %s27 = scalar_select %p26, 0, %s25
      %s28 = ssub.s32 %s15, %s27
      %s29 = ssub.s32 %s16, %s23
      %s30 = sor.u32 %s28, %s29
      %p31 = scmp.eq.s32.totalorder %s30, 0
      %s33 = sadd.s32 %s32, 1
      %s34 = scalar_select %p31, %s32, %s33
      %p37 = pneg %p31
      %p38 = scmp.eq.s32.totalorder %s8, 7
      %p39 = por %p37, %p38
      %p40 = scmp.ne.s32.totalorder %s32, %s35
      %p41 = scmp.eq.s32.totalorder %s8, 0
      %p42 = por %p40, %p41
      %p43 = scmp.ne.s32.totalorder %s32, %s35
      %p44 = scmp.eq.s32.totalorder %s13, 7
      %p45 = por %p43, %p44
      %p46 = scmp.ne.s32.totalorder %s35, %s36
      %p47 = scmp.eq.s32.totalorder %s13, 0
      %p48 = por %p46, %p47
      %p49 = scmp.ne.s32.totalorder %s35, %s36
      %p50 = scmp.eq.s32.totalorder %s14, 7
      %p51 = por %p49, %p50
      %p53 = scmp.ne.s32.totalorder %s36, %s52
      %p54 = scmp.eq.s32.totalorder %s14, 0
      %p55 = por %p53, %p54
      %s56 = ssub.s32 %s16, %s23
      %p57 = scmp.eq.s32.totalorder %s56, 0
      %s59 = sadd.s32 %s58, 1
      %s60 = scalar_select %p57, %s58, %s59
      %p63 = pneg %p57
      %p64 = scmp.eq.s32.totalorder %s8, 7
      %p65 = por %p63, %p64
      %p66 = scmp.ne.s32.totalorder %s58, %s61
      %p67 = scmp.eq.s32.totalorder %s8, 0
      %p68 = por %p66, %p67
      %p69 = scmp.ne.s32.totalorder %s58, %s61
      %p70 = scmp.eq.s32.totalorder %s13, 7
      %p71 = por %p69, %p70
      %p72 = scmp.ne.s32.totalorder %s61, %s62
      %p73 = scmp.eq.s32.totalorder %s13, 0
      %p74 = por %p72, %p73
      %p75 = scmp.ne.s32.totalorder %s61, %s62
      %p76 = scmp.eq.s32.totalorder %s14, 7
      %p77 = por %p75, %p76
      %p79 = scmp.ne.s32.totalorder %s62, %s78
      %p80 = scmp.eq.s32.totalorder %s14, 0
      %p81 = por %p79, %p80
      %s82 = ssub.s32 %s15, %s27
      %p83 = scmp.eq.s32.totalorder %s82, 0
      %s85 = sadd.s32 %s84, 1
      %s86 = scalar_select %p83, %s84, %s85
      %p89 = pneg %p83
      %p90 = scmp.eq.s32.totalorder %s8, 7
      %p91 = por %p89, %p90
      %p92 = scmp.ne.s32.totalorder %s84, %s87
      %p93 = scmp.eq.s32.totalorder %s8, 0
      %p94 = por %p92, %p93
      %p95 = scmp.ne.s32.totalorder %s84, %s87
      %p96 = scmp.eq.s32.totalorder %s13, 7
      %p97 = por %p95, %p96
      %p98 = scmp.ne.s32.totalorder %s87, %s88
      %p99 = scmp.eq.s32.totalorder %s13, 0
      %p100 = por %p98, %p99
      %p101 = scmp.ne.s32.totalorder %s87, %s88
      %p102 = scmp.eq.s32.totalorder %s14, 7
      %p103 = por %p101, %p102
      %p105 = scmp.ne.s32.totalorder %s88, %s104
      %p106 = scmp.eq.s32.totalorder %s14, 0
      %p107 = por %p105, %p106
      %p108 = scmp.le.s32.totalorder 1, %s8
      %p109 = scmp.lt.s32.totalorder %s8, 9
      %p110 = pnand %p108, %p109
      %p111 = pneg %p110
      // Predicated region
      $region9: #{discriminator_forward.7} parent=5 // pred_check
        _
      $region10: #{discriminator_forward.7} parent=5 // pred_check_branch
        %113 = sbr.rel (%p110) target = $region12
      $region11: #{discriminator_forward.7} parent=5 // pred_region
        %s114 = ssub.s32 %s8, 1
      $region12: #{discriminator_forward.7} parent=5 // pred_fallthru
        _
      %p115 = scmp.lt.s32.totalorder %s8, 8
      // Predicated region
      $region13: #{discriminator_forward.7} parent=5 // pred_check
        %p116 = pneg %p115
      $region14: #{discriminator_forward.7} parent=5 // pred_check_branch
        %118 = sbr.rel (%p116) target = $region16
      $region15: #{discriminator_forward.7} parent=5 // pred_region
        // Predicated region
        $region17: #{discriminator_forward.7} parent=15 // pred_check
          %p119 = pneg %p42
        $region18: #{discriminator_forward.7} parent=15 // pred_check_branch
          %121 = sbr.rel (%p119) target = $region20
        $region19: #{discriminator_forward.7} parent=15 // pred_region
          %s122 = sand.u32 %s32, 1
          %s123 = sand.u32 %s32, 1
          %s124 = smul.addr %s123, 32
          %s125 = scalar_lea.vmem [#allocation3], %s124
          %s126 = smul.u32 4, %s16
          %s127 = smul.addr %s15, 32
          %s128 = sadd.s32 %s126, %s127
          %s129 = smul.addr %s128, 4
          %s130 = scalar_lea.vmem %s0, %s129
          // Predicated region
          $region21: #{discriminator_forward.7} parent=19 // pred_check
            _
          $region22: #{discriminator_forward.7} parent=19 // pred_check_branch
            %132 = sbr.rel (0) target = $region24
          $region23: #{discriminator_forward.7} parent=19 // pred_region
            // Predicated region
            $region25: #{discriminator_forward.7} parent=23 // pred_check
              _
            $region26: #{discriminator_forward.7} parent=23 // pred_check_branch
              %134 = sbr.rel (0) target = $region28
            $region27: #{discriminator_forward.7} parent=23 // pred_region
              loop: start=0, step=1, limit=1
              $region29: #{discriminator_forward.7} parent=27 // loop_pre_header
                _
              $region30: #{discriminator_forward.7} parent=27 // loop_header
                %s136 = sphi 0, %s140
                %p137 = scmp.ge.s32.totalorder %s136, 1
                %s141 = sphi %s130, %s130
                %s142 = sphi %s125, %s125
              $region31: #{discriminator_forward.7} parent=27 // loop_header_branch
                %139 = sbr.rel (%p137) target = $region35
              $region32: #{discriminator_forward.7} parent=27 // loop_body
                %v143 = vld [vmem:[%s141] sm:$0xff]
                %144 = vst [vmem:[%s142] sm:$0xff] %v143
                %v145 = vld [vmem:[%s141 + $0x8] sm:$0xff]
                %146 = vst [vmem:[%s142 + $0x8] sm:$0xff] %v145
                %v147 = vld [vmem:[%s141 + $0x40] sm:$0xff]
                %148 = vst [vmem:[%s142 + $0x10] sm:$0xff] %v147
                %v149 = vld [vmem:[%s141 + $0x48] sm:$0xff]
                %150 = vst [vmem:[%s142 + $0x18] sm:$0xff] %v149
              $region33: #{discriminator_forward.7} parent=27 // loop_footer
                %s140 = sadd.s32 1, %s136
              $region34: #{discriminator_forward.7} parent=27 // loop_footer_branch
                %135 = sbr.rel target = $region30
              $region35: #{discriminator_forward.7} parent=27 // loop_exit
                _
            $region28: #{discriminator_forward.7} parent=23 // pred_fallthru
              _
            // Predicated region
            $region36: #{discriminator_forward.7} parent=23 // pred_check
              _
            $region37: #{discriminator_forward.7} parent=23 // pred_check_branch
              %152 = sbr.rel target = $region39
            $region38: #{discriminator_forward.7} parent=23 // pred_region
              _
            $region39: #{discriminator_forward.7} parent=23 // pred_fallthru
              _
          $region24: #{discriminator_forward.7} parent=19 // pred_fallthru
            _
          %153 = vnop
        $region20: #{discriminator_forward.7} parent=15 // pred_fallthru
          _
        // Predicated region
        $region40: #{discriminator_forward.7} parent=15 // pred_check
          %p154 = pneg %p68
        $region41: #{discriminator_forward.7} parent=15 // pred_check_branch
          %156 = sbr.rel (%p154) target = $region43
        $region42: #{discriminator_forward.7} parent=15 // pred_region
          %s157 = smul.u32 64, %s16
          %p158 = scmp.lt.s32.totalorder %s157, 255
          %s159 = scalar_select %p158, %s157, 255
          %s160 = smul.addr %s159, 2
          %s161 = smul.addr %s160, 4
          %s162 = scalar_lea.vmem %s1, %s161
          %s163 = smul.u32 64, %s16
        $region43: #{discriminator_forward.7} parent=15 // pred_fallthru
          _
      $region16: #{discriminator_forward.7} parent=5 // pred_fallthru
        _
      %p164 = scmp.le.s32.totalorder 1, %s8
      %p165 = scmp.lt.s32.totalorder %s8, 9
      %p166 = pnand %p164, %p165
      %p167 = pneg %p166
      // Predicated region
      $region44: #{discriminator_forward.7} parent=5 // pred_check
        _
      $region45: #{discriminator_forward.7} parent=5 // pred_check_branch
        %169 = sbr.rel (%p166) target = $region47
      $region46: #{discriminator_forward.7} parent=5 // pred_region
        %s170 = ssub.s32 %s8, 1
        %s171 = sand.u32 %s35, 1
        %s172 = sand.u32 %s35, 1
        %s173 = smul.addr %s172, 32
        %s174 = scalar_lea.vmem [#allocation3], %s173
        // Predicated region
        $region48: #{discriminator_forward.7} parent=46 // pred_check
          %p175 = pneg %p48
        $region49: #{discriminator_forward.7} parent=46 // pred_check_branch
          %177 = sbr.rel (%p175) target = $region51
        $region50: #{discriminator_forward.7} parent=46 // pred_region
          _
        $region51: #{discriminator_forward.7} parent=46 // pred_fallthru
          _
        %s178 = sand.u32 %s35, 1
        %s179 = sand.u32 %s35, 1
        %s180 = smul.addr %s179, 32
        %s181 = scalar_lea.vmem [#allocation3], %s180
        %p182 = pneg %p48
        %p183 = pneg %p45
        %s184 = smul.u32 64, %s18
        %p185 = scmp.lt.s32.totalorder %s184, 255
        %s186 = scalar_select %p185, %s184, 255
        %s187 = smul.addr %s186, 2
        %s188 = smul.addr %s187, 4
        %s189 = scalar_lea.vmem %s1, %s188
        %p190 = pneg %p74
        %p191 = pneg %p71
        %p192 = pneg %p100
        %p193 = pneg %p97
        %p194 = scmp.lt.s32.totalorder %s17, 1
        %s195 = scalar_select %p194, %s17, 1
        %s196 = smul.addr %s195, 4
        %s197 = smul.addr %s196, 4
        %s198 = scalar_lea.vmem %s2, %s197
        %s199 = smul.u32 4, %s18
        %s200 = smul.u32 64, %s18
        %p201 = scmp.lt.s32.totalorder %s200, 255
        %s202 = scalar_select %p201, %s200, 255
        %s203 = smul.addr %s202, 2
        %s204 = smul.addr %s203, 4
        %s205 = scalar_lea.vmem %s1, %s204
        %s206 = smul.u32 64, %s18
        %p207 = scmp.lt.s32.totalorder %s17, 1
        %s208 = scalar_select %p207, %s17, 1
        %s209 = smul.addr %s208, 4
        %s210 = smul.addr %s209, 4
        %s211 = scalar_lea.vmem %s2, %s210
        %p212 = scmp.eq.s32.totalorder %s18, 0
        // Predicated region
        $region52: #{discriminator_forward.7} parent=46 // pred_check
          %p213 = pneg %p212
        $region53: #{discriminator_forward.7} parent=46 // pred_check_branch
          %215 = sbr.rel (%p213) target = $region55
        $region54: #{discriminator_forward.7} parent=46 // pred_region
          %216 = vst [vmem:[#allocation2] sm:$0xff] 0.0
          %217 = vst [vmem:[#allocation2 + $0x8] sm:$0xff] 0.0
          %218 = vst [vmem:[#allocation2 + $0x10] sm:$0xff] 0.0
          %219 = vst [vmem:[#allocation2 + $0x18] sm:$0xff] 0.0
        $region55: #{discriminator_forward.7} parent=46 // pred_fallthru
          _
        %v220 = vld [vmem:[#allocation2] sm:$0xff]
        %v221 = vld [vmem:[#allocation2 + $0x8] sm:$0xff]
        %v222 = vld [vmem:[#allocation2 + $0x10] sm:$0xff]
        %v223 = vld [vmem:[#allocation2 + $0x18] sm:$0xff]
        %v224 = vld [vmem:[%s174] sm:$0xff]
        %v225 = vld [vmem:[%s174 + $0x8] sm:$0xff]
        %v226 = vld [vmem:[%s174 + $0x10] sm:$0xff]
        %v227 = vld [vmem:[%s174 + $0x18] sm:$0xff]
        %v228 = vld [vmem:[%s205] sm:$0xff]
        %v229 = vld [vmem:[%s205 + $0x8] sm:$0xff]
        %v230 = vld [vmem:[%s205 + $0x10] sm:$0xff]
        %v231 = vld [vmem:[%s205 + $0x18] sm:$0xff]
        %v232 = vld [vmem:[%s205 + $0x20] sm:$0xff]
        %v233 = vld [vmem:[%s205 + $0x28] sm:$0xff]
        %v234 = vld [vmem:[%s205 + $0x30] sm:$0xff]
        %v235 = vld [vmem:[%s205 + $0x38] sm:$0xff]
        %v236 = vld [vmem:[%s205 + $0x40] sm:$0xff]
        %v237 = vld [vmem:[%s205 + $0x48] sm:$0xff]
        %v238 = vld [vmem:[%s205 + $0x50] sm:$0xff]
        %v239 = vld [vmem:[%s205 + $0x58] sm:$0xff]
        %v240 = vld [vmem:[%s205 + $0x60] sm:$0xff]
        %v241 = vld [vmem:[%s205 + $0x68] sm:$0xff]
        %v242 = vld [vmem:[%s205 + $0x70] sm:$0xff]
        %v243 = vld [vmem:[%s205 + $0x78] sm:$0xff]
        %v244 = vld [vmem:[%s205 + $0x80] sm:$0xff]
        %v245 = vld [vmem:[%s205 + $0x88] sm:$0xff]
        %v246 = vld [vmem:[%s205 + $0x90] sm:$0xff]
        %v247 = vld [vmem:[%s205 + $0x98] sm:$0xff]
        %v248 = vld [vmem:[%s205 + $0xa0] sm:$0xff]
        %v249 = vld [vmem:[%s205 + $0xa8] sm:$0xff]
        %v250 = vld [vmem:[%s205 + $0xb0] sm:$0xff]
        %v251 = vld [vmem:[%s205 + $0xb8] sm:$0xff]
        %v252 = vld [vmem:[%s205 + $0xc0] sm:$0xff]
        %v253 = vld [vmem:[%s205 + $0xc8] sm:$0xff]
        %v254 = vld [vmem:[%s205 + $0xd0] sm:$0xff]
        %v255 = vld [vmem:[%s205 + $0xd8] sm:$0xff]
        %v256 = vld [vmem:[%s205 + $0xe0] sm:$0xff]
        %v257 = vld [vmem:[%s205 + $0xe8] sm:$0xff]
        %v258 = vld [vmem:[%s205 + $0xf0] sm:$0xff]
        %v259 = vld [vmem:[%s205 + $0xf8] sm:$0xff]
        %v260 = vld [vmem:[%s205 + $0x100] sm:$0xff]
        %v261 = vld [vmem:[%s205 + $0x108] sm:$0xff]
        %v262 = vld [vmem:[%s205 + $0x110] sm:$0xff]
        %v263 = vld [vmem:[%s205 + $0x118] sm:$0xff]
        %v264 = vld [vmem:[%s205 + $0x120] sm:$0xff]
        %v265 = vld [vmem:[%s205 + $0x128] sm:$0xff]
        %v266 = vld [vmem:[%s205 + $0x130] sm:$0xff]
        %v267 = vld [vmem:[%s205 + $0x138] sm:$0xff]
        %v268 = vld [vmem:[%s205 + $0x140] sm:$0xff]
        %v269 = vld [vmem:[%s205 + $0x148] sm:$0xff]
        %v270 = vld [vmem:[%s205 + $0x150] sm:$0xff]
        %v271 = vld [vmem:[%s205 + $0x158] sm:$0xff]
        %v272 = vld [vmem:[%s205 + $0x160] sm:$0xff]
        %v273 = vld [vmem:[%s205 + $0x168] sm:$0xff]
        %v274 = vld [vmem:[%s205 + $0x170] sm:$0xff]
        %v275 = vld [vmem:[%s205 + $0x178] sm:$0xff]
        %v276 = vld [vmem:[%s205 + $0x180] sm:$0xff]
        %v277 = vld [vmem:[%s205 + $0x188] sm:$0xff]
        %v278 = vld [vmem:[%s205 + $0x190] sm:$0xff]
        %v279 = vld [vmem:[%s205 + $0x198] sm:$0xff]
        %v280 = vld [vmem:[%s205 + $0x1a0] sm:$0xff]
        %v281 = vld [vmem:[%s205 + $0x1a8] sm:$0xff]
        %v282 = vld [vmem:[%s205 + $0x1b0] sm:$0xff]
        %v283 = vld [vmem:[%s205 + $0x1b8] sm:$0xff]
        %v284 = vld [vmem:[%s205 + $0x1c0] sm:$0xff]
        %v285 = vld [vmem:[%s205 + $0x1c8] sm:$0xff]
        %v286 = vld [vmem:[%s205 + $0x1d0] sm:$0xff]
        %v287 = vld [vmem:[%s205 + $0x1d8] sm:$0xff]
        %v288 = vld [vmem:[%s205 + $0x1e0] sm:$0xff]
        %v289 = vld [vmem:[%s205 + $0x1e8] sm:$0xff]
        %v290 = vld [vmem:[%s205 + $0x1f0] sm:$0xff]
        %v291 = vld [vmem:[%s205 + $0x1f8] sm:$0xff]
        %v296 = vunpack.c.l.b16 %v224
        %v297 = vunpack.c.h.b16 %v224
        %v298 = vunpack.c.l.b16 %v225
        %v299 = vunpack.c.h.b16 %v225
        %v300 = vunpack.c.l.b16 %v226
        %v301 = vunpack.c.h.b16 %v226
        %v302 = vunpack.c.l.b16 %v227
        %v303 = vunpack.c.h.b16 %v227
        %v304 = vpack.c.b16 %v300, %v296
        %v305 = vpack.c.b16 %v301, %v297
        %v306 = vpack.c.b16 %v302, %v298
        %v307 = vpack.c.b16 %v303, %v299
        %v376 = vunpack.c.l.b16 %v228
        %v377 = vunpack.c.h.b16 %v228
        %v378 = vunpack.c.l.b16 %v229
        %v379 = vunpack.c.h.b16 %v229
        %v380 = vunpack.c.l.b16 %v230
        %v381 = vunpack.c.h.b16 %v230
        %v382 = vunpack.c.l.b16 %v231
        %v383 = vunpack.c.h.b16 %v231
        %v384 = vunpack.c.l.b16 %v232
        %v385 = vunpack.c.h.b16 %v232
        %v386 = vunpack.c.l.b16 %v233
        %v387 = vunpack.c.h.b16 %v233
        %v388 = vunpack.c.l.b16 %v234
        %v389 = vunpack.c.h.b16 %v234
        %v390 = vunpack.c.l.b16 %v235
        %v391 = vunpack.c.h.b16 %v235
        %v392 = vunpack.c.l.b16 %v236
        %v393 = vunpack.c.h.b16 %v236
        %v394 = vunpack.c.l.b16 %v237
        %v395 = vunpack.c.h.b16 %v237
        %v396 = vunpack.c.l.b16 %v238
        %v397 = vunpack.c.h.b16 %v238
        %v398 = vunpack.c.l.b16 %v239
        %v399 = vunpack.c.h.b16 %v239
        %v400 = vunpack.c.l.b16 %v240
        %v401 = vunpack.c.h.b16 %v240
        %v402 = vunpack.c.l.b16 %v241
        %v403 = vunpack.c.h.b16 %v241
        %v404 = vunpack.c.l.b16 %v242
        %v405 = vunpack.c.h.b16 %v242
        %v406 = vunpack.c.l.b16 %v243
        %v407 = vunpack.c.h.b16 %v243
        %v408 = vunpack.c.l.b16 %v244
        %v409 = vunpack.c.h.b16 %v244
        %v410 = vunpack.c.l.b16 %v245
        %v411 = vunpack.c.h.b16 %v245
        %v412 = vunpack.c.l.b16 %v246
        %v413 = vunpack.c.h.b16 %v246
        %v414 = vunpack.c.l.b16 %v247
        %v415 = vunpack.c.h.b16 %v247
        %v416 = vunpack.c.l.b16 %v248
        %v417 = vunpack.c.h.b16 %v248
        %v418 = vunpack.c.l.b16 %v249
        %v419 = vunpack.c.h.b16 %v249
        %v420 = vunpack.c.l.b16 %v250
        %v421 = vunpack.c.h.b16 %v250
        %v422 = vunpack.c.l.b16 %v251
        %v423 = vunpack.c.h.b16 %v251
        %v424 = vunpack.c.l.b16 %v252
        %v425 = vunpack.c.h.b16 %v252
        %v426 = vunpack.c.l.b16 %v253
        %v427 = vunpack.c.h.b16 %v253
        %v428 = vunpack.c.l.b16 %v254
        %v429 = vunpack.c.h.b16 %v254
        %v430 = vunpack.c.l.b16 %v255
        %v431 = vunpack.c.h.b16 %v255
        %v432 = vunpack.c.l.b16 %v256
        %v433 = vunpack.c.h.b16 %v256
        %v434 = vunpack.c.l.b16 %v257
        %v435 = vunpack.c.h.b16 %v257
        %v436 = vunpack.c.l.b16 %v258
        %v437 = vunpack.c.h.b16 %v258
        %v438 = vunpack.c.l.b16 %v259
        %v439 = vunpack.c.h.b16 %v259
        %v440 = vunpack.c.l.b16 %v260
        %v441 = vunpack.c.h.b16 %v260
        %v442 = vunpack.c.l.b16 %v261
        %v443 = vunpack.c.h.b16 %v261
        %v444 = vunpack.c.l.b16 %v262
        %v445 = vunpack.c.h.b16 %v262
        %v446 = vunpack.c.l.b16 %v263
        %v447 = vunpack.c.h.b16 %v263
        %v448 = vunpack.c.l.b16 %v264
        %v449 = vunpack.c.h.b16 %v264
        %v450 = vunpack.c.l.b16 %v265
        %v451 = vunpack.c.h.b16 %v265
        %v452 = vunpack.c.l.b16 %v266
        %v453 = vunpack.c.h.b16 %v266
        %v454 = vunpack.c.l.b16 %v267
        %v455 = vunpack.c.h.b16 %v267
        %v456 = vunpack.c.l.b16 %v268
        %v457 = vunpack.c.h.b16 %v268
        %v458 = vunpack.c.l.b16 %v269
        %v459 = vunpack.c.h.b16 %v269
        %v460 = vunpack.c.l.b16 %v270
        %v461 = vunpack.c.h.b16 %v270
        %v462 = vunpack.c.l.b16 %v271
        %v463 = vunpack.c.h.b16 %v271
        %v464 = vunpack.c.l.b16 %v272
        %v465 = vunpack.c.h.b16 %v272
        %v466 = vunpack.c.l.b16 %v273
        %v467 = vunpack.c.h.b16 %v273
        %v468 = vunpack.c.l.b16 %v274
        %v469 = vunpack.c.h.b16 %v274
        %v470 = vunpack.c.l.b16 %v275
        %v471 = vunpack.c.h.b16 %v275
        %v472 = vunpack.c.l.b16 %v276
        %v473 = vunpack.c.h.b16 %v276
        %v474 = vunpack.c.l.b16 %v277
        %v475 = vunpack.c.h.b16 %v277
        %v476 = vunpack.c.l.b16 %v278
        %v477 = vunpack.c.h.b16 %v278
        %v478 = vunpack.c.l.b16 %v279
        %v479 = vunpack.c.h.b16 %v279
        %v480 = vunpack.c.l.b16 %v280
        %v481 = vunpack.c.h.b16 %v280
        %v482 = vunpack.c.l.b16 %v281
        %v483 = vunpack.c.h.b16 %v281
        %v484 = vunpack.c.l.b16 %v282
        %v485 = vunpack.c.h.b16 %v282
        %v486 = vunpack.c.l.b16 %v283
        %v487 = vunpack.c.h.b16 %v283
        %v488 = vunpack.c.l.b16 %v284
        %v489 = vunpack.c.h.b16 %v284
        %v490 = vunpack.c.l.b16 %v285
        %v491 = vunpack.c.h.b16 %v285
        %v492 = vunpack.c.l.b16 %v286
        %v493 = vunpack.c.h.b16 %v286
        %v494 = vunpack.c.l.b16 %v287
        %v495 = vunpack.c.h.b16 %v287
        %v496 = vunpack.c.l.b16 %v288
        %v497 = vunpack.c.h.b16 %v288
        %v498 = vunpack.c.l.b16 %v289
        %v499 = vunpack.c.h.b16 %v289
        %v500 = vunpack.c.l.b16 %v290
        %v501 = vunpack.c.h.b16 %v290
        %v502 = vunpack.c.l.b16 %v291
        %v503 = vunpack.c.h.b16 %v291
        %v504 = vpack.c.b16 %v378, %v376
        %v505 = vpack.c.b16 %v379, %v377
        %v506 = vpack.c.b16 %v382, %v380
        %v507 = vpack.c.b16 %v383, %v381
        %v508 = vpack.c.b16 %v386, %v384
        %v509 = vpack.c.b16 %v387, %v385
        %v510 = vpack.c.b16 %v390, %v388
        %v511 = vpack.c.b16 %v391, %v389
        %v512 = vpack.c.b16 %v394, %v392
        %v513 = vpack.c.b16 %v395, %v393
        %v514 = vpack.c.b16 %v398, %v396
        %v515 = vpack.c.b16 %v399, %v397
        %v516 = vpack.c.b16 %v402, %v400
        %v517 = vpack.c.b16 %v403, %v401
        %v518 = vpack.c.b16 %v406, %v404
        %v519 = vpack.c.b16 %v407, %v405
        %v520 = vpack.c.b16 %v410, %v408
        %v521 = vpack.c.b16 %v411, %v409
        %v522 = vpack.c.b16 %v414, %v412
        %v523 = vpack.c.b16 %v415, %v413
        %v524 = vpack.c.b16 %v418, %v416
        %v525 = vpack.c.b16 %v419, %v417
        %v526 = vpack.c.b16 %v422, %v420
        %v527 = vpack.c.b16 %v423, %v421
        %v528 = vpack.c.b16 %v426, %v424
        %v529 = vpack.c.b16 %v427, %v425
        %v530 = vpack.c.b16 %v430, %v428
        %v531 = vpack.c.b16 %v431, %v429
        %v532 = vpack.c.b16 %v434, %v432
        %v533 = vpack.c.b16 %v435, %v433
        %v534 = vpack.c.b16 %v438, %v436
        %v535 = vpack.c.b16 %v439, %v437
        %v536 = vpack.c.b16 %v442, %v440
        %v537 = vpack.c.b16 %v443, %v441
        %v538 = vpack.c.b16 %v446, %v444
        %v539 = vpack.c.b16 %v447, %v445
        %v540 = vpack.c.b16 %v450, %v448
        %v541 = vpack.c.b16 %v451, %v449
        %v542 = vpack.c.b16 %v454, %v452
        %v543 = vpack.c.b16 %v455, %v453
        %v544 = vpack.c.b16 %v458, %v456
        %v545 = vpack.c.b16 %v459, %v457
        %v546 = vpack.c.b16 %v462, %v460
        %v547 = vpack.c.b16 %v463, %v461
        %v548 = vpack.c.b16 %v466, %v464
        %v549 = vpack.c.b16 %v467, %v465
        %v550 = vpack.c.b16 %v470, %v468
        %v551 = vpack.c.b16 %v471, %v469
        %v552 = vpack.c.b16 %v474, %v472
        %v553 = vpack.c.b16 %v475, %v473
        %v554 = vpack.c.b16 %v478, %v476
        %v555 = vpack.c.b16 %v479, %v477
        %v556 = vpack.c.b16 %v482, %v480
        %v557 = vpack.c.b16 %v483, %v481
        %v558 = vpack.c.b16 %v486, %v484
        %v559 = vpack.c.b16 %v487, %v485
        %v560 = vpack.c.b16 %v490, %v488
        %v561 = vpack.c.b16 %v491, %v489
        %v562 = vpack.c.b16 %v494, %v492
        %v563 = vpack.c.b16 %v495, %v493
        %v564 = vpack.c.b16 %v498, %v496
        %v565 = vpack.c.b16 %v499, %v497
        %v566 = vpack.c.b16 %v502, %v500
        %v567 = vpack.c.b16 %v503, %v501
        %632 = vmatprep.subr.bf16.mxu0 %v505
        %633 = vmatpush1.bf16.msra.mxu0 %v504
        %634 = vmatprep.subr.bf16.mxu0 %v507
        %635 = vmatpush1.bf16.msra.mxu0 %v506
        %636 = vmatprep.subr.bf16.mxu0 %v509
        %637 = vmatpush1.bf16.msra.mxu0 %v508
        %638 = vmatprep.subr.bf16.mxu0 %v511
        %639 = vmatpush1.bf16.msra.mxu0 %v510
        %640 = vmatprep.subr.bf16.mxu0 %v513
        %641 = vmatpush1.bf16.msra.mxu0 %v512
        %642 = vmatprep.subr.bf16.mxu0 %v515
        %643 = vmatpush1.bf16.msra.mxu0 %v514
        %644 = vmatprep.subr.bf16.mxu0 %v517
        %645 = vmatpush1.bf16.msra.mxu0 %v516
        %646 = vmatprep.subr.bf16.mxu0 %v519
        %647 = vmatpush1.bf16.msra.mxu0 %v518
        %648 = vmatprep.subr.bf16.mxu0 %v521
        %649 = vmatpush1.bf16.msra.mxu0 %v520
        %650 = vmatprep.subr.bf16.mxu0 %v523
        %651 = vmatpush1.bf16.msra.mxu0 %v522
        %652 = vmatprep.subr.bf16.mxu0 %v525
        %653 = vmatpush1.bf16.msra.mxu0 %v524
        %654 = vmatprep.subr.bf16.mxu0 %v527
        %655 = vmatpush1.bf16.msra.mxu0 %v526
        %656 = vmatprep.subr.bf16.mxu0 %v529
        %657 = vmatpush1.bf16.msra.mxu0 %v528
        %658 = vmatprep.subr.bf16.mxu0 %v531
        %659 = vmatpush1.bf16.msra.mxu0 %v530
        %660 = vmatprep.subr.bf16.mxu0 %v533
        %661 = vmatpush1.bf16.msra.mxu0 %v532
        %662 = vmatprep.subr.bf16.mxu0 %v535
        %663 = vmatpush1.bf16.msra.mxu0 %v534
        %664 = vmatprep.mubr.bf16.mxu0 %v305
        %665 = vmatmul.mubr.bf16.gmra.mrb[0].mxu0 %v304
        %v666 = vpop.f32.mrb[0].mxu0
        %v667 = vadd.f32 0.0, %v666
        %v668 = vpop.f32.mrb[0].mxu0
        %v669 = vadd.f32 0.0, %v668
        %v670 = vpop.f32.mrb[0].mxu0
        %v671 = vadd.f32 0.0, %v670
        %v672 = vpop.f32.mrb[0].mxu0
        %v673 = vadd.f32 0.0, %v672
        %674 = vdwg.mxu0
        %675 = vmatprep.subr.bf16.mxu0 %v537
        %676 = vmatpush1.bf16.msra.mxu0 %v536
        %677 = vmatprep.subr.bf16.mxu0 %v539
        %678 = vmatpush1.bf16.msra.mxu0 %v538
        %679 = vmatprep.subr.bf16.mxu0 %v541
        %680 = vmatpush1.bf16.msra.mxu0 %v540
        %681 = vmatprep.subr.bf16.mxu0 %v543
        %682 = vmatpush1.bf16.msra.mxu0 %v542
        %683 = vmatprep.subr.bf16.mxu0 %v545
        %684 = vmatpush1.bf16.msra.mxu0 %v544
        %685 = vmatprep.subr.bf16.mxu0 %v547
        %686 = vmatpush1.bf16.msra.mxu0 %v546
        %687 = vmatprep.subr.bf16.mxu0 %v549
        %688 = vmatpush1.bf16.msra.mxu0 %v548
        %689 = vmatprep.subr.bf16.mxu0 %v551
        %690 = vmatpush1.bf16.msra.mxu0 %v550
        %691 = vmatprep.subr.bf16.mxu0 %v553
        %692 = vmatpush1.bf16.msra.mxu0 %v552
        %693 = vmatprep.subr.bf16.mxu0 %v555
        %694 = vmatpush1.bf16.msra.mxu0 %v554
        %695 = vmatprep.subr.bf16.mxu0 %v557
        %696 = vmatpush1.bf16.msra.mxu0 %v556
        %697 = vmatprep.subr.bf16.mxu0 %v559
        %698 = vmatpush1.bf16.msra.mxu0 %v558
        %699 = vmatprep.subr.bf16.mxu0 %v561
        %700 = vmatpush1.bf16.msra.mxu0 %v560
        %701 = vmatprep.subr.bf16.mxu0 %v563
        %702 = vmatpush1.bf16.msra.mxu0 %v562
        %703 = vmatprep.subr.bf16.mxu0 %v565
        %704 = vmatpush1.bf16.msra.mxu0 %v564
        %705 = vmatprep.subr.bf16.mxu0 %v567
        %706 = vmatpush1.bf16.msra.mxu0 %v566
        %707 = vmatprep.mubr.bf16.mxu0 %v307
        %708 = vmatmul.mubr.bf16.gmra.mrb[0].mxu0 %v306
        %v709 = vpop.f32.mrb[0].mxu0
        %v710 = vadd.f32 %v667, %v709
        %v711 = vpop.f32.mrb[0].mxu0
        %v712 = vadd.f32 %v669, %v711
        %v713 = vpop.f32.mrb[0].mxu0
        %v714 = vadd.f32 %v671, %v713
        %v715 = vpop.f32.mrb[0].mxu0
        %v716 = vadd.f32 %v673, %v715
        %717 = vdwg.mxu0
        %v718 = vadd.f32 %v220, %v710
        %v719 = vadd.f32 %v221, %v712
        %v720 = vadd.f32 %v222, %v714
        %v721 = vadd.f32 %v223, %v716
        %722 = vst [vmem:[#allocation2] sm:$0xff] %v718
        %723 = vst [vmem:[#allocation2 + $0x8] sm:$0xff] %v719
        %724 = vst [vmem:[#allocation2 + $0x10] sm:$0xff] %v720
        %725 = vst [vmem:[#allocation2 + $0x18] sm:$0xff] %v721
        %p726 = scmp.eq.s32.totalorder %s18, 3
        // Predicated region
        $region56: #{discriminator_forward.7} parent=46 // pred_check
          %p727 = pneg %p726
        $region57: #{discriminator_forward.7} parent=46 // pred_check_branch
          %729 = sbr.rel (%p727) target = $region59
        $region58: #{discriminator_forward.7} parent=46 // pred_region
          %v730 = vld [vmem:[#allocation2] sm:$0xff]
          %v731 = vld [vmem:[#allocation2 + $0x8] sm:$0xff]
          %v732 = vld [vmem:[#allocation2 + $0x10] sm:$0xff]
          %v733 = vld [vmem:[#allocation2 + $0x18] sm:$0xff]
          %v734 = vadd.f32 %v730, %v732
          %v735 = vrot.slane %v734, 4
          %v736 = vadd.f32 %v734, %v735
          %v737 = vrot.slane %v736, 2
          %v738 = vadd.f32 %v736, %v737
          %v739 = vrot.slane %v738, 1
          %v740 = vadd.f32 %v738, %v739
          %v741 = vadd.f32 %v731, %v733
          %v742 = vrot.slane %v741, 4
          %v743 = vadd.f32 %v741, %v742
          %v744 = vrot.slane %v743, 2
          %v745 = vadd.f32 %v743, %v744
          %v746 = vrot.slane %v745, 1
          %v747 = vadd.f32 %v745, %v746
          %v748 = vmul.f32 %v740, 0.0625
          %v749 = vmul.f32 %v747, 0.0625
          %v750 = vsub.f32 %v730, %v748
          %v751 = vsub.f32 %v731, %v749
          %v752 = vsub.f32 %v732, %v748
          %v753 = vsub.f32 %v733, %v749
          %v754 = vmul.f32 %v750, %v750
          %v755 = vmul.f32 %v751, %v751
          %v756 = vmul.f32 %v752, %v752
          %v757 = vmul.f32 %v753, %v753
          %v758 = vadd.f32 %v754, %v756
          %v759 = vrot.slane %v758, 4
          %v760 = vadd.f32 %v758, %v759
          %v761 = vrot.slane %v760, 2
          %v762 = vadd.f32 %v760, %v761
          %v763 = vrot.slane %v762, 1
          %v764 = vadd.f32 %v762, %v763
          %v765 = vadd.f32 %v755, %v757
          %v766 = vrot.slane %v765, 4
          %v767 = vadd.f32 %v765, %v766
          %v768 = vrot.slane %v767, 2
          %v769 = vadd.f32 %v767, %v768
          %v770 = vrot.slane %v769, 1
          %v771 = vadd.f32 %v769, %v770
          %v772 = vmul.f32 %v764, 0.0625
          %v773 = vmul.f32 %v771, 0.0625
          %v774 = vadd.f32 %v772, 1e-05
          %v775 = vadd.f32 %v773, 1e-05
          %v776 = vrsqrt.pop %v774
          %v777 = vrsqrt.pop %v775
          %v778 = vmul.f32 %v750, %v776
          %v779 = vmul.f32 %v751, %v777
          %v780 = vmul.f32 %v752, %v776
          %v781 = vmul.f32 %v753, %v777
          %vm782 = vcmp.gt.f32.partialorder %v778, 0.0
          %vm783 = vcmp.gt.f32.partialorder %v779, 0.0
          %vm784 = vcmp.gt.f32.partialorder %v780, 0.0
          %vm785 = vcmp.gt.f32.partialorder %v781, 0.0
          %v786 = vmul.f32 %v778, 0.2
          %v787 = vmul.f32 %v779, 0.2
          %v788 = vmul.f32 %v780, 0.2
          %v789 = vmul.f32 %v781, 0.2
          %v790 = vsel %vm782, %v778, %v786
          %v791 = vsel %vm783, %v779, %v787
          %v792 = vsel %vm784, %v780, %v788
          %v793 = vsel %vm785, %v781, %v789
          %v794 = vpack.c.bf16 %v792, %v790
          %v795 = vpack.c.bf16 %v793, %v791
          %v798 = vunpack.c.l.b16 %v794
          %v799 = vunpack.c.l.b16 %v795
          %v800 = vunpack.c.h.b16 %v794
          %v801 = vunpack.c.h.b16 %v795
          %v802 = vpack.c.b16 %v799, %v798
          %v803 = vpack.c.b16 %v801, %v800
          %806 = vst [vmem:[%s211] sm:$0xff] %v802
          %807 = vst [vmem:[%s211 + $0x8] sm:$0xff] %v803
        $region59: #{discriminator_forward.7} parent=46 // pred_fallthru
          _
        %p808 = scmp.lt.s32.totalorder %s17, 1
        %s809 = scalar_select %p808, %s17, 1
        %s810 = smul.addr %s809, 4
        %s811 = smul.addr %s810, 4
        %s812 = scalar_lea.vmem %s2, %s811
        // Predicated region
        $region60: #{discriminator_forward.7} parent=46 // pred_check
          %p813 = pneg %p97
        $region61: #{discriminator_forward.7} parent=46 // pred_check_branch
          %815 = sbr.rel (%p813) target = $region63
        $region62: #{discriminator_forward.7} parent=46 // pred_region
          _
        $region63: #{discriminator_forward.7} parent=46 // pred_fallthru
          _
      $region47: #{discriminator_forward.7} parent=5 // pred_fallthru
        _
      %p816 = scmp.le.s32.totalorder 2, %s8
      // Predicated region
      $region64: #{discriminator_forward.7} parent=5 // pred_check
        %p817 = pneg %p816
      $region65: #{discriminator_forward.7} parent=5 // pred_check_branch
        %819 = sbr.rel (%p817) target = $region67
      $region66: #{discriminator_forward.7} parent=5 // pred_region
        %s820 = ssub.s32 %s8, 2
        // Predicated region
        $region68: #{discriminator_forward.7} parent=66 // pred_check
          %p821 = pneg %p103
        $region69: #{discriminator_forward.7} parent=66 // pred_check_branch
          %823 = sbr.rel (%p821) target = $region71
        $region70: #{discriminator_forward.7} parent=66 // pred_region
          %p824 = scmp.lt.s32.totalorder %s19, 1
          %s825 = scalar_select %p824, %s19, 1
          %s826 = smul.addr %s825, 4
          %s827 = smul.addr %s826, 4
          %s828 = scalar_lea.vmem %s2, %s827
        $region71: #{discriminator_forward.7} parent=66 // pred_fallthru
          _
      $region67: #{discriminator_forward.7} parent=5 // pred_fallthru
        _
    $region6: #{discriminator_forward.7} parent=1 // loop_footer
      %s12 = sadd.s32 1, %s8
    $region7: #{discriminator_forward.7} parent=1 // loop_footer_branch
      %7 = sbr.rel target = $region3
    $region8: #{discriminator_forward.7} parent=1 // loop_exit
      _

// kernel: discriminator_forward.8
$region0: #{discriminator_forward.8}
  #allocation0 [shape = 'u32[]', space=smem, size = 0x4, offset = 0x4, fixed_abs, tag = 'smem constant byte address 0x4 - core index']
  #allocation1 [shape = 'u32[144,128]{1,0:T(1,128)}', space=vmem, size = 0x12000, scoped, tag = 'internal scratch']
  #allocation2 [shape = 'f32[16,512]{1,0:T(8,128)}', space=vmem, size = 0x8000, scoped, tag = 'scratch operand']
  %s0 = inlined_call_operand.vmem [shape: bf16[2,16,4096], index: 0, kind: input, shape index: {}]
  %s1 = inlined_call_operand.vmem [shape: bf16[4096,512], index: 1, kind: input, shape index: {}]
  %s2 = inlined_call_operand.vmem [shape: bf16[2,16,512], index: 2, kind: output, shape index: {}]
  %s3 = sld [smem:[#allocation0]]
  $region72: #{discriminator_forward.8} parent=0
    _
  %s5 = ssub.s32 1, %s3
  %s6 = scalar_select 0, %s5, %s3
  $region1: #{discriminator_forward.8} parent=0
    #allocation3 [shape = 'u8[32768]{0}', space=vmem, size = 0x8000, scoped, tag = 'input window, operand 0']
    loop: start=0, step=1, limit=18
    $region2: #{discriminator_forward.8} parent=1 // loop_pre_header
      _
    $region3: #{discriminator_forward.8} parent=1 // loop_header
      %s8 = sphi 0, %s12
      %p9 = scmp.ge.s32.totalorder %s8, 18
      %s15 = sphi 0, %s27
      %s16 = sphi 0, %s23
      %s17 = sphi 0, %s15
      %s18 = sphi 0, %s16
      %s19 = sphi 0, %s17
      %s20 = sphi 0, %s18
      %s32 = sphi 0, %s34
      %s35 = sphi 0, %s32
      %s36 = sphi 0, %s35
      %s52 = sphi 0, %s36
      %s58 = sphi 0, %s60
      %s61 = sphi 0, %s58
      %s62 = sphi 0, %s61
      %s78 = sphi 0, %s62
      %s84 = sphi 0, %s86
      %s87 = sphi 0, %s84
      %s88 = sphi 0, %s87
      %s104 = sphi 0, %s88
    $region4: #{discriminator_forward.8} parent=1 // loop_header_branch
      %11 = sbr.rel (%p9) target = $region8
    $region5: #{discriminator_forward.8} parent=1 // loop_body
      %s13 = ssub.s32 %s8, 1
      %s14 = ssub.s32 %s8, 2
      %s21 = sadd.s32 1, %s16
      %p22 = scmp.ge.s32.totalorder %s21, 8
      %s23 = scalar_select %p22, 0, %s21
      %s24 = sadd.s32 1, %s15
      %s25 = scalar_select %p22, %s24, %s15
      %p26 = scmp.ge.s32.totalorder %s25, 2
      %s27 = scalar_select %p26, 0, %s25
      %s28 = ssub.s32 %s15, %s27
      %s29 = ssub.s32 %s16, %s23
      %s30 = sor.u32 %s28, %s29
      %p31 = scmp.eq.s32.totalorder %s30, 0
      %s33 = sadd.s32 %s32, 1
      %s34 = scalar_select %p31, %s32, %s33
      %p37 = pneg %p31
      %p38 = scmp.eq.s32.totalorder %s8, 15
      %p39 = por %p37, %p38
      %p40 = scmp.ne.s32.totalorder %s32, %s35
      %p41 = scmp.eq.s32.totalorder %s8, 0
      %p42 = por %p40, %p41
      %p43 = scmp.ne.s32.totalorder %s32, %s35
      %p44 = scmp.eq.s32.totalorder %s13, 15
      %p45 = por %p43, %p44
      %p46 = scmp.ne.s32.totalorder %s35, %s36
      %p47 = scmp.eq.s32.totalorder %s13, 0
      %p48 = por %p46, %p47
      %p49 = scmp.ne.s32.totalorder %s35, %s36
      %p50 = scmp.eq.s32.totalorder %s14, 15
      %p51 = por %p49, %p50
      %p53 = scmp.ne.s32.totalorder %s36, %s52
      %p54 = scmp.eq.s32.totalorder %s14, 0
      %p55 = por %p53, %p54
      %s56 = ssub.s32 %s16, %s23
      %p57 = scmp.eq.s32.totalorder %s56, 0
      %s59 = sadd.s32 %s58, 1
      %s60 = scalar_select %p57, %s58, %s59
      %p63 = pneg %p57
      %p64 = scmp.eq.s32.totalorder %s8, 15
      %p65 = por %p63, %p64
      %p66 = scmp.ne.s32.totalorder %s58, %s61
      %p67 = scmp.eq.s32.totalorder %s8, 0
      %p68 = por %p66, %p67
      %p69 = scmp.ne.s32.totalorder %s58, %s61
      %p70 = scmp.eq.s32.totalorder %s13, 15
      %p71 = por %p69, %p70
      %p72 = scmp.ne.s32.totalorder %s61, %s62
      %p73 = scmp.eq.s32.totalorder %s13, 0
      %p74 = por %p72, %p73
      %p75 = scmp.ne.s32.totalorder %s61, %s62
      %p76 = scmp.eq.s32.totalorder %s14, 15
      %p77 = por %p75, %p76
      %p79 = scmp.ne.s32.totalorder %s62, %s78
      %p80 = scmp.eq.s32.totalorder %s14, 0
      %p81 = por %p79, %p80
      %s82 = ssub.s32 %s15, %s27
      %p83 = scmp.eq.s32.totalorder %s82, 0
      %s85 = sadd.s32 %s84, 1
      %s86 = scalar_select %p83, %s84, %s85
      %p89 = pneg %p83
      %p90 = scmp.eq.s32.totalorder %s8, 15
      %p91 = por %p89, %p90
      %p92 = scmp.ne.s32.totalorder %s84, %s87
      %p93 = scmp.eq.s32.totalorder %s8, 0
      %p94 = por %p92, %p93
      %p95 = scmp.ne.s32.totalorder %s84, %s87
      %p96 = scmp.eq.s32.totalorder %s13, 15
      %p97 = por %p95, %p96
      %p98 = scmp.ne.s32.totalorder %s87, %s88
      %p99 = scmp.eq.s32.totalorder %s13, 0
      %p100 = por %p98, %p99
      %p101 = scmp.ne.s32.totalorder %s87, %s88
      %p102 = scmp.eq.s32.totalorder %s14, 15
      %p103 = por %p101, %p102
      %p105 = scmp.ne.s32.totalorder %s88, %s104
      %p106 = scmp.eq.s32.totalorder %s14, 0
      %p107 = por %p105, %p106
      %p108 = scmp.le.s32.totalorder 1, %s8
      %p109 = scmp.lt.s32.totalorder %s8, 17
      %p110 = pnand %p108, %p109
      %p111 = pneg %p110
      // Predicated region
      $region9: #{discriminator_forward.8} parent=5 // pred_check
        _
      $region10: #{discriminator_forward.8} parent=5 // pred_check_branch
        %113 = sbr.rel (%p110) target = $region12
      $region11: #{discriminator_forward.8} parent=5 // pred_region
        %s114 = ssub.s32 %s8, 1
      $region12: #{discriminator_forward.8} parent=5 // pred_fallthru
        _
      %p115 = scmp.lt.s32.totalorder %s8, 16
      // Predicated region
      $region13: #{discriminator_forward.8} parent=5 // pred_check
        %p116 = pneg %p115
      $region14: #{discriminator_forward.8} parent=5 // pred_check_branch
        %118 = sbr.rel (%p116) target = $region16
      $region15: #{discriminator_forward.8} parent=5 // pred_region
        // Predicated region
        $region17: #{discriminator_forward.8} parent=15 // pred_check
          %p119 = pneg %p42
        $region18: #{discriminator_forward.8} parent=15 // pred_check_branch
          %121 = sbr.rel (%p119) target = $region20
        $region19: #{discriminator_forward.8} parent=15 // pred_region
          %s122 = sand.u32 %s32, 1
          %s123 = sand.u32 %s32, 1
          %s124 = smul.addr %s123, 32
          %s125 = scalar_lea.vmem [#allocation3], %s124
          %s126 = smul.u32 4, %s16
          %s127 = smul.addr %s15, 64
          %s128 = sadd.s32 %s126, %s127
          %s129 = smul.addr %s128, 4
          %s130 = scalar_lea.vmem %s0, %s129
          // Predicated region
          $region21: #{discriminator_forward.8} parent=19 // pred_check
            _
          $region22: #{discriminator_forward.8} parent=19 // pred_check_branch
            %132 = sbr.rel (0) target = $region24
          $region23: #{discriminator_forward.8} parent=19 // pred_region
            // Predicated region
            $region25: #{discriminator_forward.8} parent=23 // pred_check
              _
            $region26: #{discriminator_forward.8} parent=23 // pred_check_branch
              %134 = sbr.rel (0) target = $region28
            $region27: #{discriminator_forward.8} parent=23 // pred_region
              loop: start=0, step=1, limit=1
              $region29: #{discriminator_forward.8} parent=27 // loop_pre_header
                _
              $region30: #{discriminator_forward.8} parent=27 // loop_header
                %s136 = sphi 0, %s140
                %p137 = scmp.ge.s32.totalorder %s136, 1
                %s141 = sphi %s130, %s130
                %s142 = sphi %s125, %s125
              $region31: #{discriminator_forward.8} parent=27 // loop_header_branch
                %139 = sbr.rel (%p137) target = $region35
              $region32: #{discriminator_forward.8} parent=27 // loop_body
                %v143 = vld [vmem:[%s141] sm:$0xff]
                %144 = vst [vmem:[%s142] sm:$0xff] %v143
                %v145 = vld [vmem:[%s141 + $0x8] sm:$0xff]
                %146 = vst [vmem:[%s142 + $0x8] sm:$0xff] %v145
                %v147 = vld [vmem:[%s141 + $0x80] sm:$0xff]
                %148 = vst [vmem:[%s142 + $0x10] sm:$0xff] %v147
                %v149 = vld [vmem:[%s141 + $0x88] sm:$0xff]
                %150 = vst [vmem:[%s142 + $0x18] sm:$0xff] %v149
              $region33: #{discriminator_forward.8} parent=27 // loop_footer
                %s140 = sadd.s32 1, %s136
              $region34: #{discriminator_forward.8} parent=27 // loop_footer_branch
                %135 = sbr.rel target = $region30
              $region35: #{discriminator_forward.8} parent=27 // loop_exit
                _
            $region28: #{discriminator_forward.8} parent=23 // pred_fallthru
              _
            // Predicated region
            $region36: #{discriminator_forward.8} parent=23 // pred_check
              _
            $region37: #{discriminator_forward.8} parent=23 // pred_check_branch
              %152 = sbr.rel target = $region39
            $region38: #{discriminator_forward.8} parent=23 // pred_region
              _
            $region39: #{discriminator_forward.8} parent=23 // pred_fallthru
              _
          $region24: #{discriminator_forward.8} parent=19 // pred_fallthru
            _
          %153 = vnop
        $region20: #{discriminator_forward.8} parent=15 // pred_fallthru
          _
        // Predicated region
        $region40: #{discriminator_forward.8} parent=15 // pred_check
          %p154 = pneg %p68
        $region41: #{discriminator_forward.8} parent=15 // pred_check_branch
          %156 = sbr.rel (%p154) target = $region43
        $region42: #{discriminator_forward.8} parent=15 // pred_region
          %s157 = smul.u32 64, %s16
          %p158 = scmp.lt.s32.totalorder %s157, 511
          %s159 = scalar_select %p158, %s157, 511
          %s160 = smul.addr %s159, 4
          %s161 = smul.addr %s160, 4
          %s162 = scalar_lea.vmem %s1, %s161
          %s163 = smul.u32 64, %s16
        $region43: #{discriminator_forward.8} parent=15 // pred_fallthru
          _
      $region16: #{discriminator_forward.8} parent=5 // pred_fallthru
        _
      %p164 = scmp.le.s32.totalorder 1, %s8
      %p165 = scmp.lt.s32.totalorder %s8, 17
      %p166 = pnand %p164, %p165
      %p167 = pneg %p166
      // Predicated region
      $region44: #{discriminator_forward.8} parent=5 // pred_check
        _
      $region45: #{discriminator_forward.8} parent=5 // pred_check_branch
        %169 = sbr.rel (%p166) target = $region47
      $region46: #{discriminator_forward.8} parent=5 // pred_region
        %s170 = ssub.s32 %s8, 1
        %s171 = sand.u32 %s35, 1
        %s172 = sand.u32 %s35, 1
        %s173 = smul.addr %s172, 32
        %s174 = scalar_lea.vmem [#allocation3], %s173
        // Predicated region
        $region48: #{discriminator_forward.8} parent=46 // pred_check
          %p175 = pneg %p48
        $region49: #{discriminator_forward.8} parent=46 // pred_check_branch
          %177 = sbr.rel (%p175) target = $region51
        $region50: #{discriminator_forward.8} parent=46 // pred_region
          _
        $region51: #{discriminator_forward.8} parent=46 // pred_fallthru
          _
        %s178 = sand.u32 %s35, 1
        %s179 = sand.u32 %s35, 1
        %s180 = smul.addr %s179, 32
        %s181 = scalar_lea.vmem [#allocation3], %s180
        %p182 = pneg %p48
        %p183 = pneg %p45
        %s184 = smul.u32 64, %s18
        %p185 = scmp.lt.s32.totalorder %s184, 511
        %s186 = scalar_select %p185, %s184, 511
        %s187 = smul.addr %s186, 4
        %s188 = smul.addr %s187, 4
        %s189 = scalar_lea.vmem %s1, %s188
        %p190 = pneg %p74
        %p191 = pneg %p71
        %p192 = pneg %p100
        %p193 = pneg %p97
        %p194 = scmp.lt.s32.totalorder %s17, 1
        %s195 = scalar_select %p194, %s17, 1
        %s196 = smul.addr %s195, 8
        %s197 = smul.addr %s196, 4
        %s198 = scalar_lea.vmem %s2, %s197
        %s199 = smul.u32 4, %s18
        %s200 = smul.u32 64, %s18
        %p201 = scmp.lt.s32.totalorder %s200, 511
        %s202 = scalar_select %p201, %s200, 511
        %s203 = smul.addr %s202, 4
        %s204 = smul.addr %s203, 4
        %s205 = scalar_lea.vmem %s1, %s204
        %s206 = smul.u32 64, %s18
        %p207 = scmp.lt.s32.totalorder %s17, 1
        %s208 = scalar_select %p207, %s17, 1
        %s209 = smul.addr %s208, 8
        %s210 = smul.addr %s209, 4
        %s211 = scalar_lea.vmem %s2, %s210
        %p212 = scmp.eq.s32.totalorder %s18, 0
        // Predicated region
        $region52: #{discriminator_forward.8} parent=46 // pred_check
          %p213 = pneg %p212
        $region53: #{discriminator_forward.8} parent=46 // pred_check_branch
          %215 = sbr.rel (%p213) target = $region55
        $region54: #{discriminator_forward.8} parent=46 // pred_region
          %216 = vst [vmem:[#allocation2] sm:$0xff] 0.0
          %217 = vst [vmem:[#allocation2 + $0x8] sm:$0xff] 0.0
          %218 = vst [vmem:[#allocation2 + $0x10] sm:$0xff] 0.0
          %219 = vst [vmem:[#allocation2 + $0x18] sm:$0xff] 0.0
          %220 = vst [vmem:[#allocation2 + $0x20] sm:$0xff] 0.0
          %221 = vst [vmem:[#allocation2 + $0x28] sm:$0xff] 0.0
          %222 = vst [vmem:[#allocation2 + $0x30] sm:$0xff] 0.0
          %223 = vst [vmem:[#allocation2 + $0x38] sm:$0xff] 0.0
        $region55: #{discriminator_forward.8} parent=46 // pred_fallthru
          _
        %v224 = vld [vmem:[#allocation2] sm:$0xff]
        %v225 = vld [vmem:[#allocation2 + $0x8] sm:$0xff]
        %v226 = vld [vmem:[#allocation2 + $0x10] sm:$0xff]
        %v227 = vld [vmem:[#allocation2 + $0x18] sm:$0xff]
        %v228 = vld [vmem:[#allocation2 + $0x20] sm:$0xff]
        %v229 = vld [vmem:[#allocation2 + $0x28] sm:$0xff]
        %v230 = vld [vmem:[#allocation2 + $0x30] sm:$0xff]
        %v231 = vld [vmem:[#allocation2 + $0x38] sm:$0xff]
        %v232 = vld [vmem:[%s174] sm:$0xff]
        %v233 = vld [vmem:[%s174 + $0x8] sm:$0xff]
        %v234 = vld [vmem:[%s174 + $0x10] sm:$0xff]
        %v235 = vld [vmem:[%s174 + $0x18] sm:$0xff]
        %v236 = vld [vmem:[%s205] sm:$0xff]
        %v237 = vld [vmem:[%s205 + $0x8] sm:$0xff]
        %v238 = vld [vmem:[%s205 + $0x10] sm:$0xff]
        %v239 = vld [vmem:[%s205 + $0x18] sm:$0xff]
        %v240 = vld [vmem:[%s205 + $0x20] sm:$0xff]
        %v241 = vld [vmem:[%s205 + $0x28] sm:$0xff]
        %v242 = vld [vmem:[%s205 + $0x30] sm:$0xff]
        %v243 = vld [vmem:[%s205 + $0x38] sm:$0xff]
        %v244 = vld [vmem:[%s205 + $0x40] sm:$0xff]
        %v245 = vld [vmem:[%s205 + $0x48] sm:$0xff]
        %v246 = vld [vmem:[%s205 + $0x50] sm:$0xff]
        %v247 = vld [vmem:[%s205 + $0x58] sm:$0xff]
        %v248 = vld [vmem:[%s205 + $0x60] sm:$0xff]
        %v249 = vld [vmem:[%s205 + $0x68] sm:$0xff]
        %v250 = vld [vmem:[%s205 + $0x70] sm:$0xff]
        %v251 = vld [vmem:[%s205 + $0x78] sm:$0xff]
        %v252 = vld [vmem:[%s205 + $0x80] sm:$0xff]
        %v253 = vld [vmem:[%s205 + $0x88] sm:$0xff]
        %v254 = vld [vmem:[%s205 + $0x90] sm:$0xff]
        %v255 = vld [vmem:[%s205 + $0x98] sm:$0xff]
        %v256 = vld [vmem:[%s205 + $0xa0] sm:$0xff]
        %v257 = vld [vmem:[%s205 + $0xa8] sm:$0xff]
        %v258 = vld [vmem:[%s205 + $0xb0] sm:$0xff]
        %v259 = vld [vmem:[%s205 + $0xb8] sm:$0xff]
        %v260 = vld [vmem:[%s205 + $0xc0] sm:$0xff]
        %v261 = vld [vmem:[%s205 + $0xc8] sm:$0xff]
        %v262 = vld [vmem:[%s205 + $0xd0] sm:$0xff]
        %v263 = vld [vmem:[%s205 + $0xd8] sm:$0xff]
        %v264 = vld [vmem:[%s205 + $0xe0] sm:$0xff]
        %v265 = vld [vmem:[%s205 + $0xe8] sm:$0xff]
        %v266 = vld [vmem:[%s205 + $0xf0] sm:$0xff]
        %v267 = vld [vmem:[%s205 + $0xf8] sm:$0xff]
        %v268 = vld [vmem:[%s205 + $0x100] sm:$0xff]
        %v269 = vld [vmem:[%s205 + $0x108] sm:$0xff]
        %v270 = vld [vmem:[%s205 + $0x110] sm:$0xff]
        %v271 = vld [vmem:[%s205 + $0x118] sm:$0xff]
        %v272 = vld [vmem:[%s205 + $0x120] sm:$0xff]
        %v273 = vld [vmem:[%s205 + $0x128] sm:$0xff]
        %v274 = vld [vmem:[%s205 + $0x130] sm:$0xff]
        %v275 = vld [vmem:[%s205 + $0x138] sm:$0xff]
        %v276 = vld [vmem:[%s205 + $0x140] sm:$0xff]
        %v277 = vld [vmem:[%s205 + $0x148] sm:$0xff]
        %v278 = vld [vmem:[%s205 + $0x150] sm:$0xff]
        %v279 = vld [vmem:[%s205 + $0x158] sm:$0xff]
        %v280 = vld [vmem:[%s205 + $0x160] sm:$0xff]
        %v281 = vld [vmem:[%s205 + $0x168] sm:$0xff]
        %v282 = vld [vmem:[%s205 + $0x170] sm:$0xff]
        %v283 = vld [vmem:[%s205 + $0x178] sm:$0xff]
        %v284 = vld [vmem:[%s205 + $0x180] sm:$0xff]
        %v285 = vld [vmem:[%s205 + $0x188] sm:$0xff]
        %v286 = vld [vmem:[%s205 + $0x190] sm:$0xff]
        %v287 = vld [vmem:[%s205 + $0x198] sm:$0xff]
        %v288 = vld [vmem:[%s205 + $0x1a0] sm:$0xff]
        %v289 = vld [vmem:[%s205 + $0x1a8] sm:$0xff]
        %v290 = vld [vmem:[%s205 + $0x1b0] sm:$0xff]
        %v291 = vld [vmem:[%s205 + $0x1b8] sm:$0xff]
        %v292 = vld [vmem:[%s205 + $0x1c0] sm:$0xff]
        %v293 = vld [vmem:[%s205 + $0x1c8] sm:$0xff]
        %v294 = vld [vmem:[%s205 + $0x1d0] sm:$0xff]
        %v295 = vld [vmem:[%s205 + $0x1d8] sm:$0xff]
        %v296 = vld [vmem:[%s205 + $0x1e0] sm:$0xff]
        %v297 = vld [vmem:[%s205 + $0x1e8] sm:$0xff]
        %v298 = vld [vmem:[%s205 + $0x1f0] sm:$0xff]
        %v299 = vld [vmem:[%s205 + $0x1f8] sm:$0xff]
        %v300 = vld [vmem:[%s205 + $0x200] sm:$0xff]
        %v301 = vld [vmem:[%s205 + $0x208] sm:$0xff]
        %v302 = vld [vmem:[%s205 + $0x210] sm:$0xff]
        %v303 = vld [vmem:[%s205 + $0x218] sm:$0xff]
        %v304 = vld [vmem:[%s205 + $0x220] sm:$0xff]
        %v305 = vld [vmem:[%s205 + $0x228] sm:$0xff]
        %v306 = vld [vmem:[%s205 + $0x230] sm:$0xff]
        %v307 = vld [vmem:[%s205 + $0x238] sm:$0xff]
        %v308 = vld [vmem:[%s205 + $0x240] sm:$0xff]
        %v309 = vld [vmem:[%s205 + $0x248] sm:$0xff]
        %v310 = vld [vmem:[%s205 + $0x250] sm:$0xff]
        %v311 = vld [vmem:[%s205 + $0x258] sm:$0xff]
        %v312 = vld [vmem:[%s205 + $0x260] sm:$0xff]
        %v313 = vld [vmem:[%s205 + $0x268] sm:$0xff]
        %v314 = vld [vmem:[%s205 + $0x270] sm:$0xff]
        %v315 = vld [vmem:[%s205 + $0x278] sm:$0xff]
        %v316 = vld [vmem:[%s205 + $0x280] sm:$0xff]
        %v317 = vld [vmem:[%s205 + $0x288] sm:$0xff]
        %v318 = vld [vmem:[%s205 + $0x290] sm:$0xff]
        %v319 = vld [vmem:[%s205 + $0x298] sm:$0xff]
        %v320 = vld [vmem:[%s205 + $0x2a0] sm:$0xff]
        %v321 = vld [vmem:[%s205 + $0x2a8] sm:$0xff]
        %v322 = vld [vmem:[%s205 + $0x2b0] sm:$0xff]
        %v323 = vld [vmem:[%s205 + $0x2b8] sm:$0xff]
        %v324 = vld [vmem:[%s205 + $0x2c0] sm:$0xff]
        %v325 = vld [vmem:[%s205 + $0x2c8] sm:$0xff]
        %v326 = vld [vmem:[%s205 + $0x2d0] sm:$0xff]
        %v327 = vld [vmem:[%s205 + $0x2d8] sm:$0xff]
        %v328 = vld [vmem:[%s205 + $0x2e0] sm:$0xff]
        %v329 = vld [vmem:[%s205 + $0x2e8] sm:$0xff]
        %v330 = vld [vmem:[%s205 + $0x2f0] sm:$0xff]
        %v331 = vld [vmem:[%s205 + $0x2f8] sm:$0xff]
        %v332 = vld [vmem:[%s205 + $0x300] sm:$0xff]
        %v333 = vld [vmem:[%s205 + $0x308] sm:$0xff]
        %v334 = vld [vmem:[%s205 + $0x310] sm:$0xff]
        %v335 = vld [vmem:[%s205 + $0x318] sm:$0xff]
        %v336 = vld [vmem:[%s205 + $0x320] sm:$0xff]
        %v337 = vld [vmem:[%s205 + $0x328] sm:$0xff]
        %v338 = vld [vmem:[%s205 + $0x330] sm:$0xff]
        %v339 = vld [vmem:[%s205 + $0x338] sm:$0xff]
        %v340 = vld [vmem:[%s205 + $0x340] sm:$0xff]
        %v341 = vld [vmem:[%s205 + $0x348] sm:$0xff]
        %v342 = vld [vmem:[%s205 + $0x350] sm:$0xff]
        %v343 = vld [vmem:[%s205 + $0x358] sm:$0xff]
        %v344 = vld [vmem:[%s205 + $0x360] sm:$0xff]
        %v345 = vld [vmem:[%s205 + $0x368] sm:$0xff]
        %v346 = vld [vmem:[%s205 + $0x370] sm:$0xff]
        %v347 = vld [vmem:[%s205 + $0x378] sm:$0xff]
        %v348 = vld [vmem:[%s205 + $0x380] sm:$0xff]
        %v349 = vld [vmem:[%s205 + $0x388] sm:$0xff]
        %v350 = vld [vmem:[%s205 + $0x390] sm:$0xff]
        %v351 = vld [vmem:[%s205 + $0x398] sm:$0xff]
        %v352 = vld [vmem:[%s205 + $0x3a0] sm:$0xff]
        %v353 = vld [vmem:[%s205 + $0x3a8] sm:$0xff]
        %v354 = vld [vmem:[%s205 + $0x3b0] sm:$0xff]
        %v355 = vld [vmem:[%s205 + $0x3b8] sm:$0xff]
        %v356 = vld [vmem:[%s205 + $0x3c0] sm:$0xff]
        %v357 = vld [vmem:[%s205 + $0x3c8] sm:$0xff]
        %v358 = vld [vmem:[%s205 + $0x3d0] sm:$0xff]
        %v359 = vld [vmem:[%s205 + $0x3d8] sm:$0xff]
        %v360 = vld [vmem:[%s205 + $0x3e0] sm:$0xff]
        %v361 = vld [vmem:[%s205 + $0x3e8] sm:$0xff]
        %v362 = vld [vmem:[%s205 + $0x3f0] sm:$0xff]
        %v363 = vld [vmem:[%s205 + $0x3f8] sm:$0xff]
        %v368 = vunpack.c.l.b16 %v232
        %v369 = vunpack.c.h.b16 %v232
        %v370 = vunpack.c.l.b16 %v233
        %v371 = vunpack.c.h.b16 %v233
        %v372 = vunpack.c.l.b16 %v234
        %v373 = vunpack.c.h.b16 %v234
        %v374 = vunpack.c.l.b16 %v235
        %v375 = vunpack.c.h.b16 %v235
        %v376 = vpack.c.b16 %v372, %v368
        %v377 = vpack.c.b16 %v373, %v369
        %v378 = vpack.c.b16 %v374, %v370
        %v379 = vpack.c.b16 %v375, %v371
        %v512 = vunpack.c.l.b16 %v236
        %v513 = vunpack.c.h.b16 %v236
        %v514 = vunpack.c.l.b16 %v237
        %v515 = vunpack.c.h.b16 %v237
        %v516 = vunpack.c.l.b16 %v238
        %v517 = vunpack.c.h.b16 %v238
        %v518 = vunpack.c.l.b16 %v239
        %v519 = vunpack.c.h.b16 %v239
        %v520 = vunpack.c.l.b16 %v240
        %v521 = vunpack.c.h.b16 %v240
        %v522 = vunpack.c.l.b16 %v241
        %v523 = vunpack.c.h.b16 %v241
        %v524 = vunpack.c.l.b16 %v242
        %v525 = vunpack.c.h.b16 %v242
        %v526 = vunpack.c.l.b16 %v243
        %v527 = vunpack.c.h.b16 %v243
        %v528 = vunpack.c.l.b16 %v244
        %v529 = vunpack.c.h.b16 %v244
        %v530 = vunpack.c.l.b16 %v245
        %v531 = vunpack.c.h.b16 %v245
        %v532 = vunpack.c.l.b16 %v246
        %v533 = vunpack.c.h.b16 %v246
        %v534 = vunpack.c.l.b16 %v247
        %v535 = vunpack.c.h.b16 %v247
        %v536 = vunpack.c.l.b16 %v248
        %v537 = vunpack.c.h.b16 %v248
        %v538 = vunpack.c.l.b16 %v249
        %v539 = vunpack.c.h.b16 %v249
        %v540 = vunpack.c.l.b16 %v250
        %v541 = vunpack.c.h.b16 %v250
        %v542 = vunpack.c.l.b16 %v251
        %v543 = vunpack.c.h.b16 %v251
        %v544 = vunpack.c.l.b16 %v252
        %v545 = vunpack.c.h.b16 %v252
        %v546 = vunpack.c.l.b16 %v253
        %v547 = vunpack.c.h.b16 %v253
        %v548 = vunpack.c.l.b16 %v254
        %v549 = vunpack.c.h.b16 %v254
        %v550 = vunpack.c.l.b16 %v255
        %v551 = vunpack.c.h.b16 %v255
        %v552 = vunpack.c.l.b16 %v256
        %v553 = vunpack.c.h.b16 %v256
        %v554 = vunpack.c.l.b16 %v257
        %v555 = vunpack.c.h.b16 %v257
        %v556 = vunpack.c.l.b16 %v258
        %v557 = vunpack.c.h.b16 %v258
        %v558 = vunpack.c.l.b16 %v259
        %v559 = vunpack.c.h.b16 %v259
        %v560 = vunpack.c.l.b16 %v260
        %v561 = vunpack.c.h.b16 %v260
        %v562 = vunpack.c.l.b16 %v261
        %v563 = vunpack.c.h.b16 %v261
        %v564 = vunpack.c.l.b16 %v262
        %v565 = vunpack.c.h.b16 %v262
        %v566 = vunpack.c.l.b16 %v263
        %v567 = vunpack.c.h.b16 %v263
        %v568 = vunpack.c.l.b16 %v264
        %v569 = vunpack.c.h.b16 %v264
        %v570 = vunpack.c.l.b16 %v265
        %v571 = vunpack.c.h.b16 %v265
        %v572 = vunpack.c.l.b16 %v266
        %v573 = vunpack.c.h.b16 %v266
        %v574 = vunpack.c.l.b16 %v267
        %v575 = vunpack.c.h.b16 %v267
        %v576 = vunpack.c.l.b16 %v268
        %v577 = vunpack.c.h.b16 %v268
        %v578 = vunpack.c.l.b16 %v269
        %v579 = vunpack.c.h.b16 %v269
        %v580 = vunpack.c.l.b16 %v270
        %v581 = vunpack.c.h.b16 %v270
        %v582 = vunpack.c.l.b16 %v271
        %v583 = vunpack.c.h.b16 %v271
        %v584 = vunpack.c.l.b16 %v272
        %v585 = vunpack.c.h.b16 %v272
        %v586 = vunpack.c.l.b16 %v273
        %v587 = vunpack.c.h.b16 %v273
        %v588 = vunpack.c.l.b16 %v274
        %v589 = vunpack.c.h.b16 %v274
        %v590 = vunpack.c.l.b16 %v275
        %v591 = vunpack.c.h.b16 %v275
        %v592 = vunpack.c.l.b16 %v276
        %v593 = vunpack.c.h.b16 %v276
        %v594 = vunpack.c.l.b16 %v277
        %v595 = vunpack.c.h.b16 %v277
        %v596 = vunpack.c.l.b16 %v278
        %v597 = vunpack.c.h.b16 %v278
        %v598 = vunpack.c.l.b16 %v279
        %v599 = vunpack.c.h.b16 %v279
        %v600 = vunpack.c.l.b16 %v280
        %v601 = vunpack.c.h.b16 %v280
        %v602 = vunpack.c.l.b16 %v281
        %v603 = vunpack.c.h.b16 %v281
        %v604 = vunpack.c.l.b16 %v282
        %v605 = vunpack.c.h.b16 %v282
        %v606 = vunpack.c.l.b16 %v283
        %v607 = vunpack.c.h.b16 %v283
        %v608 = vunpack.c.l.b16 %v284
        %v609 = vunpack.c.h.b16 %v284
        %v610 = vunpack.c.l.b16 %v285
        %v611 = vunpack.c.h.b16 %v285
        %v612 = vunpack.c.l.b16 %v286
        %v613 = vunpack.c.h.b16 %v286
        %v614 = vunpack.c.l.b16 %v287
        %v615 = vunpack.c.h.b16 %v287
        %v616 = vunpack.c.l.b16 %v288
        %v617 = vunpack.c.h.b16 %v288
        %v618 = vunpack.c.l.b16 %v289
        %v619 = vunpack.c.h.b16 %v289
        %v620 = vunpack.c.l.b16 %v290
        %v621 = vunpack.c.h.b16 %v290
        %v622 = vunpack.c.l.b16 %v291
        %v623 = vunpack.c.h.b16 %v291
        %v624 = vunpack.c.l.b16 %v292
        %v625 = vunpack.c.h.b16 %v292
        %v626 = vunpack.c.l.b16 %v293
        %v627 = vunpack.c.h.b16 %v293
        %v628 = vunpack.c.l.b16 %v294
        %v629 = vunpack.c.h.b16 %v294
        %v630 = vunpack.c.l.b16 %v295
        %v631 = vunpack.c.h.b16 %v295
        %v632 = vunpack.c.l.b16 %v296
        %v633 = vunpack.c.h.b16 %v296
        %v634 = vunpack.c.l.b16 %v297
        %v635 = vunpack.c.h.b16 %v297
        %v636 = vunpack.c.l.b16 %v298
        %v637 = vunpack.c.h.b16 %v298
        %v638 = vunpack.c.l.b16 %v299
        %v639 = vunpack.c.h.b16 %v299
        %v640 = vunpack.c.l.b16 %v300
        %v641 = vunpack.c.h.b16 %v300
        %v642 = vunpack.c.l.b16 %v301
        %v643 = vunpack.c.h.b16 %v301
        %v644 = vunpack.c.l.b16 %v302
        %v645 = vunpack.c.h.b16 %v302
        %v646 = vunpack.c.l.b16 %v303
        %v647 = vunpack.c.h.b16 %v303
        %v648 = vunpack.c.l.b16 %v304
        %v649 = vunpack.c.h.b16 %v304
        %v650 = vunpack.c.l.b16 %v305
        %v651 = vunpack.c.h.b16 %v305
        %v652 = vunpack.c.l.b16 %v306
        %v653 = vunpack.c.h.b16 %v306
        %v654 = vunpack.c.l.b16 %v307
        %v655 = vunpack.c.h.b16 %v307
        %v656 = vunpack.c.l.b16 %v308
        %v657 = vunpack.c.h.b16 %v308
        %v658 = vunpack.c.l.b16 %v309
        %v659 = vunpack.c.h.b16 %v309
        %v660 = vunpack.c.l.b16 %v310
        %v661 = vunpack.c.h.b16 %v310
        %v662 = vunpack.c.l.b16 %v311
        %v663 = vunpack.c.h.b16 %v311
        %v664 = vunpack.c.l.b16 %v312
        %v665 = vunpack.c.h.b16 %v312
        %v666 = vunpack.c.l.b16 %v313
        %v667 = vunpack.c.h.b16 %v313
        %v668 = vunpack.c.l.b16 %v314
        %v669 = vunpack.c.h.b16 %v314
        %v670 = vunpack.c.l.b16 %v315
        %v671 = vunpack.c.h.b16 %v315
        %v672 = vunpack.c.l.b16 %v316
        %v673 = vunpack.c.h.b16 %v316
        %v674 = vunpack.c.l.b16 %v317
        %v675 = vunpack.c.h.b16 %v317
        %v676 = vunpack.c.l.b16 %v318
        %v677 = vunpack.c.h.b16 %v318
        %v678 = vunpack.c.l.b16 %v319
        %v679 = vunpack.c.h.b16 %v319
        %v680 = vunpack.c.l.b16 %v320
        %v681 = vunpack.c.h.b16 %v320
        %v682 = vunpack.c.l.b16 %v321
        %v683 = vunpack.c.h.b16 %v321
        %v684 = vunpack.c.l.b16 %v322
        %v685 = vunpack.c.h.b16 %v322
        %v686 = vunpack.c.l.b16 %v323
        %v687 = vunpack.c.h.b16 %v323
        %v688 = vunpack.c.l.b16 %v324
        %v689 = vunpack.c.h.b16 %v324
        %v690 = vunpack.c.l.b16 %v325
        %v691 = vunpack.c.h.b16 %v325
        %v692 = vunpack.c.l.b16 %v326
        %v693 = vunpack.c.h.b16 %v326
        %v694 = vunpack.c.l.b16 %v327
        %v695 = vunpack.c.h.b16 %v327
        %v696 = vunpack.c.l.b16 %v328
        %v697 = vunpack.c.h.b16 %v328
        %v698 = vunpack.c.l.b16 %v329
        %v699 = vunpack.c.h.b16 %v329
        %v700 = vunpack.c.l.b16 %v330
        %v701 = vunpack.c.h.b16 %v330
        %v702 = vunpack.c.l.b16 %v331
        %v703 = vunpack.c.h.b16 %v331
        %v704 = vunpack.c.l.b16 %v332
        %v705 = vunpack.c.h.b16 %v332
        %v706 = vunpack.c.l.b16 %v333
        %v707 = vunpack.c.h.b16 %v333
        %v708 = vunpack.c.l.b16 %v334
        %v709 = vunpack.c.h.b16 %v334
        %v710 = vunpack.c.l.b16 %v335
        %v711 = vunpack.c.h.b16 %v335
        %v712 = vunpack.c.l.b16 %v336
        %v713 = vunpack.c.h.b16 %v336
        %v714 = vunpack.c.l.b16 %v337
        %v715 = vunpack.c.h.b16 %v337
        %v716 = vunpack.c.l.b16 %v338
        %v717 = vunpack.c.h.b16 %v338
        %v718 = vunpack.c.l.b16 %v339
        %v719 = vunpack.c.h.b16 %v339
        %v720 = vunpack.c.l.b16 %v340
        %v721 = vunpack.c.h.b16 %v340
        %v722 = vunpack.c.l.b16 %v341
        %v723 = vunpack.c.h.b16 %v341
        %v724 = vunpack.c.l.b16 %v342
        %v725 = vunpack.c.h.b16 %v342
        %v726 = vunpack.c.l.b16 %v343
        %v727 = vunpack.c.h.b16 %v343
        %v728 = vunpack.c.l.b16 %v344
        %v729 = vunpack.c.h.b16 %v344
        %v730 = vunpack.c.l.b16 %v345
        %v731 = vunpack.c.h.b16 %v345
        %v732 = vunpack.c.l.b16 %v346
        %v733 = vunpack.c.h.b16 %v346
        %v734 = vunpack.c.l.b16 %v347
        %v735 = vunpack.c.h.b16 %v347
        %v736 = vunpack.c.l.b16 %v348
        %v737 = vunpack.c.h.b16 %v348
        %v738 = vunpack.c.l.b16 %v349
        %v739 = vunpack.c.h.b16 %v349
        %v740 = vunpack.c.l.b16 %v350
        %v741 = vunpack.c.h.b16 %v350
        %v742 = vunpack.c.l.b16 %v351
        %v743 = vunpack.c.h.b16 %v351
        %v744 = vunpack.c.l.b16 %v352
        %v745 = vunpack.c.h.b16 %v352
        %v746 = vunpack.c.l.b16 %v353
        %v747 = vunpack.c.h.b16 %v353
        %v748 = vunpack.c.l.b16 %v354
        %v749 = vunpack.c.h.b16 %v354
        %v750 = vunpack.c.l.b16 %v355
        %v751 = vunpack.c.h.b16 %v355
        %v752 = vunpack.c.l.b16 %v356
        %v753 = vunpack.c.h.b16 %v356
        %v754 = vunpack.c.l.b16 %v357
        %v755 = vunpack.c.h.b16 %v357
        %v756 = vunpack.c.l.b16 %v358
        %v757 = vunpack.c.h.b16 %v358
        %v758 = vunpack.c.l.b16 %v359
        %v759 = vunpack.c.h.b16 %v359
        %v760 = vunpack.c.l.b16 %v360
        %v761 = vunpack.c.h.b16 %v360
        %v762 = vunpack.c.l.b16 %v361
        %v763 = vunpack.c.h.b16 %v361
        %v764 = vunpack.c.l.b16 %v362
        %v765 = vunpack.c.h.b16 %v362
        %v766 = vunpack.c.l.b16 %v363
        %v767 = vunpack.c.h.b16 %v363
        %v768 = vpack.c.b16 %v516, %v512
        %v769 = vpack.c.b16 %v517, %v513
        %v770 = vpack.c.b16 %v518, %v514
        %v771 = vpack.c.b16 %v519, %v515
        %v772 = vpack.c.b16 %v524, %v520
        %v773 = vpack.c.b16 %v525, %v521
        %v774 = vpack.c.b16 %v526, %v522
        %v775 = vpack.c.b16 %v527, %v523
        %v776 = vpack.c.b16 %v532, %v528
        %v777 = vpack.c.b16 %v533, %v529
        %v778 = vpack.c.b16 %v534, %v530
        %v779 = vpack.c.b16 %v535, %v531
        %v780 = vpack.c.b16 %v540, %v536
        %v781 = vpack.c.b16 %v541, %v537
        %v782 = vpack.c.b16 %v542, %v538
        %v783 = vpack.c.b16 %v543, %v539
        %v784 = vpack.c.b16 %v548, %v544
        %v785 = vpack.c.b16 %v549, %v545
        %v786 = vpack.c.b16 %v550, %v546
        %v787 = vpack.c.b16 %v551, %v547
        %v788 = vpack.c.b16 %v556, %v552
        %v789 = vpack.c.b16 %v557, %v553
        %v790 = vpack.c.b16 %v558, %v554
        %v791 = vpack.c.b16 %v559, %v555
        %v792 = vpack.c.b16 %v564, %v560
        %v793 = vpack.c.b16 %v565, %v561
        %v794 = vpack.c.b16 %v566, %v562
        %v795 = vpack.c.b16 %v567, %v563
        %v796 = vpack.c.b16 %v572, %v568
        %v797 = vpack.c.b16 %v573, %v569
        %v798 = vpack.c.b16 %v574, %v570
        %v799 = vpack.c.b16 %v575, %v571
        %v800 = vpack.c.b16 %v580, %v576
        %v801 = vpack.c.b16 %v581, %v577
        %v802 = vpack.c.b16 %v582, %v578
        %v803 = vpack.c.b16 %v583, %v579
        %v804 = vpack.c.b16 %v588, %v584
        %v805 = vpack.c.b16 %v589, %v585
        %v806 = vpack.c.b16 %v590, %v586
        %v807 = vpack.c.b16 %v591, %v587
        %v808 = vpack.c.b16 %v596, %v592
        %v809 = vpack.c.b16 %v597, %v593
        %v810 = vpack.c.b16 %v598, %v594
        %v811 = vpack.c.b16 %v599, %v595
        %v812 = vpack.c.b16 %v604, %v600
        %v813 = vpack.c.b16 %v605, %v601
        %v814 = vpack.c.b16 %v606, %v602
        %v815 = vpack.c.b16 %v607, %v603
        %v816 = vpack.c.b16 %v612, %v608
        %v817 = vpack.c.b16 %v613, %v609
        %v818 = vpack.c.b16 %v614, %v610
        %v819 = vpack.c.b16 %v615, %v611
        %v820 = vpack.c.b16 %v620, %v616
        %v821 = vpack.c.b16 %v621, %v617
        %v822 = vpack.c.b16 %v622, %v618
        %v823 = vpack.c.b16 %v623, %v619
        %v824 = vpack.c.b16 %v628, %v624
        %v825 = vpack.c.b16 %v629, %v625
        %v826 = vpack.c.b16 %v630, %v626
        %v827 = vpack.c.b16 %v631, %v627
        %v828 = vpack.c.b16 %v636, %v632
        %v829 = vpack.c.b16 %v637, %v633
        %v830 = vpack.c.b16 %v638, %v634
        %v831 = vpack.c.b16 %v639, %v635
        %v832 = vpack.c.b16 %v644, %v640
        %v833 = vpack.c.b16 %v645, %v641
        %v834 = vpack.c.b16 %v646, %v642
        %v835 = vpack.c.b16 %v647, %v643
        %v836 = vpack.c.b16 %v652, %v648
        %v837 = vpack.c.b16 %v653, %v649
        %v838 = vpack.c.b16 %v654, %v650
        %v839 = vpack.c.b16 %v655, %v651
        %v840 = vpack.c.b16 %v660, %v656
        %v841 = vpack.c.b16 %v661, %v657
        %v842 = vpack.c.b16 %v662, %v658
        %v843 = vpack.c.b16 %v663, %v659
        %v844 = vpack.c.b16 %v668, %v664
        %v845 = vpack.c.b16 %v669, %v665
        %v846 = vpack.c.b16 %v670, %v666
        %v847 = vpack.c.b16 %v671, %v667
        %v848 = vpack.c.b16 %v676, %v672
        %v849 = vpack.c.b16 %v677, %v673
        %v850 = vpack.c.b16 %v678, %v674
        %v851 = vpack.c.b16 %v679, %v675
        %v852 = vpack.c.b16 %v684, %v680
        %v853 = vpack.c.b16 %v685, %v681
        %v854 = vpack.c.b16 %v686, %v682
        %v855 = vpack.c.b16 %v687, %v683
        %v856 = vpack.c.b16 %v692, %v688
        %v857 = vpack.c.b16 %v693, %v689
        %v858 = vpack.c.b16 %v694, %v690
        %v859 = vpack.c.b16 %v695, %v691
        %v860 = vpack.c.b16 %v700, %v696
        %v861 = vpack.c.b16 %v701, %v697
        %v862 = vpack.c.b16 %v702, %v698
        %v863 = vpack.c.b16 %v703, %v699
        %v864 = vpack.c.b16 %v708, %v704
        %v865 = vpack.c.b16 %v709, %v705
        %v866 = vpack.c.b16 %v710, %v706
        %v867 = vpack.c.b16 %v711, %v707
        %v868 = vpack.c.b16 %v716, %v712
        %v869 = vpack.c.b16 %v717, %v713
        %v870 = vpack.c.b16 %v718, %v714
        %v871 = vpack.c.b16 %v719, %v715
        %v872 = vpack.c.b16 %v724, %v720
        %v873 = vpack.c.b16 %v725, %v721
        %v874 = vpack.c.b16 %v726, %v722
        %v875 = vpack.c.b16 %v727, %v723
        %v876 = vpack.c.b16 %v732, %v728
        %v877 = vpack.c.b16 %v733, %v729
        %v878 = vpack.c.b16 %v734, %v730
        %v879 = vpack.c.b16 %v735, %v731
        %v880 = vpack.c.b16 %v740, %v736
        %v881 = vpack.c.b16 %v741, %v737
        %v882 = vpack.c.b16 %v742, %v738
        %v883 = vpack.c.b16 %v743, %v739
        %v884 = vpack.c.b16 %v748, %v744
        %v885 = vpack.c.b16 %v749, %v745
        %v886 = vpack.c.b16 %v750, %v746
        %v887 = vpack.c.b16 %v751, %v747
        %v888 = vpack.c.b16 %v756, %v752
        %v889 = vpack.c.b16 %v757, %v753
        %v890 = vpack.c.b16 %v758, %v754
        %v891 = vpack.c.b16 %v759, %v755
        %v892 = vpack.c.b16 %v764, %v760
        %v893 = vpack.c.b16 %v765, %v761
        %v894 = vpack.c.b16 %v766, %v762
        %v895 = vpack.c.b16 %v767, %v763
        %1024 = vmatprep.subr.bf16.mxu0 %v769
        %1025 = vmatpush1.bf16.msra.mxu0 %v768
        %1026 = vmatprep.subr.bf16.mxu0 %v773
        %1027 = vmatpush1.bf16.msra.mxu0 %v772
        %1028 = vmatprep.subr.bf16.mxu0 %v777
        %1029 = vmatpush1.bf16.msra.mxu0 %v776
        %1030 = vmatprep.subr.bf16.mxu0 %v781
        %1031 = vmatpush1.bf16.msra.mxu0 %v780
        %1032 = vmatprep.subr.bf16.mxu0 %v785
        %1033 = vmatpush1.bf16.msra.mxu0 %v784
        %1034 = vmatprep.subr.bf16.mxu0 %v789
        %1035 = vmatpush1.bf16.msra.mxu0 %v788
        %1036 = vmatprep.subr.bf16.mxu0 %v793
        %1037 = vmatpush1.bf16.msra.mxu0 %v792
        %1038 = vmatprep.subr.bf16.mxu0 %v797
        %1039 = vmatpush1.bf16.msra.mxu0 %v796
        %1040 = vmatprep.subr.bf16.mxu0 %v801
        %1041 = vmatpush1.bf16.msra.mxu0 %v800
        %1042 = vmatprep.subr.bf16.mxu0 %v805
        %1043 = vmatpush1.bf16.msra.mxu0 %v804
        %1044 = vmatprep.subr.bf16.mxu0 %v809
        %1045 = vmatpush1.bf16.msra.mxu0 %v808
        %1046 = vmatprep.subr.bf16.mxu0 %v813
        %1047 = vmatpush1.bf16.msra.mxu0 %v812
        %1048 = vmatprep.subr.bf16.mxu0 %v817
        %1049 = vmatpush1.bf16.msra.mxu0 %v816
        %1050 = vmatprep.subr.bf16.mxu0 %v821
        %1051 = vmatpush1.bf16.msra.mxu0 %v820
        %1052 = vmatprep.subr.bf16.mxu0 %v825
        %1053 = vmatpush1.bf16.msra.mxu0 %v824
        %1054 = vmatprep.subr.bf16.mxu0 %v829
        %1055 = vmatpush1.bf16.msra.mxu0 %v828
        %1056 = vmatprep.mubr.bf16.mxu0 %v377
        %1057 = vmatmul.mubr.bf16.gmra.mrb[0].mxu0 %v376
        %v1058 = vpop.f32.mrb[0].mxu0
        %v1059 = vadd.f32 0.0, %v1058
        %v1060 = vpop.f32.mrb[0].mxu0
        %v1061 = vadd.f32 0.0, %v1060
        %v1062 = vpop.f32.mrb[0].mxu0
        %v1063 = vadd.f32 0.0, %v1062
        %v1064 = vpop.f32.mrb[0].mxu0
        %v1065 = vadd.f32 0.0, %v1064
        %1066 = vdwg.mxu0
        %1067 = vmatprep.subr.bf16.mxu0 %v833
        %1068 = vmatpush1.bf16.msra.mxu0 %v832
        %1069 = vmatprep.subr.bf16.mxu0 %v837
        %1070 = vmatpush1.bf16.msra.mxu0 %v836
        %1071 = vmatprep.subr.bf16.mxu0 %v841
        %1072 = vmatpush1.bf16.msra.mxu0 %v840
        %1073 = vmatprep.subr.bf16.mxu0 %v845
        %1074 = vmatpush1.bf16.msra.mxu0 %v844
        %1075 = vmatprep.subr.bf16.mxu0 %v849
        %1076 = vmatpush1.bf16.msra.mxu0 %v848
        %1077 = vmatprep.subr.bf16.mxu0 %v853
        %1078 = vmatpush1.bf16.msra.mxu0 %v852
        %1079 = vmatprep.subr.bf16.mxu0 %v857
        %1080 = vmatpush1.bf16.msra.mxu0 %v856
        %1081 = vmatprep.subr.bf16.mxu0 %v861
        %1082 = vmatpush1.bf16.msra.mxu0 %v860
        %1083 = vmatprep.subr.bf16.mxu0 %v865
        %1084 = vmatpush1.bf16.msra.mxu0 %v864
        %1085 = vmatprep.subr.bf16.mxu0 %v869
        %1086 = vmatpush1.bf16.msra.mxu0 %v868
        %1087 = vmatprep.subr.bf16.mxu0 %v873
        %1088 = vmatpush1.bf16.msra.mxu0 %v872
        %1089 = vmatprep.subr.bf16.mxu0 %v877
        %1090 = vmatpush1.bf16.msra.mxu0 %v876
        %1091 = vmatprep.subr.bf16.mxu0 %v881
        %1092 = vmatpush1.bf16.msra.mxu0 %v880
        %1093 = vmatprep.subr.bf16.mxu0 %v885
        %1094 = vmatpush1.bf16.msra.mxu0 %v884
        %1095 = vmatprep.subr.bf16.mxu0 %v889
        %1096 = vmatpush1.bf16.msra.mxu0 %v888
        %1097 = vmatprep.subr.bf16.mxu0 %v893
        %1098 = vmatpush1.bf16.msra.mxu0 %v892
        %1099 = vmatprep.mubr.bf16.mxu0 %v379
        %1100 = vmatmul.mubr.bf16.gmra.mrb[0].mxu0 %v378
        %v1101 = vpop.f32.mrb[0].mxu0
        %v1102 = vadd.f32 %v1059, %v1101
        %v1103 = vpop.f32.mrb[0].mxu0
        %v1104 = vadd.f32 %v1061, %v1103
        %v1105 = vpop.f32.mrb[0].mxu0
        %v1106 = vadd.f32 %v1063, %v1105
        %v1107 = vpop.f32.mrb[0].mxu0
        %v1108 = vadd.f32 %v1065, %v1107
        %1109 = vdwg.mxu0
        %1110 = vmatprep.subr.bf16.mxu0 %v771
        %1111 = vmatpush1.bf16.msra.mxu0 %v770
        %1112 = vmatprep.subr.bf16.mxu0 %v775
        %1113 = vmatpush1.bf16.msra.mxu0 %v774
        %1114 = vmatprep.subr.bf16.mxu0 %v779
        %1115 = vmatpush1.bf16.msra.mxu0 %v778
        %1116 = vmatprep.subr.bf16.mxu0 %v783
        %1117 = vmatpush1.bf16.msra.mxu0 %v782
        %1118 = vmatprep.subr.bf16.mxu0 %v787
        %1119 = vmatpush1.bf16.msra.mxu0 %v786
        %1120 = vmatprep.subr.bf16.mxu0 %v791
        %1121 = vmatpush1.bf16.msra.mxu0 %v790
        %1122 = vmatprep.subr.bf16.mxu0 %v795
        %1123 = vmatpush1.bf16.msra.mxu0 %v794
        %1124 = vmatprep.subr.bf16.mxu0 %v799
        %1125 = vmatpush1.bf16.msra.mxu0 %v798
        %1126 = vmatprep.subr.bf16.mxu0 %v803
        %1127 = vmatpush1.bf16.msra.mxu0 %v802
        %1128 = vmatprep.subr.bf16.mxu0 %v807
        %1129 = vmatpush1.bf16.msra.mxu0 %v806
        %1130 = vmatprep.subr.bf16.mxu0 %v811
        %1131 = vmatpush1.bf16.msra.mxu0 %v810
        %1132 = vmatprep.subr.bf16.mxu0 %v815
        %1133 = vmatpush1.bf16.msra.mxu0 %v814
        %1134 = vmatprep.subr.bf16.mxu0 %v819
        %1135 = vmatpush1.bf16.msra.mxu0 %v818
        %1136 = vmatprep.subr.bf16.mxu0 %v823
        %1137 = vmatpush1.bf16.msra.mxu0 %v822
        %1138 = vmatprep.subr.bf16.mxu0 %v827
        %1139 = vmatpush1.bf16.msra.mxu0 %v826
        %1140 = vmatprep.subr.bf16.mxu0 %v831
        %1141 = vmatpush1.bf16.msra.mxu0 %v830
        %1142 = vmatprep.mubr.bf16.mxu0 %v377
        %1143 = vmatmul.mubr.bf16.gmra.mrb[0].mxu0 %v376
        %v1144 = vpop.f32.mrb[0].mxu0
        %v1145 = vadd.f32 0.0, %v1144
        %v1146 = vpop.f32.mrb[0].mxu0
        %v1147 = vadd.f32 0.0, %v1146
        %v1148 = vpop.f32.mrb[0].mxu0
        %v1149 = vadd.f32 0.0, %v1148
        %v1150 = vpop.f32.mrb[0].mxu0
        %v1151 = vadd.f32 0.0, %v1150
        %1152 = vdwg.mxu0
        %1153 = vmatprep.subr.bf16.mxu0 %v835
        %1154 = vmatpush1.bf16.msra.mxu0 %v834
        %1155 = vmatprep.subr.bf16.mxu0 %v839
        %1156 = vmatpush1.bf16.msra.mxu0 %v838
        %1157 = vmatprep.subr.bf16.mxu0 %v843
        %1158 = vmatpush1.bf16.msra.mxu0 %v842
        %1159 = vmatprep.subr.bf16.mxu0 %v847
        %1160 = vmatpush1.bf16.msra.mxu0 %v846
        %1161 = vmatprep.subr.bf16.mxu0 %v851
        %1162 = vmatpush1.bf16.msra.mxu0 %v850
        %1163 = vmatprep.subr.bf16.mxu0 %v855
        %1164 = vmatpush1.bf16.msra.mxu0 %v854
        %1165 = vmatprep.subr.bf16.mxu0 %v859
        %1166 = vmatpush1.bf16.msra.mxu0 %v858
        %1167 = vmatprep.subr.bf16.mxu0 %v863
        %1168 = vmatpush1.bf16.msra.mxu0 %v862
        %1169 = vmatprep.subr.bf16.mxu0 %v867
        %1170 = vmatpush1.bf16.msra.mxu0 %v866
        %1171 = vmatprep.subr.bf16.mxu0 %v871
        %1172 = vmatpush1.bf16.msra.mxu0 %v870
        %1173 = vmatprep.subr.bf16.mxu0 %v875
        %1174 = vmatpush1.bf16.msra.mxu0 %v874
        %1175 = vmatprep.subr.bf16.mxu0 %v879
        %1176 = vmatpush1.bf16.msra.mxu0 %v878
        %1177 = vmatprep.subr.bf16.mxu0 %v883
        %1178 = vmatpush1.bf16.msra.mxu0 %v882
        %1179 = vmatprep.subr.bf16.mxu0 %v887
        %1180 = vmatpush1.bf16.msra.mxu0 %v886
        %1181 = vmatprep.subr.bf16.mxu0 %v891
        %1182 = vmatpush1.bf16.msra.mxu0 %v890
        %1183 = vmatprep.subr.bf16.mxu0 %v895
        %1184 = vmatpush1.bf16.msra.mxu0 %v894
        %1185 = vmatprep.mubr.bf16.mxu0 %v379
        %1186 = vmatmul.mubr.bf16.gmra.mrb[0].mxu0 %v378
        %v1187 = vpop.f32.mrb[0].mxu0
        %v1188 = vadd.f32 %v1145, %v1187
        %v1189 = vpop.f32.mrb[0].mxu0
        %v1190 = vadd.f32 %v1147, %v1189
        %v1191 = vpop.f32.mrb[0].mxu0
        %v1192 = vadd.f32 %v1149, %v1191
        %v1193 = vpop.f32.mrb[0].mxu0
        %v1194 = vadd.f32 %v1151, %v1193
        %1195 = vdwg.mxu0
        %v1196 = vadd.f32 %v224, %v1102
        %v1197 = vadd.f32 %v225, %v1104
        %v1198 = vadd.f32 %v226, %v1188
        %v1199 = vadd.f32 %v227, %v1190
        %v1200 = vadd.f32 %v228, %v1106
        %v1201 = vadd.f32 %v229, %v1108
        %v1202 = vadd.f32 %v230, %v1192
        %v1203 = vadd.f32 %v231, %v1194
        %1204 = vst [vmem:[#allocation2] sm:$0xff] %v1196
        %1205 = vst [vmem:[#allocation2 + $0x8] sm:$0xff] %v1197
        %1206 = vst [vmem:[#allocation2 + $0x10] sm:$0xff] %v1198
        %1207 = vst [vmem:[#allocation2 + $0x18] sm:$0xff] %v1199
        %1208 = vst [vmem:[#allocation2 + $0x20] sm:$0xff] %v1200
        %1209 = vst [vmem:[#allocation2 + $0x28] sm:$0xff] %v1201
        %1210 = vst [vmem:[#allocation2 + $0x30] sm:$0xff] %v1202
        %1211 = vst [vmem:[#allocation2 + $0x38] sm:$0xff] %v1203
        %p1212 = scmp.eq.s32.totalorder %s18, 7
        // Predicated region
        $region56: #{discriminator_forward.8} parent=46 // pred_check
          %p1213 = pneg %p1212
        $region57: #{discriminator_forward.8} parent=46 // pred_check_branch
          %1215 = sbr.rel (%p1213) target = $region59
        $region58: #{discriminator_forward.8} parent=46 // pred_region
          %v1216 = vld [vmem:[#allocation2] sm:$0xff]
          %v1217 = vld [vmem:[#allocation2 + $0x8] sm:$0xff]
          %v1218 = vld [vmem:[#allocation2 + $0x10] sm:$0xff]
          %v1219 = vld [vmem:[#allocation2 + $0x18] sm:$0xff]
          %v1220 = vld [vmem:[#allocation2 + $0x20] sm:$0xff]
          %v1221 = vld [vmem:[#allocation2 + $0x28] sm:$0xff]
          %v1222 = vld [vmem:[#allocation2 + $0x30] sm:$0xff]
          %v1223 = vld [vmem:[#allocation2 + $0x38] sm:$0xff]
          %v1224 = vlaneseq
          %v1225 = vshrl.u32 %v1224, 7
          %v1226 = vadd.s32 %v1225, 8
          %vm1227 = vcmp.lt.s32.totalorder %v1225, 9
          %vm1228 = vcmp.lt.s32.totalorder %v1226, 9
          %v1229 = vsel %vm1227, %v1216, 0.0
          %v1230 = vsel %vm1227, %v1217, 0.0
          %v1231 = vsel %vm1227, %v1218, 0.0
          %v1232 = vsel %vm1227, %v1219, 0.0
          %v1233 = vsel %vm1228, %v1220, 0.0
          %v1234 = vsel %vm1228, %v1221, 0.0
          %v1235 = vsel %vm1228, %v1222, 0.0
          %v1236 = vsel %vm1228, %v1223, 0.0
          %v1237 = vadd.f32 %v1229, %v1233
          %v1238 = vrot.slane %v1237, 4
          %v1239 = vadd.f32 %v1237, %v1238
          %v1240 = vrot.slane %v1239, 2
          %v1241 = vadd.f32 %v1239, %v1240
          %v1242 = vrot.slane %v1241, 1
          %v1243 = vadd.f32 %v1241, %v1242
          %v1244 = vadd.f32 %v1230, %v1234
          %v1245 = vrot.slane %v1244, 4
          %v1246 = vadd.f32 %v1244, %v1245
          %v1247 = vrot.slane %v1246, 2
          %v1248 = vadd.f32 %v1246, %v1247
          %v1249 = vrot.slane %v1248, 1
          %v1250 = vadd.f32 %v1248, %v1249
          %v1251 = vadd.f32 %v1231, %v1235
          %v1252 = vrot.slane %v1251, 4
          %v1253 = vadd.f32 %v1251, %v1252
          %v1254 = vrot.slane %v1253, 2
          %v1255 = vadd.f32 %v1253, %v1254
          %v1256 = vrot.slane %v1255, 1
          %v1257 = vadd.f32 %v1255, %v1256
          %v1258 = vadd.f32 %v1232, %v1236
          %v1259 = vrot.slane %v1258, 4
          %v1260 = vadd.f32 %v1258, %v1259
          %v1261 = vrot.slane %v1260, 2
          %v1262 = vadd.f32 %v1260, %v1261
          %v1263 = vrot.slane %v1262, 1
          %v1264 = vadd.f32 %v1262, %v1263
          %v1265 = vmul.f32 %v1243, 0.11111111
          %v1266 = vmul.f32 %v1250, 0.11111111
          %v1267 = vmul.f32 %v1257, 0.11111111
          %v1268 = vmul.f32 %v1264, 0.11111111
          %v1269 = vsub.f32 %v1216, %v1265
          %v1270 = vsub.f32 %v1217, %v1266
          %v1271 = vsub.f32 %v1218, %v1267
          %v1272 = vsub.f32 %v1219, %v1268
          %v1273 = vsub.f32 %v1220, %v1265
          %v1274 = vsub.f32 %v1221, %v1266
          %v1275 = vsub.f32 %v1222, %v1267
          %v1276 = vsub.f32 %v1223, %v1268
          %v1277 = vmul.f32 %v1269, %v1269
          %v1278 = vmul.f32 %v1270, %v1270
          %v1279 = vmul.f32 %v1271, %v1271
          %v1280 = vmul.f32 %v1272, %v1272
          %v1281 = vmul.f32 %v1273, %v1273
          %v1282 = vmul.f32 %v1274, %v1274
          %v1283 = vmul.f32 %v1275, %v1275
          %v1284 = vmul.f32 %v1276, %v1276
          %v1285 = vsel %vm1227, %v1277, 0.0
          %v1286 = vsel %vm1227, %v1278, 0.0
          %v1287 = vsel %vm1227, %v1279, 0.0
          %v1288 = vsel %vm1227, %v1280, 0.0
          %v1289 = vsel %vm1228, %v1281, 0.0
          %v1290 = vsel %vm1228, %v1282, 0.0
          %v1291 = vsel %vm1228, %v1283, 0.0
          %v1292 = vsel %vm1228, %v1284, 0.0
          %v1293 = vadd.f32 %v1285, %v1289
          %v1294 = vrot.slane %v1293, 4
          %v1295 = vadd.f32 %v1293, %v1294
          %v1296 = vrot.slane %v1295, 2
          %v1297 = vadd.f32 %v1295, %v1296
          %v1298 = vrot.slane %v1297, 1
          %v1299 = vadd.f32 %v1297, %v1298
          %v1300 = vadd.f32 %v1286, %v1290
          %v1301 = vrot.slane %v1300, 4
          %v1302 = vadd.f32 %v1300, %v1301
          %v1303 = vrot.slane %v1302, 2
          %v1304 = vadd.f32 %v1302, %v1303
          %v1305 = vrot.slane %v1304, 1
          %v1306 = vadd.f32 %v1304, %v1305
          %v1307 = vadd.f32 %v1287, %v1291
          %v1308 = vrot.slane %v1307, 4
          %v1309 = vadd.f32 %v1307, %v1308
          %v1310 = vrot.slane %v1309, 2
          %v1311 = vadd.f32 %v1309, %v1310
          %v1312 = vrot.slane %v1311, 1
          %v1313 = vadd.f32 %v1311, %v1312
          %v1314 = vadd.f32 %v1288, %v1292
          %v1315 = vrot.slane %v1314, 4
          %v1316 = vadd.f32 %v1314, %v1315
          %v1317 = vrot.slane %v1316, 2
          %v1318 = vadd.f32 %v1316, %v1317
          %v1319 = vrot.slane %v1318, 1
          %v1320 = vadd.f32 %v1318, %v1319
          %v1321 = vmul.f32 %v1299, 0.11111111
          %v1322 = vmul.f32 %v1306, 0.11111111
          %v1323 = vmul.f32 %v1313, 0.11111111
          %v1324 = vmul.f32 %v1320, 0.11111111
          %v1325 = vadd.f32 %v1321, 1e-05
          %v1326 = vadd.f32 %v1322, 1e-05
          %v1327 = vadd.f32 %v1323, 1e-05
          %v1328 = vadd.f32 %v1324, 1e-05
          %v1329 = vrsqrt.pop %v1325
          %v1330 = vrsqrt.pop %v1326
          %v1331 = vrsqrt.pop %v1327
          %v1332 = vrsqrt.pop %v1328
          %v1333 = vmul.f32 %v1269, %v1329
          %v1334 = vmul.f32 %v1270, %v1330
          %v1335 = vmul.f32 %v1271, %v1331
          %v1336 = vmul.f32 %v1272, %v1332
          %v1337 = vmul.f32 %v1273, %v1329
          %v1338 = vmul.f32 %v1274, %v1330
          %v1339 = vmul.f32 %v1275, %v1331
          %v1340 = vmul.f32 %v1276, %v1332
          %vm1341 = vcmp.gt.f32.partialorder %v1333, 0.0
          %vm1342 = vcmp.gt.f32.partialorder %v1334, 0.0
          %vm1343 = vcmp.gt.f32.partialorder %v1335, 0.0
          %vm1344 = vcmp.gt.f32.partialorder %v1336, 0.0
          %vm1345 = vcmp.gt.f32.partialorder %v1337, 0.0
          %vm1346 = vcmp.gt.f32.partialorder %v1338, 0.0
          %vm1347 = vcmp.gt.f32.partialorder %v1339, 0.0
          %vm1348 = vcmp.gt.f32.partialorder %v1340, 0.0
          %v1349 = vmul.f32 %v1333, 0.2
          %v1350 = vmul.f32 %v1334, 0.2
          %v1351 = vmul.f32 %v1335, 0.2
          %v1352 = vmul.f32 %v1336, 0.2
          %v1353 = vmul.f32 %v1337, 0.2
          %v1354 = vmul.f32 %v1338, 0.2
          %v1355 = vmul.f32 %v1339, 0.2
          %v1356 = vmul.f32 %v1340, 0.2
          %v1357 = vsel %vm1341, %v1333, %v1349
          %v1358 = vsel %vm1342, %v1334, %v1350
          %v1359 = vsel %vm1343, %v1335, %v1351
          %v1360 = vsel %vm1344, %v1336, %v1352
          %v1361 = vsel %vm1345, %v1337, %v1353
          %v1362 = vsel %vm1346, %v1338, %v1354
          %v1363 = vsel %vm1347, %v1339, %v1355
          %v1364 = vsel %vm1348, %v1340, %v1356
          %v1365 = vpack.c.bf16 %v1361, %v1357
          %v1366 = vpack.c.bf16 %v1362, %v1358
          %v1367 = vpack.c.bf16 %v1363, %v1359
          %v1368 = vpack.c.bf16 %v1364, %v1360
          %v1373 = vunpack.c.l.b16 %v1365
          %v1374 = vunpack.c.l.b16 %v1366
          %v1375 = vunpack.c.l.b16 %v1367
          %v1376 = vunpack.c.l.b16 %v1368
          %v1377 = vunpack.c.h.b16 %v1365
          %v1378 = vunpack.c.h.b16 %v1366
          %v1379 = vunpack.c.h.b16 %v1367
          %v1380 = vunpack.c.h.b16 %v1368
          %v1381 = vpack.c.b16 %v1374, %v1373
          %v1382 = vpack.c.b16 %v1376, %v1375
          %v1383 = vpack.c.b16 %v1378, %v1377
          %v1384 = vpack.c.b16 %v1380, %v1379
          %1389 = vst [vmem:[%s211] sm:$0xff] %v1381
          %1390 = vst [vmem:[%s211 + $0x8] sm:$0xff] %v1382
          %1391 = vst [vmem:[%s211 + $0x10] sm:$0xff] %v1383
          %1392 = vst [vmem:[%s211 + $0x18] sm:$0xff] %v1384
        $region59: #{discriminator_forward.8} parent=46 // pred_fallthru
          _
        %p1393 = scmp.lt.s32.totalorder %s17, 1
        %s1394 = scalar_select %p1393, %s17, 1
        %s1395 = smul.addr %s1394, 8
        %s1396 = smul.addr %s1395, 4
        %s1397 = scalar_lea.vmem %s2, %s1396
        // Predicated region
        $region60: #{discriminator_forward.8} parent=46 // pred_check
          %p1398 = pneg %p97
        $region61: #{discriminator_forward.8} parent=46 // pred_check_branch
          %1400 = sbr.rel (%p1398) target = $region63
        $region62: #{discriminator_forward.8} parent=46 // pred_region
          _
        $region63: #{discriminator_forward.8} parent=46 // pred_fallthru
          _
      $region47: #{discriminator_forward.8} parent=5 // pred_fallthru
        _
      %p1401 = scmp.le.s32.totalorder 2, %s8
      // Predicated region
      $region64: #{discriminator_forward.8} parent=5 // pred_check
        %p1402 = pneg %p1401
      $region65: #{discriminator_forward.8} parent=5 // pred_check_branch
        %1404 = sbr.rel (%p1402) target = $region67
      $region66: #{discriminator_forward.8} parent=5 // pred_region
        %s1405 = ssub.s32 %s8, 2
        // Predicated region
        $region68: #{discriminator_forward.8} parent=66 // pred_check
          %p1406 = pneg %p103
        $region69: #{discriminator_forward.8} parent=66 // pred_check_branch
          %1408 = sbr.rel (%p1406) target = $region71
        $region70: #{discriminator_forward.8} parent=66 // pred_region
          %p1409 = scmp.lt.s32.totalorder %s19, 1
          %s1410 = scalar_select %p1409, %s19, 1
          %s1411 = smul.addr %s1410, 8
          %s1412 = smul.addr %s1411, 4
          %s1413 = scalar_lea.vmem %s2, %s1412
        $region71: #{discriminator_forward.8} parent=66 // pred_fallthru
          _
      $region67: #{discriminator_forward.8} parent=5 // pred_fallthru
        _
    $region6: #{discriminator_forward.8} parent=1 // loop_footer
      %s12 = sadd.s32 1, %s8
    $region7: #{discriminator_forward.8} parent=1 // loop_footer_branch
      %7 = sbr.rel target = $region3
    $region8: #{discriminator_forward.8} parent=1 // loop_exit
      _

// kernel: discriminator_forward.9
$region0: #{discriminator_forward.9}
  #allocation0 [shape = 'u32[]', space=smem, size = 0x4, offset = 0x4, fixed_abs, tag = 'smem constant byte address 0x4 - core index']
  #allocation1 [shape = 'u32[144,128]{1,0:T(1,128)}', space=vmem, size = 0x12000, scoped, tag = 'internal scratch']
  #allocation2 [shape = 'f32[1,1]{1,0:T(1,128)S(1)}', space=vmem, size = 0x200, scoped, tag = 'scoped memory for discriminator_forward.9']
  %s0 = inlined_call_operand.vmem [shape: f32[2,16,512], index: 0, kind: input, shape index: {}]
  %s1 = inlined_call_operand.vmem [shape: f32[16,512], index: 1, kind: input, shape index: {}]
  %s2 = inlined_call_operand.<no memory space> [shape: f32[1,1], index: 2, kind: input, shape index: {}]
  %s3 = inlined_call_operand.vmem [shape: f32[2,1], index: 3, kind: output, shape index: {}]
  %s4 = sld [smem:[#allocation0]]
  $region22: #{discriminator_forward.9} parent=0
    _
  %s6 = ssub.s32 1, %s4
  %s7 = scalar_select 0, %s6, %s4
  %v8 = vstv %s2
  %9 = vst [vmem:[#allocation2] sm:$0x1] %v8
  // Predicated region
  $region2: #{discriminator_forward.9} parent=0 // pred_check
    _
  $region3: #{discriminator_forward.9} parent=0 // pred_check_branch
    %11 = sbr.rel (0) target = $region5
  $region4: #{discriminator_forward.9} parent=0 // pred_region
    _
  $region5: #{discriminator_forward.9} parent=0 // pred_fallthru
    _
  // Predicated region
  $region6: #{discriminator_forward.9} parent=0 // pred_check
    _
  $region7: #{discriminator_forward.9} parent=0 // pred_check_branch
    %13 = sbr.rel (0) target = $region9
  $region8: #{discriminator_forward.9} parent=0 // pred_region
    _
  $region9: #{discriminator_forward.9} parent=0 // pred_fallthru
    _
  // Predicated region
  $region10: #{discriminator_forward.9} parent=0 // pred_check
    _
  $region11: #{discriminator_forward.9} parent=0 // pred_check_branch
    %15 = sbr.rel (0) target = $region13
  $region12: #{discriminator_forward.9} parent=0 // pred_region
    _
  $region13: #{discriminator_forward.9} parent=0 // pred_fallthru
    _
  %v16 = vld [vmem:[%s0] sm:$0xff]
  %v17 = vld [vmem:[%s0 + $0x8] sm:$0xff]
  %v18 = vld [vmem:[%s0 + $0x10] sm:$0xff]
  %v19 = vld [vmem:[%s0 + $0x18] sm:$0xff]
  %v20 = vld [vmem:[%s0 + $0x20] sm:$0xff]
  %v21 = vld [vmem:[%s0 + $0x28] sm:$0xff]
  %v22 = vld [vmem:[%s0 + $0x30] sm:$0xff]
  %v23 = vld [vmem:[%s0 + $0x38] sm:$0xff]
  %v24 = vld [vmem:[%s0 + $0x40] sm:$0xff]
  %v25 = vld [vmem:[%s0 + $0x48] sm:$0xff]
  %v26 = vld [vmem:[%s0 + $0x50] sm:$0xff]
  %v27 = vld [vmem:[%s0 + $0x58] sm:$0xff]
  %v28 = vld [vmem:[%s0 + $0x60] sm:$0xff]
  %v29 = vld [vmem:[%s0 + $0x68] sm:$0xff]
  %v30 = vld [vmem:[%s0 + $0x70] sm:$0xff]
  %v31 = vld [vmem:[%s0 + $0x78] sm:$0xff]
  %v32 = vld [vmem:[%s1] sm:$0xff]
  %v33 = vld [vmem:[%s1 + $0x8] sm:$0xff]
  %v34 = vld [vmem:[%s1 + $0x10] sm:$0xff]
  %v35 = vld [vmem:[%s1 + $0x18] sm:$0xff]
  %v36 = vld [vmem:[%s1 + $0x20] sm:$0xff]
  %v37 = vld [vmem:[%s1 + $0x28] sm:$0xff]
  %v38 = vld [vmem:[%s1 + $0x30] sm:$0xff]
  %v39 = vld [vmem:[%s1 + $0x38] sm:$0xff]
  %v40 = vmul.f32 %v16, %v32
  %v41 = vmul.f32 %v17, %v33
  %v42 = vmul.f32 %v18, %v34
  %v43 = vmul.f32 %v19, %v35
  %v44 = vmul.f32 %v20, %v36
  %v45 = vmul.f32 %v21, %v37
  %v46 = vmul.f32 %v22, %v38
  %v47 = vmul.f32 %v23, %v39
  %v48 = vmul.f32 %v24, %v32
  %v49 = vmul.f32 %v25, %v33
  %v50 = vmul.f32 %v26, %v34
  %v51 = vmul.f32 %v27, %v35
  %v52 = vmul.f32 %v28, %v36
  %v53 = vmul.f32 %v29, %v37
  %v54 = vmul.f32 %v30, %v38
  %v55 = vmul.f32 %v31, %v39
  %v56 = vadd.f32 %v40, %v41
  %v57 = vadd.f32 %v56, %v42
  %v58 = vadd.f32 %v57, %v43
  %59 = vadd.xlane.f32.xlu0 %v58
  %v60 = vpop.xlane.xlu0 %59
  %v61 = vadd.f32 %v44, %v45
  %v62 = vadd.f32 %v61, %v46
  %v63 = vadd.f32 %v62, %v47
  %64 = vadd.xlane.f32.xlu0 %v63
  %v65 = vpop.xlane.xlu0 %64
  %v66 = vadd.f32 %v48, %v49
  %v67 = vadd.f32 %v66, %v50
  %v68 = vadd.f32 %v67, %v51
  %69 = vadd.xlane.f32.xlu0 %v68
  %v70 = vpop.xlane.xlu0 %69
  %v71 = vadd.f32 %v52, %v53
  %v72 = vadd.f32 %v71, %v54
  %v73 = vadd.f32 %v72, %v55
  %74 = vadd.xlane.f32.xlu0 %v73
  %v75 = vpop.xlane.xlu0 %74
  %v80 = vlaneseq
  %v81 = vand.u32 %v80, 127
  %v82 = vlaneseq
  %v83 = vshrl.u32 %v82, 7
  %v84 = vsub.s32 %v81, %v83
  %v85 = vrot.slane %v60, %v84
  %v86 = vadd.s32 %v81, 4294967288
  %v87 = vlaneseq
  %v88 = vshrl.u32 %v87, 7
  %v89 = vsub.s32 %v86, %v88
  %v90 = vrot.slane %v65, %v89
  %vm91 = vcmask 130112
  %v92 = vsel %vm91, %v90, %v85
  %v93 = vlaneseq
  %v94 = vshrl.u32 %v93, 7
  %v95 = vsub.s32 %v81, %v94
  %v96 = vrot.slane %v70, %v95
  %v97 = vlaneseq
  %v98 = vshrl.u32 %v97, 7
  %v99 = vsub.s32 %v86, %v98
  %v100 = vrot.slane %v75, %v99
  %v101 = vsel %vm91, %v100, %v96
  %vm102 = vcmask 1041409
  %v103 = vsel %vm102, %v101, %v92
  %vm105 = vcmask 123904
  %v106 = vsel %vm105, %v103, 0.0
  %107 = vadd.xlane.f32.xlu0 %v106
  %v108 = vpop.xlane.xlu0 %107
  %v109 = vmul.f32 %v108, 0.25
  %v110 = vld [vmem:[#allocation2] sm:$0x1]
  %v112 = vlaneseq
  %v113 = vshrl.u32 %v112, 7
  %v114 = vsub.s32 0, %v113
  %v115 = vrot.slane %v110, %v114
  %v117 = vadd.f32 %v109, %v115
  %vm118 = vcmask 1024
  %119 = vst.msk [vmem:[%s3] sm:$0x3] %vm118, %v117
  // Predicated region
  $region14: #{discriminator_forward.9} parent=0 // pred_check
    _
  $region15: #{discriminator_forward.9} parent=0 // pred_check_branch
    %121 = sbr.rel (0) target = $region17
  $region16: #{discriminator_forward.9} parent=0 // pred_region
    _
  $region17: #{discriminator_forward.9} parent=0 // pred_fallthru
    _
  // Predicated region
  $region18: #{discriminator_forward.9} parent=0 // pred_check
    _
  $region19: #{discriminator_forward.9} parent=0 // pred_check_branch
    %123 = sbr.rel (0) target = $region21
  $region20: #{discriminator_forward.9} parent=0 // pred_region
    _
  $region21: #{discriminator_forward.9} parent=0 // pred_fallthru
    _

</llo_original>
